<compile_context>
chip_gen: v7x
topology: tpu7x:2x2x1
jax: 0.10.0
libtpu: 0.0.40
codegen_flags: <defaults>
</compile_context>

<pallas_src>
import jax
import jax.numpy as jnp
from jax.experimental import pallas as pl
from jax.experimental.pallas import tpu as pltpu

_FRAME = 32                      # 32x32 input image
_FRAME_LEN = _FRAME * _FRAME     # 1024 lanes per image frame


# ------------------------------ fused kernel -------------------------------

def _cnn_kernel(x_ref, w1_ref, b1_ref, w2_ref, b2_ref, w3_ref, b3_ref,
                wd1_ref, bd1_ref, wd2_ref, bd2_ref, o_ref, xs_ref, g_ref):
    nb = o_ref.shape[2]            # images handled by this grid step
    nbl = x_ref.shape[1]           # nb * 1024 lanes (batch folded onto lanes)
    assert nbl == nb * _FRAME_LEN

    def shift_left(a, s):
        # bring lane q+s to lane q; wrapped lanes only land in invalid tails
        return a if s == 0 else pltpu.roll(a, nbl - s, axis=1)

    def conv_relu(a, w_ref, b_ref, dr, dc):
        """3x3 VALID conv + bias + ReLU on the flat-frame lattice (dr, dc).

        a: (Cin, nb*1024); w_ref: (Cout, 9*Cin) tap-major; b_ref: (Cout, 1).
        The 9 rolled taps are staged into xs_ref and contracted in ONE dot.
        """
        cin = a.shape[0]
        k = 9 * cin
        assert w_ref.shape[1] == k
        for kh in range(3):
            for kw in range(3):
                t = kh * 3 + kw
                xs_ref[t * cin:(t + 1) * cin, :] = shift_left(a, kh * dr + kw * dc)
        y = jnp.dot(w_ref[...], xs_ref[0:k, :],
                    preferred_element_type=jnp.float32)
        return jnp.maximum(y + b_ref[...], 0.0)             # (Cout, nb*1024)

    def maxpool(a, dr, dc):
        # 2x2 / stride-2 pool = two shifted maxima; caller doubles (dr, dc).
        v = jnp.maximum(a, shift_left(a, dr))
        return jnp.maximum(v, shift_left(v, dc))

    a = x_ref[...]                                           # (1, nb*1024)
    a = maxpool(conv_relu(a, w1_ref, b1_ref, _FRAME, 1), _FRAME, 1)
    a = maxpool(conv_relu(a, w2_ref, b2_ref, 2 * _FRAME, 2), 2 * _FRAME, 2)
    a = maxpool(conv_relu(a, w3_ref, b3_ref, 4 * _FRAME, 4), 4 * _FRAME, 4)
    # a: (f3, nb*1024); image n's 2x2 pooled map sits at lanes
    # n*1024 + {0, 8, 256, 264} (final lattice strides (256, 8)).

    f3 = a.shape[0]
    positions = tuple(i * 8 * _FRAME + j * 8 for i in range(2) for j in range(2))
    for n in range(nb):
        base = n * _FRAME_LEN
        for p, pos in enumerate(positions):
            g_ref[p * f3:(p + 1) * f3, n:n + 1] = a[:, base + pos:base + pos + 1]

    # dense head: two whole-block matmuls in (neurons, batch) orientation
    h1 = jnp.maximum(
        jnp.dot(wd1_ref[...], g_ref[...], preferred_element_type=jnp.float32)
        + bd1_ref[...], 0.0)                                 # (n1, nb)
    h2 = jnp.maximum(
        jnp.dot(wd2_ref[...], h1, preferred_element_type=jnp.float32)
        + bd2_ref[...], 0.0)                                 # (n2, nb)
    o_ref[0] = h2                                            # single block store


# ------------------------ one-time parameter packing ------------------------

def prepare_params(params):
    """One-time host-side repacking of torch-layout params into kernel layout."""
    f1, f2, f3 = (params["w1"].shape[0], params["w2"].shape[0],
                  params["w3"].shape[0])
    n1, n2 = params["wd1"].shape[1], params["wd2"].shape[1]

    def pack_conv(w):  # (O, C, 3, 3) -> (O, 9*C), K index = (kh*3+kw)*C + c
        o, c = w.shape[0], w.shape[1]
        return jnp.transpose(w, (0, 2, 3, 1)).reshape(o, 9 * c).astype(jnp.float32)

    return {
        "w1": pack_conv(params["w1"]),
        "b1": params["b1"].reshape(f1, 1).astype(jnp.float32),
        "w2": pack_conv(params["w2"]),
        "b2": params["b2"].reshape(f2, 1).astype(jnp.float32),
        "w3": pack_conv(params["w3"]),
        "b3": params["b3"].reshape(f3, 1).astype(jnp.float32),
        # torch NCHW .view flatten order is f = c*4 + (i*2+j); the kernel
        # gathers pooled features in (p = i*2+j, c) order -> regroup once here.
        "wd1": jnp.transpose(params["wd1"].reshape(f3, 4, n1),
                             (2, 1, 0)).reshape(n1, 4 * f3).astype(jnp.float32),
        "bd1": params["bd1"].reshape(n1, 1).astype(jnp.float32),
        "wd2": jnp.transpose(params["wd2"], (1, 0)).astype(jnp.float32),
        "bd2": params["bd2"].reshape(n2, 1).astype(jnp.float32),
    }


def _pick_batch_block(n):
    """Largest batch block <= 8 that still yields >= 2 grid steps (keeps both
    v7x TensorCores busy); falls back to 1 image per step."""
    if n <= 1:
        return 1
    for nb in (8, 4, 2, 1):
        if n % nb == 0 and n // nb >= 2:
            return nb
    return 1


# --------------------------------- wrapper ----------------------------------

def cnn_forward(x_nchw, packed, *, batch_block=None):
    """Pallas-backed ConvolutionalNeuralNet.forward for 1x32x32 inputs."""
    n, cin, h, w = x_nchw.shape
    assert (cin, h, w) == (1, _FRAME, _FRAME), "module is built for 1x32x32 inputs"
    n2 = packed["wd2"].shape[0]
    f3 = packed["w3"].shape[0]
    nb = _pick_batch_block(n) if batch_block is None else batch_block
    assert n % nb == 0
    grid_n = n // nb
    nbl = nb * _FRAME_LEN
    k_max = max(packed["w1"].shape[1], packed["w2"].shape[1],
                packed["w3"].shape[1])

    # one 1024-lane frame per image, batch folded onto lanes (metadata reshape)
    x_flat = x_nchw.astype(jnp.float32).reshape(1, n * _FRAME_LEN)

    names = ("w1", "b1", "w2", "b2", "w3", "b3", "wd1", "bd1", "wd2", "bd2")
    weights = [packed[k] for k in names]

    def resident(shape):             # same block every grid step -> stays in VMEM
        zeros = (0,) * len(shape)
        return pl.BlockSpec(shape, lambda i, _z=zeros: _z)

    out = pl.pallas_call(
        _cnn_kernel,
        out_shape=jax.ShapeDtypeStruct((grid_n, n2, nb), jnp.float32),
        grid_spec=pltpu.PrefetchScalarGridSpec(
            num_scalar_prefetch=0,
            grid=(grid_n,),
            in_specs=[pl.BlockSpec((1, nbl), lambda i: (0, i))]
                    + [resident(wgt.shape) for wgt in weights],
            out_specs=pl.BlockSpec((1, n2, nb), lambda i: (i, 0, 0)),
            scratch_shapes=[pltpu.VMEM((k_max, nbl), jnp.float32),
                            pltpu.VMEM((4 * f3, nb), jnp.float32)],
        ),
        compiler_params=pltpu.CompilerParams(
            dimension_semantics=("parallel",)),
    )(x_flat, *weights)
    # (grid, n2, nb) -> (N, n2): tiny host-side transpose keeps the in-kernel
    # epilogue a single whole-block store.
    return out.transpose(0, 2, 1).reshape(n, n2)


# --------------------------- pure-JAX reference -----------------------------

def ref_forward(x_nchw, params):
    def conv(x, w, b):
        y = jax.lax.conv_general_dilated(
            x, w, (1, 1), "VALID",
            dimension_numbers=("NCHW", "OIHW", "NCHW"))
        return jax.nn.relu(y + b[None, :, None, None])

    def pool(x):
        return jax.lax.reduce_window(
            x, -jnp.inf, jax.lax.max, (1, 1, 2, 2), (1, 1, 2, 2), "VALID")

    x = pool(conv(x_nchw, params["w1"], params["b1"]))
    x = pool(conv(x, params["w2"], params["b2"]))
    x = pool(conv(x, params["w3"], params["b3"]))
    x = x.reshape(x.shape[0], -1)
    x = jax.nn.relu(x @ params["wd1"] + params["bd1"])
    x = jax.nn.relu(x @ params["wd2"] + params["bd2"])
    return x


# --------------------------------- main -------------------------------------

if __name__ == "__main__":
    num_filters = (4, 8, 8)            # (num_1st, num_2nd, num_3rd)
    num_neurons = (32, 16)             # (dense1, dense2)
    f1, f2, f3 = num_filters
    n1, n2 = num_neurons
    conv_out_len = f3 * 2 * 2          # 32x32 input -> 2x2 spatial after 3 blocks

    key = jax.random.PRNGKey(0)
    ks = jax.random.split(key, 12)
    params = {
        "w1": 0.1 * jax.random.normal(ks[0], (f1, 1, 3, 3), jnp.float32),
        "b1": 0.1 * jax.random.normal(ks[1], (f1,), jnp.float32),
        "w2": 0.1 * jax.random.normal(ks[2], (f2, f1, 3, 3), jnp.float32),
        "b2": 0.1 * jax.random.normal(ks[3], (f2,), jnp.float32),
        "w3": 0.1 * jax.random.normal(ks[4], (f3, f2, 3, 3), jnp.float32),
        "b3": 0.1 * jax.random.normal(ks[5], (f3,), jnp.float32),
        "wd1": 0.1 * jax.random.normal(ks[6], (conv_out_len, n1), jnp.float32),
        "bd1": 0.1 * jax.random.normal(ks[7], (n1,), jnp.float32),
        "wd2": 0.1 * jax.random.normal(ks[8], (n1, n2), jnp.float32),
        "bd2": 0.1 * jax.random.normal(ks[9], (n2,), jnp.float32),
    }
    packed = prepare_params(params)    # one-time host-side repacking

    # N=2: one image per grid step -> 2 parallel steps (both v7x cores busy)
    x = jax.random.normal(ks[10], (2, 1, 32, 32), jnp.float32)
    out = jax.block_until_ready(cnn_forward(x, packed))
    ref = jax.block_until_ready(ref_forward(x, params))
    assert out.shape == (2, n2), out.shape
    assert jnp.allclose(out, ref, rtol=1e-4, atol=1e-4), "mismatch vs reference (N=2)"

    # larger batch exercises multi-image blocks (nb=2) and a 3-step grid
    x6 = jax.random.normal(ks[11], (6, 1, 32, 32), jnp.float32)
    out6 = jax.block_until_ready(cnn_forward(x6, packed))
    ref6 = jax.block_until_ready(ref_forward(x6, params))
    assert out6.shape == (6, n2), out6.shape
    assert jnp.allclose(out6, ref6, rtol=1e-4, atol=1e-4), "mismatch vs reference (N=6)"

    print("KERNEL_OK")
</pallas_src>

<mosaic_0001>
module attributes {stable_mosaic.version = 11 : i64} {
  func.func @_cnn_kernel(%arg0: i32, %arg1: memref<1x1024xf32, #tpu.memory_space<vmem>>, %arg2: memref<4x9xf32, #tpu.memory_space<vmem>>, %arg3: memref<4x1xf32, #tpu.memory_space<vmem>>, %arg4: memref<8x36xf32, #tpu.memory_space<vmem>>, %arg5: memref<8x1xf32, #tpu.memory_space<vmem>>, %arg6: memref<8x72xf32, #tpu.memory_space<vmem>>, %arg7: memref<8x1xf32, #tpu.memory_space<vmem>>, %arg8: memref<32x32xf32, #tpu.memory_space<vmem>>, %arg9: memref<32x1xf32, #tpu.memory_space<vmem>>, %arg10: memref<16x32xf32, #tpu.memory_space<vmem>>, %arg11: memref<16x1xf32, #tpu.memory_space<vmem>>, %arg12: memref<1x16x1xf32, #tpu.memory_space<vmem>>, %arg13: memref<72x1024xf32, #tpu.memory_space<vmem>>, %arg14: memref<32x1xf32, #tpu.memory_space<vmem>>) attributes {dimension_semantics = [#tpu.dimension_semantics<parallel>], iteration_bounds = array<i64: 2>, scalar_prefetch = 0 : i64, scratch_operands = 2 : i64, tpu.core_type = #tpu.core_type<tc>, window_params = [{transform_indices = @transform_0, window_bounds = array<i64: 1, 1024>}, {pipeline_mode = #tpu.pipeline_mode<synchronous>, transform_indices = @transform_1, window_bounds = array<i64: 4, 9>}, {pipeline_mode = #tpu.pipeline_mode<synchronous>, transform_indices = @transform_2, window_bounds = array<i64: 4, 1>}, {pipeline_mode = #tpu.pipeline_mode<synchronous>, transform_indices = @transform_3, window_bounds = array<i64: 8, 36>}, {pipeline_mode = #tpu.pipeline_mode<synchronous>, transform_indices = @transform_4, window_bounds = array<i64: 8, 1>}, {pipeline_mode = #tpu.pipeline_mode<synchronous>, transform_indices = @transform_5, window_bounds = array<i64: 8, 72>}, {pipeline_mode = #tpu.pipeline_mode<synchronous>, transform_indices = @transform_6, window_bounds = array<i64: 8, 1>}, {pipeline_mode = #tpu.pipeline_mode<synchronous>, transform_indices = @transform_7, window_bounds = array<i64: 32, 32>}, {pipeline_mode = #tpu.pipeline_mode<synchronous>, transform_indices = @transform_8, window_bounds = array<i64: 32, 1>}, {pipeline_mode = #tpu.pipeline_mode<synchronous>, transform_indices = @transform_9, window_bounds = array<i64: 16, 32>}, {pipeline_mode = #tpu.pipeline_mode<synchronous>, transform_indices = @transform_10, window_bounds = array<i64: 16, 1>}, {transform_indices = @transform_11, window_bounds = array<i64: 1, 16, 1>}]} {
    %c0 = arith.constant 0 : index
    %c0_0 = arith.constant 0 : index
    %0 = vector.load %arg1[%c0, %c0_0] : memref<1x1024xf32, #tpu.memory_space<vmem>>, vector<1x1024xf32>
    %c0_1 = arith.constant 0 : index
    %c0_2 = arith.constant 0 : index
    %1 = vector.load %arg13[%c0_1, %c0_2] : memref<72x1024xf32, #tpu.memory_space<vmem>>, vector<1x1024xf32>
    tpu.vector_store %arg13[%c0_1, %c0_2], %0 {strides = array<i32>} : memref<72x1024xf32, #tpu.memory_space<vmem>>, vector<1x1024xf32>,
    %c1023_i32 = arith.constant 1023 : i32
    %2 = tpu.dynamic_rotate %0 by %c1023_i32 dim 1 : vector<1x1024xf32>, i32 -> vector<1x1024xf32>
    %c1 = arith.constant 1 : index
    %c0_3 = arith.constant 0 : index
    %3 = vector.load %arg13[%c1, %c0_3] : memref<72x1024xf32, #tpu.memory_space<vmem>>, vector<1x1024xf32>
    tpu.vector_store %arg13[%c1, %c0_3], %2 {strides = array<i32>} : memref<72x1024xf32, #tpu.memory_space<vmem>>, vector<1x1024xf32>,
    %c1022_i32 = arith.constant 1022 : i32
    %4 = tpu.dynamic_rotate %0 by %c1022_i32 dim 1 : vector<1x1024xf32>, i32 -> vector<1x1024xf32>
    %c2 = arith.constant 2 : index
    %c0_4 = arith.constant 0 : index
    %5 = vector.load %arg13[%c2, %c0_4] : memref<72x1024xf32, #tpu.memory_space<vmem>>, vector<1x1024xf32>
    tpu.vector_store %arg13[%c2, %c0_4], %4 {strides = array<i32>} : memref<72x1024xf32, #tpu.memory_space<vmem>>, vector<1x1024xf32>,
    %c992_i32 = arith.constant 992 : i32
    %6 = tpu.dynamic_rotate %0 by %c992_i32 dim 1 : vector<1x1024xf32>, i32 -> vector<1x1024xf32>
    %c3 = arith.constant 3 : index
    %c0_5 = arith.constant 0 : index
    %7 = vector.load %arg13[%c3, %c0_5] : memref<72x1024xf32, #tpu.memory_space<vmem>>, vector<1x1024xf32>
    tpu.vector_store %arg13[%c3, %c0_5], %6 {strides = array<i32>} : memref<72x1024xf32, #tpu.memory_space<vmem>>, vector<1x1024xf32>,
    %c991_i32 = arith.constant 991 : i32
    %8 = tpu.dynamic_rotate %0 by %c991_i32 dim 1 : vector<1x1024xf32>, i32 -> vector<1x1024xf32>
    %c4 = arith.constant 4 : index
    %c0_6 = arith.constant 0 : index
    %9 = vector.load %arg13[%c4, %c0_6] : memref<72x1024xf32, #tpu.memory_space<vmem>>, vector<1x1024xf32>
    tpu.vector_store %arg13[%c4, %c0_6], %8 {strides = array<i32>} : memref<72x1024xf32, #tpu.memory_space<vmem>>, vector<1x1024xf32>,
    %c990_i32 = arith.constant 990 : i32
    %10 = tpu.dynamic_rotate %0 by %c990_i32 dim 1 : vector<1x1024xf32>, i32 -> vector<1x1024xf32>
    %c5 = arith.constant 5 : index
    %c0_7 = arith.constant 0 : index
    %11 = vector.load %arg13[%c5, %c0_7] : memref<72x1024xf32, #tpu.memory_space<vmem>>, vector<1x1024xf32>
    tpu.vector_store %arg13[%c5, %c0_7], %10 {strides = array<i32>} : memref<72x1024xf32, #tpu.memory_space<vmem>>, vector<1x1024xf32>,
    %c960_i32 = arith.constant 960 : i32
    %12 = tpu.dynamic_rotate %0 by %c960_i32 dim 1 : vector<1x1024xf32>, i32 -> vector<1x1024xf32>
    %c6 = arith.constant 6 : index
    %c0_8 = arith.constant 0 : index
    %13 = vector.load %arg13[%c6, %c0_8] : memref<72x1024xf32, #tpu.memory_space<vmem>>, vector<1x1024xf32>
    tpu.vector_store %arg13[%c6, %c0_8], %12 {strides = array<i32>} : memref<72x1024xf32, #tpu.memory_space<vmem>>, vector<1x1024xf32>,
    %c959_i32 = arith.constant 959 : i32
    %14 = tpu.dynamic_rotate %0 by %c959_i32 dim 1 : vector<1x1024xf32>, i32 -> vector<1x1024xf32>
    %c7 = arith.constant 7 : index
    %c0_9 = arith.constant 0 : index
    %15 = vector.load %arg13[%c7, %c0_9] : memref<72x1024xf32, #tpu.memory_space<vmem>>, vector<1x1024xf32>
    tpu.vector_store %arg13[%c7, %c0_9], %14 {strides = array<i32>} : memref<72x1024xf32, #tpu.memory_space<vmem>>, vector<1x1024xf32>,
    %c958_i32 = arith.constant 958 : i32
    %16 = tpu.dynamic_rotate %0 by %c958_i32 dim 1 : vector<1x1024xf32>, i32 -> vector<1x1024xf32>
    %c8 = arith.constant 8 : index
    %c0_10 = arith.constant 0 : index
    %17 = vector.load %arg13[%c8, %c0_10] : memref<72x1024xf32, #tpu.memory_space<vmem>>, vector<1x1024xf32>
    tpu.vector_store %arg13[%c8, %c0_10], %16 {strides = array<i32>} : memref<72x1024xf32, #tpu.memory_space<vmem>>, vector<1x1024xf32>,
    %c0_11 = arith.constant 0 : index
    %c0_12 = arith.constant 0 : index
    %18 = vector.load %arg2[%c0_11, %c0_12] : memref<4x9xf32, #tpu.memory_space<vmem>>, vector<4x9xf32>
    %c0_13 = arith.constant 0 : index
    %c0_14 = arith.constant 0 : index
    %19 = vector.load %arg13[%c0_13, %c0_14] : memref<72x1024xf32, #tpu.memory_space<vmem>>, vector<9x1024xf32>
    %cst = arith.constant dense<0.000000e+00> : vector<4x1024xf32>
    %20 = tpu.matmul %18, %19, %cst {dimension_numbers = #tpu.dot_dimension_numbers<[1], [0], [0], [1], [0, 0, 1, 1], [], []>} : vector<4x9xf32>, vector<9x1024xf32>, vector<4x1024xf32> -> vector<4x1024xf32>
    %c0_15 = arith.constant 0 : index
    %c0_16 = arith.constant 0 : index
    %21 = vector.load %arg3[%c0_15, %c0_16] : memref<4x1xf32, #tpu.memory_space<vmem>>, vector<4x1xf32>
    %22 = vector.broadcast %21 : vector<4x1xf32> to vector<4x1024xf32>
    %23 = arith.addf %20, %22 : vector<4x1024xf32>
    %cst_17 = arith.constant 0.000000e+00 : f32
    %24 = vector.broadcast %cst_17 : f32 to vector<4x1024xf32>
    %25 = arith.maximumf %23, %24 : vector<4x1024xf32>
    %c992_i32_18 = arith.constant 992 : i32
    %26 = tpu.dynamic_rotate %25 by %c992_i32_18 dim 1 : vector<4x1024xf32>, i32 -> vector<4x1024xf32>
    %27 = arith.maximumf %25, %26 : vector<4x1024xf32>
    %c1023_i32_19 = arith.constant 1023 : i32
    %28 = tpu.dynamic_rotate %27 by %c1023_i32_19 dim 1 : vector<4x1024xf32>, i32 -> vector<4x1024xf32>
    %29 = arith.maximumf %27, %28 : vector<4x1024xf32>
    %c0_20 = arith.constant 0 : index
    %c0_21 = arith.constant 0 : index
    %30 = vector.load %arg13[%c0_20, %c0_21] : memref<72x1024xf32, #tpu.memory_space<vmem>>, vector<4x1024xf32>
    tpu.vector_store %arg13[%c0_20, %c0_21], %29 {strides = array<i32>} : memref<72x1024xf32, #tpu.memory_space<vmem>>, vector<4x1024xf32>,
    %c1022_i32_22 = arith.constant 1022 : i32
    %31 = tpu.dynamic_rotate %29 by %c1022_i32_22 dim 1 : vector<4x1024xf32>, i32 -> vector<4x1024xf32>
    %c4_23 = arith.constant 4 : index
    %c0_24 = arith.constant 0 : index
    %32 = vector.load %arg13[%c4_23, %c0_24] : memref<72x1024xf32, #tpu.memory_space<vmem>>, vector<4x1024xf32>
    tpu.vector_store %arg13[%c4_23, %c0_24], %31 {strides = array<i32>} : memref<72x1024xf32, #tpu.memory_space<vmem>>, vector<4x1024xf32>,
    %c1020_i32 = arith.constant 1020 : i32
    %33 = tpu.dynamic_rotate %29 by %c1020_i32 dim 1 : vector<4x1024xf32>, i32 -> vector<4x1024xf32>
    %c8_25 = arith.constant 8 : index
    %c0_26 = arith.constant 0 : index
    %34 = vector.load %arg13[%c8_25, %c0_26] : memref<72x1024xf32, #tpu.memory_space<vmem>>, vector<4x1024xf32>
    tpu.vector_store %arg13[%c8_25, %c0_26], %33 {strides = array<i32>} : memref<72x1024xf32, #tpu.memory_space<vmem>>, vector<4x1024xf32>,
    %c960_i32_27 = arith.constant 960 : i32
    %35 = tpu.dynamic_rotate %29 by %c960_i32_27 dim 1 : vector<4x1024xf32>, i32 -> vector<4x1024xf32>
    %c12 = arith.constant 12 : index
    %c0_28 = arith.constant 0 : index
    %36 = vector.load %arg13[%c12, %c0_28] : memref<72x1024xf32, #tpu.memory_space<vmem>>, vector<4x1024xf32>
    tpu.vector_store %arg13[%c12, %c0_28], %35 {strides = array<i32>} : memref<72x1024xf32, #tpu.memory_space<vmem>>, vector<4x1024xf32>,
    %c958_i32_29 = arith.constant 958 : i32
    %37 = tpu.dynamic_rotate %29 by %c958_i32_29 dim 1 : vector<4x1024xf32>, i32 -> vector<4x1024xf32>
    %c16 = arith.constant 16 : index
    %c0_30 = arith.constant 0 : index
    %38 = vector.load %arg13[%c16, %c0_30] : memref<72x1024xf32, #tpu.memory_space<vmem>>, vector<4x1024xf32>
    tpu.vector_store %arg13[%c16, %c0_30], %37 {strides = array<i32>} : memref<72x1024xf32, #tpu.memory_space<vmem>>, vector<4x1024xf32>,
    %c956_i32 = arith.constant 956 : i32
    %39 = tpu.dynamic_rotate %29 by %c956_i32 dim 1 : vector<4x1024xf32>, i32 -> vector<4x1024xf32>
    %c20 = arith.constant 20 : index
    %c0_31 = arith.constant 0 : index
    %40 = vector.load %arg13[%c20, %c0_31] : memref<72x1024xf32, #tpu.memory_space<vmem>>, vector<4x1024xf32>
    tpu.vector_store %arg13[%c20, %c0_31], %39 {strides = array<i32>} : memref<72x1024xf32, #tpu.memory_space<vmem>>, vector<4x1024xf32>,
    %c896_i32 = arith.constant 896 : i32
    %41 = tpu.dynamic_rotate %29 by %c896_i32 dim 1 : vector<4x1024xf32>, i32 -> vector<4x1024xf32>
    %c24 = arith.constant 24 : index
    %c0_32 = arith.constant 0 : index
    %42 = vector.load %arg13[%c24, %c0_32] : memref<72x1024xf32, #tpu.memory_space<vmem>>, vector<4x1024xf32>
    tpu.vector_store %arg13[%c24, %c0_32], %41 {strides = array<i32>} : memref<72x1024xf32, #tpu.memory_space<vmem>>, vector<4x1024xf32>,
    %c894_i32 = arith.constant 894 : i32
    %43 = tpu.dynamic_rotate %29 by %c894_i32 dim 1 : vector<4x1024xf32>, i32 -> vector<4x1024xf32>
    %c28 = arith.constant 28 : index
    %c0_33 = arith.constant 0 : index
    %44 = vector.load %arg13[%c28, %c0_33] : memref<72x1024xf32, #tpu.memory_space<vmem>>, vector<4x1024xf32>
    tpu.vector_store %arg13[%c28, %c0_33], %43 {strides = array<i32>} : memref<72x1024xf32, #tpu.memory_space<vmem>>, vector<4x1024xf32>,
    %c892_i32 = arith.constant 892 : i32
    %45 = tpu.dynamic_rotate %29 by %c892_i32 dim 1 : vector<4x1024xf32>, i32 -> vector<4x1024xf32>
    %c32 = arith.constant 32 : index
    %c0_34 = arith.constant 0 : index
    %46 = vector.load %arg13[%c32, %c0_34] : memref<72x1024xf32, #tpu.memory_space<vmem>>, vector<4x1024xf32>
    tpu.vector_store %arg13[%c32, %c0_34], %45 {strides = array<i32>} : memref<72x1024xf32, #tpu.memory_space<vmem>>, vector<4x1024xf32>,
    %c0_35 = arith.constant 0 : index
    %c0_36 = arith.constant 0 : index
    %47 = vector.load %arg4[%c0_35, %c0_36] : memref<8x36xf32, #tpu.memory_space<vmem>>, vector<8x36xf32>
    %c0_37 = arith.constant 0 : index
    %c0_38 = arith.constant 0 : index
    %48 = vector.load %arg13[%c0_37, %c0_38] : memref<72x1024xf32, #tpu.memory_space<vmem>>, vector<36x1024xf32>
    %cst_39 = arith.constant dense<0.000000e+00> : vector<8x1024xf32>
    %49 = tpu.matmul %47, %48, %cst_39 {dimension_numbers = #tpu.dot_dimension_numbers<[1], [0], [0], [1], [0, 0, 1, 1], [], []>} : vector<8x36xf32>, vector<36x1024xf32>, vector<8x1024xf32> -> vector<8x1024xf32>
    %c0_40 = arith.constant 0 : index
    %c0_41 = arith.constant 0 : index
    %50 = vector.load %arg5[%c0_40, %c0_41] : memref<8x1xf32, #tpu.memory_space<vmem>>, vector<8x1xf32>
    %51 = vector.broadcast %50 : vector<8x1xf32> to vector<8x1024xf32>
    %52 = arith.addf %49, %51 : vector<8x1024xf32>
    %cst_42 = arith.constant 0.000000e+00 : f32
    %53 = vector.broadcast %cst_42 : f32 to vector<8x1024xf32>
    %54 = arith.maximumf %52, %53 : vector<8x1024xf32>
    %c960_i32_43 = arith.constant 960 : i32
    %55 = tpu.dynamic_rotate %54 by %c960_i32_43 dim 1 : vector<8x1024xf32>, i32 -> vector<8x1024xf32>
    %56 = arith.maximumf %54, %55 : vector<8x1024xf32>
    %c1022_i32_44 = arith.constant 1022 : i32
    %57 = tpu.dynamic_rotate %56 by %c1022_i32_44 dim 1 : vector<8x1024xf32>, i32 -> vector<8x1024xf32>
    %58 = arith.maximumf %56, %57 : vector<8x1024xf32>
    %c0_45 = arith.constant 0 : index
    %c0_46 = arith.constant 0 : index
    %59 = vector.load %arg13[%c0_45, %c0_46] : memref<72x1024xf32, #tpu.memory_space<vmem>>, vector<8x1024xf32>
    tpu.vector_store %arg13[%c0_45, %c0_46], %58 {strides = array<i32>} : memref<72x1024xf32, #tpu.memory_space<vmem>>, vector<8x1024xf32>,
    %c1020_i32_47 = arith.constant 1020 : i32
    %60 = tpu.dynamic_rotate %58 by %c1020_i32_47 dim 1 : vector<8x1024xf32>, i32 -> vector<8x1024xf32>
    %c8_48 = arith.constant 8 : index
    %c0_49 = arith.constant 0 : index
    %61 = vector.load %arg13[%c8_48, %c0_49] : memref<72x1024xf32, #tpu.memory_space<vmem>>, vector<8x1024xf32>
    tpu.vector_store %arg13[%c8_48, %c0_49], %60 {strides = array<i32>} : memref<72x1024xf32, #tpu.memory_space<vmem>>, vector<8x1024xf32>,
    %c1016_i32 = arith.constant 1016 : i32
    %62 = tpu.dynamic_rotate %58 by %c1016_i32 dim 1 : vector<8x1024xf32>, i32 -> vector<8x1024xf32>
    %c16_50 = arith.constant 16 : index
    %c0_51 = arith.constant 0 : index
    %63 = vector.load %arg13[%c16_50, %c0_51] : memref<72x1024xf32, #tpu.memory_space<vmem>>, vector<8x1024xf32>
    tpu.vector_store %arg13[%c16_50, %c0_51], %62 {strides = array<i32>} : memref<72x1024xf32, #tpu.memory_space<vmem>>, vector<8x1024xf32>,
    %c896_i32_52 = arith.constant 896 : i32
    %64 = tpu.dynamic_rotate %58 by %c896_i32_52 dim 1 : vector<8x1024xf32>, i32 -> vector<8x1024xf32>
    %c24_53 = arith.constant 24 : index
    %c0_54 = arith.constant 0 : index
    %65 = vector.load %arg13[%c24_53, %c0_54] : memref<72x1024xf32, #tpu.memory_space<vmem>>, vector<8x1024xf32>
    tpu.vector_store %arg13[%c24_53, %c0_54], %64 {strides = array<i32>} : memref<72x1024xf32, #tpu.memory_space<vmem>>, vector<8x1024xf32>,
    %c892_i32_55 = arith.constant 892 : i32
    %66 = tpu.dynamic_rotate %58 by %c892_i32_55 dim 1 : vector<8x1024xf32>, i32 -> vector<8x1024xf32>
    %c32_56 = arith.constant 32 : index
    %c0_57 = arith.constant 0 : index
    %67 = vector.load %arg13[%c32_56, %c0_57] : memref<72x1024xf32, #tpu.memory_space<vmem>>, vector<8x1024xf32>
    tpu.vector_store %arg13[%c32_56, %c0_57], %66 {strides = array<i32>} : memref<72x1024xf32, #tpu.memory_space<vmem>>, vector<8x1024xf32>,
    %c888_i32 = arith.constant 888 : i32
    %68 = tpu.dynamic_rotate %58 by %c888_i32 dim 1 : vector<8x1024xf32>, i32 -> vector<8x1024xf32>
    %c40 = arith.constant 40 : index
    %c0_58 = arith.constant 0 : index
    %69 = vector.load %arg13[%c40, %c0_58] : memref<72x1024xf32, #tpu.memory_space<vmem>>, vector<8x1024xf32>
    tpu.vector_store %arg13[%c40, %c0_58], %68 {strides = array<i32>} : memref<72x1024xf32, #tpu.memory_space<vmem>>, vector<8x1024xf32>,
    %c768_i32 = arith.constant 768 : i32
    %70 = tpu.dynamic_rotate %58 by %c768_i32 dim 1 : vector<8x1024xf32>, i32 -> vector<8x1024xf32>
    %c48 = arith.constant 48 : index
    %c0_59 = arith.constant 0 : index
    %71 = vector.load %arg13[%c48, %c0_59] : memref<72x1024xf32, #tpu.memory_space<vmem>>, vector<8x1024xf32>
    tpu.vector_store %arg13[%c48, %c0_59], %70 {strides = array<i32>} : memref<72x1024xf32, #tpu.memory_space<vmem>>, vector<8x1024xf32>,
    %c764_i32 = arith.constant 764 : i32
    %72 = tpu.dynamic_rotate %58 by %c764_i32 dim 1 : vector<8x1024xf32>, i32 -> vector<8x1024xf32>
    %c56 = arith.constant 56 : index
    %c0_60 = arith.constant 0 : index
    %73 = vector.load %arg13[%c56, %c0_60] : memref<72x1024xf32, #tpu.memory_space<vmem>>, vector<8x1024xf32>
    tpu.vector_store %arg13[%c56, %c0_60], %72 {strides = array<i32>} : memref<72x1024xf32, #tpu.memory_space<vmem>>, vector<8x1024xf32>,
    %c760_i32 = arith.constant 760 : i32
    %74 = tpu.dynamic_rotate %58 by %c760_i32 dim 1 : vector<8x1024xf32>, i32 -> vector<8x1024xf32>
    %c64 = arith.constant 64 : index
    %c0_61 = arith.constant 0 : index
    %75 = vector.load %arg13[%c64, %c0_61] : memref<72x1024xf32, #tpu.memory_space<vmem>>, vector<8x1024xf32>
    tpu.vector_store %arg13[%c64, %c0_61], %74 {strides = array<i32>} : memref<72x1024xf32, #tpu.memory_space<vmem>>, vector<8x1024xf32>,
    %c0_62 = arith.constant 0 : index
    %c0_63 = arith.constant 0 : index
    %76 = vector.load %arg6[%c0_62, %c0_63] : memref<8x72xf32, #tpu.memory_space<vmem>>, vector<8x72xf32>
    %c0_64 = arith.constant 0 : index
    %c0_65 = arith.constant 0 : index
    %77 = vector.load %arg13[%c0_64, %c0_65] : memref<72x1024xf32, #tpu.memory_space<vmem>>, vector<72x1024xf32>
    %cst_66 = arith.constant dense<0.000000e+00> : vector<8x1024xf32>
    %78 = tpu.matmul %76, %77, %cst_66 {dimension_numbers = #tpu.dot_dimension_numbers<[1], [0], [0], [1], [0, 0, 1, 1], [], []>} : vector<8x72xf32>, vector<72x1024xf32>, vector<8x1024xf32> -> vector<8x1024xf32>
    %c0_67 = arith.constant 0 : index
    %c0_68 = arith.constant 0 : index
    %79 = vector.load %arg7[%c0_67, %c0_68] : memref<8x1xf32, #tpu.memory_space<vmem>>, vector<8x1xf32>
    %80 = vector.broadcast %79 : vector<8x1xf32> to vector<8x1024xf32>
    %81 = arith.addf %78, %80 : vector<8x1024xf32>
    %cst_69 = arith.constant 0.000000e+00 : f32
    %82 = vector.broadcast %cst_69 : f32 to vector<8x1024xf32>
    %83 = arith.maximumf %81, %82 : vector<8x1024xf32>
    %c896_i32_70 = arith.constant 896 : i32
    %84 = tpu.dynamic_rotate %83 by %c896_i32_70 dim 1 : vector<8x1024xf32>, i32 -> vector<8x1024xf32>
    %85 = arith.maximumf %83, %84 : vector<8x1024xf32>
    %c1020_i32_71 = arith.constant 1020 : i32
    %86 = tpu.dynamic_rotate %85 by %c1020_i32_71 dim 1 : vector<8x1024xf32>, i32 -> vector<8x1024xf32>
    %87 = arith.maximumf %85, %86 : vector<8x1024xf32>
    %88 = vector.extract_strided_slice %87 {offsets = [0, 0], sizes = [8, 1], strides = [1, 1]} : vector<8x1024xf32> to vector<8x1xf32>
    %c0_72 = arith.constant 0 : index
    %c0_73 = arith.constant 0 : index
    %89 = vector.load %arg14[%c0_72, %c0_73] : memref<32x1xf32, #tpu.memory_space<vmem>>, vector<8x1xf32>
    tpu.vector_store %arg14[%c0_72, %c0_73], %88 {strides = array<i32>} : memref<32x1xf32, #tpu.memory_space<vmem>>, vector<8x1xf32>,
    %90 = vector.extract_strided_slice %87 {offsets = [0, 8], sizes = [8, 1], strides = [1, 1]} : vector<8x1024xf32> to vector<8x1xf32>
    %c8_74 = arith.constant 8 : index
    %c0_75 = arith.constant 0 : index
    %91 = vector.load %arg14[%c8_74, %c0_75] : memref<32x1xf32, #tpu.memory_space<vmem>>, vector<8x1xf32>
    tpu.vector_store %arg14[%c8_74, %c0_75], %90 {strides = array<i32>} : memref<32x1xf32, #tpu.memory_space<vmem>>, vector<8x1xf32>,
    %92 = vector.extract_strided_slice %87 {offsets = [0, 256], sizes = [8, 1], strides = [1, 1]} : vector<8x1024xf32> to vector<8x1xf32>
    %c16_76 = arith.constant 16 : index
    %c0_77 = arith.constant 0 : index
    %93 = vector.load %arg14[%c16_76, %c0_77] : memref<32x1xf32, #tpu.memory_space<vmem>>, vector<8x1xf32>
    tpu.vector_store %arg14[%c16_76, %c0_77], %92 {strides = array<i32>} : memref<32x1xf32, #tpu.memory_space<vmem>>, vector<8x1xf32>,
    %94 = vector.extract_strided_slice %87 {offsets = [0, 264], sizes = [8, 1], strides = [1, 1]} : vector<8x1024xf32> to vector<8x1xf32>
    %c24_78 = arith.constant 24 : index
    %c0_79 = arith.constant 0 : index
    %95 = vector.load %arg14[%c24_78, %c0_79] : memref<32x1xf32, #tpu.memory_space<vmem>>, vector<8x1xf32>
    tpu.vector_store %arg14[%c24_78, %c0_79], %94 {strides = array<i32>} : memref<32x1xf32, #tpu.memory_space<vmem>>, vector<8x1xf32>,
    %c0_80 = arith.constant 0 : index
    %c0_81 = arith.constant 0 : index
    %96 = vector.load %arg8[%c0_80, %c0_81] : memref<32x32xf32, #tpu.memory_space<vmem>>, vector<32x32xf32>
    %c0_82 = arith.constant 0 : index
    %c0_83 = arith.constant 0 : index
    %97 = vector.load %arg14[%c0_82, %c0_83] : memref<32x1xf32, #tpu.memory_space<vmem>>, vector<32x1xf32>
    %cst_84 = arith.constant dense<0.000000e+00> : vector<32x1xf32>
    %98 = tpu.matmul %96, %97, %cst_84 {dimension_numbers = #tpu.dot_dimension_numbers<[1], [0], [0], [1], [0, 0, 1, 1], [], []>} : vector<32x32xf32>, vector<32x1xf32>, vector<32x1xf32> -> vector<32x1xf32>
    %c0_85 = arith.constant 0 : index
    %c0_86 = arith.constant 0 : index
    %99 = vector.load %arg9[%c0_85, %c0_86] : memref<32x1xf32, #tpu.memory_space<vmem>>, vector<32x1xf32>
    %100 = arith.addf %98, %99 : vector<32x1xf32>
    %cst_87 = arith.constant 0.000000e+00 : f32
    %101 = vector.broadcast %cst_87 : f32 to vector<32x1xf32>
    %102 = arith.maximumf %100, %101 : vector<32x1xf32>
    %c0_88 = arith.constant 0 : index
    %c0_89 = arith.constant 0 : index
    %103 = vector.load %arg10[%c0_88, %c0_89] : memref<16x32xf32, #tpu.memory_space<vmem>>, vector<16x32xf32>
    %cst_90 = arith.constant dense<0.000000e+00> : vector<16x1xf32>
    %104 = tpu.matmul %103, %102, %cst_90 {dimension_numbers = #tpu.dot_dimension_numbers<[1], [0], [0], [1], [0, 0, 1, 1], [], []>} : vector<16x32xf32>, vector<32x1xf32>, vector<16x1xf32> -> vector<16x1xf32>
    %c0_91 = arith.constant 0 : index
    %c0_92 = arith.constant 0 : index
    %105 = vector.load %arg11[%c0_91, %c0_92] : memref<16x1xf32, #tpu.memory_space<vmem>>, vector<16x1xf32>
    %106 = arith.addf %104, %105 : vector<16x1xf32>
    %cst_93 = arith.constant 0.000000e+00 : f32
    %107 = vector.broadcast %cst_93 : f32 to vector<16x1xf32>
    %108 = arith.maximumf %106, %107 : vector<16x1xf32>
    %c0_94 = arith.constant 0 : index
    %c0_95 = arith.constant 0 : index
    %c0_96 = arith.constant 0 : index
    %109 = vector.load %arg12[%c0_94, %c0_95, %c0_96] : memref<1x16x1xf32, #tpu.memory_space<vmem>>, vector<1x16x1xf32>
    %110 = vector.shape_cast %109 : vector<1x16x1xf32> to vector<16x1xf32>
    %111 = vector.shape_cast %108 : vector<16x1xf32> to vector<1x16x1xf32>
    tpu.vector_store %arg12[%c0_94, %c0_95, %c0_96], %111 {strides = array<i32>} : memref<1x16x1xf32, #tpu.memory_space<vmem>>, vector<1x16x1xf32>,
    return
  }
  func.func @transform_0(%arg0: i32) -> (i32, i32) {
    %c0_i32 = arith.constant 0 : i32
    %c0_i32_0 = arith.constant 0 : i32
    return %c0_i32, %arg0 : i32, i32
  }
  func.func @transform_1(%arg0: i32) -> (i32, i32) {
    %c0_i32 = arith.constant 0 : i32
    %c0_i32_0 = arith.constant 0 : i32
    %c0_i32_1 = arith.constant 0 : i32
    return %c0_i32, %c0_i32_0 : i32, i32
  }
  func.func @transform_2(%arg0: i32) -> (i32, i32) {
    %c0_i32 = arith.constant 0 : i32
    %c0_i32_0 = arith.constant 0 : i32
    %c0_i32_1 = arith.constant 0 : i32
    return %c0_i32, %c0_i32_0 : i32, i32
  }
  func.func @transform_3(%arg0: i32) -> (i32, i32) {
    %c0_i32 = arith.constant 0 : i32
    %c0_i32_0 = arith.constant 0 : i32
    %c0_i32_1 = arith.constant 0 : i32
    return %c0_i32, %c0_i32_0 : i32, i32
  }
  func.func @transform_4(%arg0: i32) -> (i32, i32) {
    %c0_i32 = arith.constant 0 : i32
    %c0_i32_0 = arith.constant 0 : i32
    %c0_i32_1 = arith.constant 0 : i32
    return %c0_i32, %c0_i32_0 : i32, i32
  }
  func.func @transform_5(%arg0: i32) -> (i32, i32) {
    %c0_i32 = arith.constant 0 : i32
    %c0_i32_0 = arith.constant 0 : i32
    %c0_i32_1 = arith.constant 0 : i32
    return %c0_i32, %c0_i32_0 : i32, i32
  }
  func.func @transform_6(%arg0: i32) -> (i32, i32) {
    %c0_i32 = arith.constant 0 : i32
    %c0_i32_0 = arith.constant 0 : i32
    %c0_i32_1 = arith.constant 0 : i32
    return %c0_i32, %c0_i32_0 : i32, i32
  }
  func.func @transform_7(%arg0: i32) -> (i32, i32) {
    %c0_i32 = arith.constant 0 : i32
    %c0_i32_0 = arith.constant 0 : i32
    %c0_i32_1 = arith.constant 0 : i32
    return %c0_i32, %c0_i32_0 : i32, i32
  }
  func.func @transform_8(%arg0: i32) -> (i32, i32) {
    %c0_i32 = arith.constant 0 : i32
    %c0_i32_0 = arith.constant 0 : i32
    %c0_i32_1 = arith.constant 0 : i32
    return %c0_i32, %c0_i32_0 : i32, i32
  }
  func.func @transform_9(%arg0: i32) -> (i32, i32) {
    %c0_i32 = arith.constant 0 : i32
    %c0_i32_0 = arith.constant 0 : i32
    %c0_i32_1 = arith.constant 0 : i32
    return %c0_i32, %c0_i32_0 : i32, i32
  }
  func.func @transform_10(%arg0: i32) -> (i32, i32) {
    %c0_i32 = arith.constant 0 : i32
    %c0_i32_0 = arith.constant 0 : i32
    %c0_i32_1 = arith.constant 0 : i32
    return %c0_i32, %c0_i32_0 : i32, i32
  }
  func.func @transform_11(%arg0: i32) -> (i32, i32, i32) {
    %c0_i32 = arith.constant 0 : i32
    %c0_i32_0 = arith.constant 0 : i32
    %c0_i32_1 = arith.constant 0 : i32
    return %arg0, %c0_i32, %c0_i32_0 : i32, i32, i32
  }
}

</mosaic_0001>

<llo_original>
// kernel: tpu_custom_call.1
$region0: #{tpu_custom_call.1}
  #allocation0 [shape = 'u32[]', space=smem, size = 0x4, offset = 0x4, fixed_abs, tag = 'smem constant byte address 0x4 - core index']
  #allocation1 [shape = 'u32[144,128]{1,0:T(1,128)}', space=vmem, size = 0x12000, scoped, tag = 'internal scratch']
  #allocation2 [shape = 'f32[72,1024]{1,0:T(8,128)}', space=vmem, size = 0x48000, scoped, tag = 'scratch operand']
  #allocation3 [shape = 'f32[32,1]{1,0:T(8,128)}', space=vmem, size = 0x4000, scoped, tag = 'scratch operand']
  %s0 = inlined_call_operand.vmem [shape: f32[1,2048], index: 0, kind: input, shape index: {}]
  %s1 = inlined_call_operand.hbm [shape: f32[4,9], index: 1, kind: input, shape index: {}]
  %s2 = inlined_call_operand.vmem [shape: f32[4,1], index: 2, kind: input, shape index: {}]
  %s3 = inlined_call_operand.vmem [shape: f32[8,36], index: 3, kind: input, shape index: {}]
  %s4 = inlined_call_operand.vmem [shape: f32[8,1], index: 4, kind: input, shape index: {}]
  %s5 = inlined_call_operand.vmem [shape: f32[8,72], index: 5, kind: input, shape index: {}]
  %s6 = inlined_call_operand.vmem [shape: f32[8,1], index: 6, kind: input, shape index: {}]
  %s7 = inlined_call_operand.vmem [shape: f32[32,32], index: 7, kind: input, shape index: {}]
  %s8 = inlined_call_operand.vmem [shape: f32[32,1], index: 8, kind: input, shape index: {}]
  %s9 = inlined_call_operand.vmem [shape: f32[16,32], index: 9, kind: input, shape index: {}]
  %s10 = inlined_call_operand.vmem [shape: f32[16,1], index: 10, kind: input, shape index: {}]
  %s11 = inlined_call_operand.vmem [shape: f32[2,16,1], index: 11, kind: output, shape index: {}]
  %s12 = sld [smem:[#allocation0]]
  $region81: #{tpu_custom_call.1} parent=0
    _
  %s14 = ssub.s32 1, %s12
  %s15 = scalar_select 0, %s14, %s12
  $region1: #{tpu_custom_call.1} parent=0
    #allocation4 [shape = 'u8[2048]{0}', space=vmem, size = 0x800, scoped, tag = 'input window, operand 1, single buffered']
    #allocation5 [shape = 's32[2]{0}', space=sflag, size = 0x8, scoped, tag = 'scoped memory for tpu_custom_call.1']
    %16 = vsyncpa [#allocation5], 0
    loop: start=0, step=1, limit=4
    $region2: #{tpu_custom_call.1} parent=1 // loop_pre_header
      _
    $region3: #{tpu_custom_call.1} parent=1 // loop_header
      %s18 = sphi 0, %s22
      %p19 = scmp.ge.s32.totalorder %s18, 4
      %s28 = sphi 0, %s30
      %s31 = sphi 0, %s28
      %s32 = sphi 0, %s31
      %s48 = sphi 0, %s32
      %s52 = sphi 0, %s52
      %s54 = sphi 0, %s52
      %s55 = sphi 0, %s54
      %s69 = sphi 0, %s55
      %s73 = sphi 0, %s73
      %s75 = sphi 0, %s73
      %s76 = sphi 0, %s75
      %s90 = sphi 0, %s76
      %s94 = sphi 0, %s94
      %s96 = sphi 0, %s94
      %s97 = sphi 0, %s96
      %s111 = sphi 0, %s97
      %s115 = sphi 0, %s115
      %s117 = sphi 0, %s115
      %s118 = sphi 0, %s117
      %s132 = sphi 0, %s118
      %s136 = sphi 0, %s136
      %s138 = sphi 0, %s136
      %s139 = sphi 0, %s138
      %s153 = sphi 0, %s139
      %s157 = sphi 0, %s157
      %s159 = sphi 0, %s157
      %s160 = sphi 0, %s159
      %s174 = sphi 0, %s160
      %s178 = sphi 0, %s178
      %s180 = sphi 0, %s178
      %s181 = sphi 0, %s180
      %s195 = sphi 0, %s181
      %s199 = sphi 0, %s199
      %s201 = sphi 0, %s199
      %s202 = sphi 0, %s201
      %s216 = sphi 0, %s202
      %s220 = sphi 0, %s220
      %s222 = sphi 0, %s220
      %s223 = sphi 0, %s222
      %s237 = sphi 0, %s223
      %s241 = sphi 0, %s241
      %s243 = sphi 0, %s241
      %s244 = sphi 0, %s243
      %s258 = sphi 0, %s244
      %s264 = sphi 0, %s266
      %s267 = sphi 0, %s264
      %s268 = sphi 0, %s267
      %s284 = sphi 0, %s268
    $region4: #{tpu_custom_call.1} parent=1 // loop_header_branch
      %21 = sbr.rel (%p19) target = $region8
    $region5: #{tpu_custom_call.1} parent=1 // loop_body
      %s23 = ssub.s32 %s18, 1
      %s24 = ssub.s32 %s18, 2
      %s25 = sadd.s32 %s18, 1
      %s26 = ssub.s32 %s18, %s25
      %p27 = scmp.eq.s32.totalorder %s26, 0
      %s29 = sadd.s32 %s28, 1
      %s30 = scalar_select %p27, %s28, %s29
      %p33 = pneg %p27
      %p34 = scmp.eq.s32.totalorder %s18, 1
      %p35 = por %p33, %p34
      %p36 = scmp.ne.s32.totalorder %s28, %s31
      %p37 = scmp.eq.s32.totalorder %s18, 0
      %p38 = por %p36, %p37
      %p39 = scmp.ne.s32.totalorder %s28, %s31
      %p40 = scmp.eq.s32.totalorder %s23, 1
      %p41 = por %p39, %p40
      %p42 = scmp.ne.s32.totalorder %s31, %s32
      %p43 = scmp.eq.s32.totalorder %s23, 0
      %p44 = por %p42, %p43
      %p45 = scmp.ne.s32.totalorder %s31, %s32
      %p46 = scmp.eq.s32.totalorder %s24, 1
      %p47 = por %p45, %p46
      %p49 = scmp.ne.s32.totalorder %s32, %s48
      %p50 = scmp.eq.s32.totalorder %s24, 0
      %p51 = por %p49, %p50
      %s53 = sadd.s32 %s52, 1
      %p56 = scmp.eq.s32.totalorder %s18, 1
      %p57 = scmp.ne.s32.totalorder %s52, %s54
      %p58 = scmp.eq.s32.totalorder %s18, 0
      %p59 = por %p57, %p58
      %p60 = scmp.ne.s32.totalorder %s52, %s54
      %p61 = scmp.eq.s32.totalorder %s23, 1
      %p62 = por %p60, %p61
      %p63 = scmp.ne.s32.totalorder %s54, %s55
      %p64 = scmp.eq.s32.totalorder %s23, 0
      %p65 = por %p63, %p64
      %p66 = scmp.ne.s32.totalorder %s54, %s55
      %p67 = scmp.eq.s32.totalorder %s24, 1
      %p68 = por %p66, %p67
      %p70 = scmp.ne.s32.totalorder %s55, %s69
      %p71 = scmp.eq.s32.totalorder %s24, 0
      %p72 = por %p70, %p71
      %s74 = sadd.s32 %s73, 1
      %p77 = scmp.eq.s32.totalorder %s18, 1
      %p78 = scmp.ne.s32.totalorder %s73, %s75
      %p79 = scmp.eq.s32.totalorder %s18, 0
      %p80 = por %p78, %p79
      %p81 = scmp.ne.s32.totalorder %s73, %s75
      %p82 = scmp.eq.s32.totalorder %s23, 1
      %p83 = por %p81, %p82
      %p84 = scmp.ne.s32.totalorder %s75, %s76
      %p85 = scmp.eq.s32.totalorder %s23, 0
      %p86 = por %p84, %p85
      %p87 = scmp.ne.s32.totalorder %s75, %s76
      %p88 = scmp.eq.s32.totalorder %s24, 1
      %p89 = por %p87, %p88
      %p91 = scmp.ne.s32.totalorder %s76, %s90
      %p92 = scmp.eq.s32.totalorder %s24, 0
      %p93 = por %p91, %p92
      %s95 = sadd.s32 %s94, 1
      %p98 = scmp.eq.s32.totalorder %s18, 1
      %p99 = scmp.ne.s32.totalorder %s94, %s96
      %p100 = scmp.eq.s32.totalorder %s18, 0
      %p101 = por %p99, %p100
      %p102 = scmp.ne.s32.totalorder %s94, %s96
      %p103 = scmp.eq.s32.totalorder %s23, 1
      %p104 = por %p102, %p103
      %p105 = scmp.ne.s32.totalorder %s96, %s97
      %p106 = scmp.eq.s32.totalorder %s23, 0
      %p107 = por %p105, %p106
      %p108 = scmp.ne.s32.totalorder %s96, %s97
      %p109 = scmp.eq.s32.totalorder %s24, 1
      %p110 = por %p108, %p109
      %p112 = scmp.ne.s32.totalorder %s97, %s111
      %p113 = scmp.eq.s32.totalorder %s24, 0
      %p114 = por %p112, %p113
      %s116 = sadd.s32 %s115, 1
      %p119 = scmp.eq.s32.totalorder %s18, 1
      %p120 = scmp.ne.s32.totalorder %s115, %s117
      %p121 = scmp.eq.s32.totalorder %s18, 0
      %p122 = por %p120, %p121
      %p123 = scmp.ne.s32.totalorder %s115, %s117
      %p124 = scmp.eq.s32.totalorder %s23, 1
      %p125 = por %p123, %p124
      %p126 = scmp.ne.s32.totalorder %s117, %s118
      %p127 = scmp.eq.s32.totalorder %s23, 0
      %p128 = por %p126, %p127
      %p129 = scmp.ne.s32.totalorder %s117, %s118
      %p130 = scmp.eq.s32.totalorder %s24, 1
      %p131 = por %p129, %p130
      %p133 = scmp.ne.s32.totalorder %s118, %s132
      %p134 = scmp.eq.s32.totalorder %s24, 0
      %p135 = por %p133, %p134
      %s137 = sadd.s32 %s136, 1
      %p140 = scmp.eq.s32.totalorder %s18, 1
      %p141 = scmp.ne.s32.totalorder %s136, %s138
      %p142 = scmp.eq.s32.totalorder %s18, 0
      %p143 = por %p141, %p142
      %p144 = scmp.ne.s32.totalorder %s136, %s138
      %p145 = scmp.eq.s32.totalorder %s23, 1
      %p146 = por %p144, %p145
      %p147 = scmp.ne.s32.totalorder %s138, %s139
      %p148 = scmp.eq.s32.totalorder %s23, 0
      %p149 = por %p147, %p148
      %p150 = scmp.ne.s32.totalorder %s138, %s139
      %p151 = scmp.eq.s32.totalorder %s24, 1
      %p152 = por %p150, %p151
      %p154 = scmp.ne.s32.totalorder %s139, %s153
      %p155 = scmp.eq.s32.totalorder %s24, 0
      %p156 = por %p154, %p155
      %s158 = sadd.s32 %s157, 1
      %p161 = scmp.eq.s32.totalorder %s18, 1
      %p162 = scmp.ne.s32.totalorder %s157, %s159
      %p163 = scmp.eq.s32.totalorder %s18, 0
      %p164 = por %p162, %p163
      %p165 = scmp.ne.s32.totalorder %s157, %s159
      %p166 = scmp.eq.s32.totalorder %s23, 1
      %p167 = por %p165, %p166
      %p168 = scmp.ne.s32.totalorder %s159, %s160
      %p169 = scmp.eq.s32.totalorder %s23, 0
      %p170 = por %p168, %p169
      %p171 = scmp.ne.s32.totalorder %s159, %s160
      %p172 = scmp.eq.s32.totalorder %s24, 1
      %p173 = por %p171, %p172
      %p175 = scmp.ne.s32.totalorder %s160, %s174
      %p176 = scmp.eq.s32.totalorder %s24, 0
      %p177 = por %p175, %p176
      %s179 = sadd.s32 %s178, 1
      %p182 = scmp.eq.s32.totalorder %s18, 1
      %p183 = scmp.ne.s32.totalorder %s178, %s180
      %p184 = scmp.eq.s32.totalorder %s18, 0
      %p185 = por %p183, %p184
      %p186 = scmp.ne.s32.totalorder %s178, %s180
      %p187 = scmp.eq.s32.totalorder %s23, 1
      %p188 = por %p186, %p187
      %p189 = scmp.ne.s32.totalorder %s180, %s181
      %p190 = scmp.eq.s32.totalorder %s23, 0
      %p191 = por %p189, %p190
      %p192 = scmp.ne.s32.totalorder %s180, %s181
      %p193 = scmp.eq.s32.totalorder %s24, 1
      %p194 = por %p192, %p193
      %p196 = scmp.ne.s32.totalorder %s181, %s195
      %p197 = scmp.eq.s32.totalorder %s24, 0
      %p198 = por %p196, %p197
      %s200 = sadd.s32 %s199, 1
      %p203 = scmp.eq.s32.totalorder %s18, 1
      %p204 = scmp.ne.s32.totalorder %s199, %s201
      %p205 = scmp.eq.s32.totalorder %s18, 0
      %p206 = por %p204, %p205
      %p207 = scmp.ne.s32.totalorder %s199, %s201
      %p208 = scmp.eq.s32.totalorder %s23, 1
      %p209 = por %p207, %p208
      %p210 = scmp.ne.s32.totalorder %s201, %s202
      %p211 = scmp.eq.s32.totalorder %s23, 0
      %p212 = por %p210, %p211
      %p213 = scmp.ne.s32.totalorder %s201, %s202
      %p214 = scmp.eq.s32.totalorder %s24, 1
      %p215 = por %p213, %p214
      %p217 = scmp.ne.s32.totalorder %s202, %s216
      %p218 = scmp.eq.s32.totalorder %s24, 0
      %p219 = por %p217, %p218
      %s221 = sadd.s32 %s220, 1
      %p224 = scmp.eq.s32.totalorder %s18, 1
      %p225 = scmp.ne.s32.totalorder %s220, %s222
      %p226 = scmp.eq.s32.totalorder %s18, 0
      %p227 = por %p225, %p226
      %p228 = scmp.ne.s32.totalorder %s220, %s222
      %p229 = scmp.eq.s32.totalorder %s23, 1
      %p230 = por %p228, %p229
      %p231 = scmp.ne.s32.totalorder %s222, %s223
      %p232 = scmp.eq.s32.totalorder %s23, 0
      %p233 = por %p231, %p232
      %p234 = scmp.ne.s32.totalorder %s222, %s223
      %p235 = scmp.eq.s32.totalorder %s24, 1
      %p236 = por %p234, %p235
      %p238 = scmp.ne.s32.totalorder %s223, %s237
      %p239 = scmp.eq.s32.totalorder %s24, 0
      %p240 = por %p238, %p239
      %s242 = sadd.s32 %s241, 1
      %p245 = scmp.eq.s32.totalorder %s18, 1
      %p246 = scmp.ne.s32.totalorder %s241, %s243
      %p247 = scmp.eq.s32.totalorder %s18, 0
      %p248 = por %p246, %p247
      %p249 = scmp.ne.s32.totalorder %s241, %s243
      %p250 = scmp.eq.s32.totalorder %s23, 1
      %p251 = por %p249, %p250
      %p252 = scmp.ne.s32.totalorder %s243, %s244
      %p253 = scmp.eq.s32.totalorder %s23, 0
      %p254 = por %p252, %p253
      %p255 = scmp.ne.s32.totalorder %s243, %s244
      %p256 = scmp.eq.s32.totalorder %s24, 1
      %p257 = por %p255, %p256
      %p259 = scmp.ne.s32.totalorder %s244, %s258
      %p260 = scmp.eq.s32.totalorder %s24, 0
      %p261 = por %p259, %p260
      %s262 = ssub.s32 %s18, %s25
      %p263 = scmp.eq.s32.totalorder %s262, 0
      %s265 = sadd.s32 %s264, 1
      %s266 = scalar_select %p263, %s264, %s265
      %p269 = pneg %p263
      %p270 = scmp.eq.s32.totalorder %s18, 1
      %p271 = por %p269, %p270
      %p272 = scmp.ne.s32.totalorder %s264, %s267
      %p273 = scmp.eq.s32.totalorder %s18, 0
      %p274 = por %p272, %p273
      %p275 = scmp.ne.s32.totalorder %s264, %s267
      %p276 = scmp.eq.s32.totalorder %s23, 1
      %p277 = por %p275, %p276
      %p278 = scmp.ne.s32.totalorder %s267, %s268
      %p279 = scmp.eq.s32.totalorder %s23, 0
      %p280 = por %p278, %p279
      %p281 = scmp.ne.s32.totalorder %s267, %s268
      %p282 = scmp.eq.s32.totalorder %s24, 1
      %p283 = por %p281, %p282
      %p285 = scmp.ne.s32.totalorder %s268, %s284
      %p286 = scmp.eq.s32.totalorder %s24, 0
      %p287 = por %p285, %p286
      %p288 = scmp.le.s32.totalorder 1, %s18
      %p289 = scmp.lt.s32.totalorder %s18, 3
      %p290 = pnand %p288, %p289
      %p291 = pneg %p290
      // Predicated region
      $region9: #{tpu_custom_call.1} parent=5 // pred_check
        _
      $region10: #{tpu_custom_call.1} parent=5 // pred_check_branch
        %293 = sbr.rel (%p290) target = $region12
      $region11: #{tpu_custom_call.1} parent=5 // pred_region
        %s294 = ssub.s32 %s18, 1
        // Predicated region
        $region13: #{tpu_custom_call.1} parent=11 // pred_check
          %p295 = pneg %p65
        $region14: #{tpu_custom_call.1} parent=11 // pred_check_branch
          %297 = sbr.rel (%p295) target = $region16
        $region15: #{tpu_custom_call.1} parent=11 // pred_region
          %s299 = ssub.s32 64, 64
          %300 = vsyncadd [#allocation5], %s299
          %s302 = sshll.u32 [#allocation4], 4
          %s303 = int_to_ptr.vmem [resolvable:$true] %s302
          %305 = dma.hbm_to_vmem [thread:$0]  %s1, 64, %s303, [#allocation5]
        $region16: #{tpu_custom_call.1} parent=11 // pred_fallthru
          _
        // Predicated region
        $region17: #{tpu_custom_call.1} parent=11 // pred_check
          %p306 = pneg %p86
        $region18: #{tpu_custom_call.1} parent=11 // pred_check_branch
          %308 = sbr.rel (%p306) target = $region20
        $region19: #{tpu_custom_call.1} parent=11 // pred_region
          _
        $region20: #{tpu_custom_call.1} parent=11 // pred_fallthru
          _
        // Predicated region
        $region21: #{tpu_custom_call.1} parent=11 // pred_check
          %p309 = pneg %p107
        $region22: #{tpu_custom_call.1} parent=11 // pred_check_branch
          %311 = sbr.rel (%p309) target = $region24
        $region23: #{tpu_custom_call.1} parent=11 // pred_region
          _
        $region24: #{tpu_custom_call.1} parent=11 // pred_fallthru
          _
        // Predicated region
        $region25: #{tpu_custom_call.1} parent=11 // pred_check
          %p312 = pneg %p128
        $region26: #{tpu_custom_call.1} parent=11 // pred_check_branch
          %314 = sbr.rel (%p312) target = $region28
        $region27: #{tpu_custom_call.1} parent=11 // pred_region
          _
        $region28: #{tpu_custom_call.1} parent=11 // pred_fallthru
          _
        // Predicated region
        $region29: #{tpu_custom_call.1} parent=11 // pred_check
          %p315 = pneg %p149
        $region30: #{tpu_custom_call.1} parent=11 // pred_check_branch
          %317 = sbr.rel (%p315) target = $region32
        $region31: #{tpu_custom_call.1} parent=11 // pred_region
          _
        $region32: #{tpu_custom_call.1} parent=11 // pred_fallthru
          _
        // Predicated region
        $region33: #{tpu_custom_call.1} parent=11 // pred_check
          %p318 = pneg %p170
        $region34: #{tpu_custom_call.1} parent=11 // pred_check_branch
          %320 = sbr.rel (%p318) target = $region36
        $region35: #{tpu_custom_call.1} parent=11 // pred_region
          _
        $region36: #{tpu_custom_call.1} parent=11 // pred_fallthru
          _
        // Predicated region
        $region37: #{tpu_custom_call.1} parent=11 // pred_check
          %p321 = pneg %p191
        $region38: #{tpu_custom_call.1} parent=11 // pred_check_branch
          %323 = sbr.rel (%p321) target = $region40
        $region39: #{tpu_custom_call.1} parent=11 // pred_region
          _
        $region40: #{tpu_custom_call.1} parent=11 // pred_fallthru
          _
        // Predicated region
        $region41: #{tpu_custom_call.1} parent=11 // pred_check
          %p324 = pneg %p212
        $region42: #{tpu_custom_call.1} parent=11 // pred_check_branch
          %326 = sbr.rel (%p324) target = $region44
        $region43: #{tpu_custom_call.1} parent=11 // pred_region
          _
        $region44: #{tpu_custom_call.1} parent=11 // pred_fallthru
          _
        // Predicated region
        $region45: #{tpu_custom_call.1} parent=11 // pred_check
          %p327 = pneg %p233
        $region46: #{tpu_custom_call.1} parent=11 // pred_check_branch
          %329 = sbr.rel (%p327) target = $region48
        $region47: #{tpu_custom_call.1} parent=11 // pred_region
          _
        $region48: #{tpu_custom_call.1} parent=11 // pred_fallthru
          _
        // Predicated region
        $region49: #{tpu_custom_call.1} parent=11 // pred_check
          %p330 = pneg %p254
        $region50: #{tpu_custom_call.1} parent=11 // pred_check_branch
          %332 = sbr.rel (%p330) target = $region52
        $region51: #{tpu_custom_call.1} parent=11 // pred_region
          _
        $region52: #{tpu_custom_call.1} parent=11 // pred_fallthru
          _
      $region12: #{tpu_custom_call.1} parent=5 // pred_fallthru
        _
      %p333 = scmp.lt.s32.totalorder %s18, 2
      // Predicated region
      $region53: #{tpu_custom_call.1} parent=5 // pred_check
        %p334 = pneg %p333
      $region54: #{tpu_custom_call.1} parent=5 // pred_check_branch
        %336 = sbr.rel (%p334) target = $region56
      $region55: #{tpu_custom_call.1} parent=5 // pred_region
        // Predicated region
        $region57: #{tpu_custom_call.1} parent=55 // pred_check
          %p337 = pneg %p38
        $region58: #{tpu_custom_call.1} parent=55 // pred_check_branch
          %339 = sbr.rel (%p337) target = $region60
        $region59: #{tpu_custom_call.1} parent=55 // pred_region
          %s340 = smul.u32 8, %s18
          %p341 = scmp.lt.s32.totalorder %s340, 15
          %s342 = scalar_select %p341, %s340, 15
          %s343 = scalar_lea.vmem %s0, %s342
          %s344 = smul.u32 8, %s18
        $region60: #{tpu_custom_call.1} parent=55 // pred_fallthru
          _
      $region56: #{tpu_custom_call.1} parent=5 // pred_fallthru
        _
      %p345 = scmp.le.s32.totalorder 1, %s18
      %p346 = scmp.lt.s32.totalorder %s18, 3
      %p347 = pnand %p345, %p346
      %p348 = pneg %p347
      // Predicated region
      $region61: #{tpu_custom_call.1} parent=5 // pred_check
        _
      $region62: #{tpu_custom_call.1} parent=5 // pred_check_branch
        %350 = sbr.rel (%p347) target = $region64
      $region63: #{tpu_custom_call.1} parent=5 // pred_region
        %s351 = ssub.s32 %s18, 1
        // Predicated region
        $region65: #{tpu_custom_call.1} parent=63 // pred_check
          %p352 = pneg %p65
        $region66: #{tpu_custom_call.1} parent=63 // pred_check_branch
          %354 = sbr.rel (%p352) target = $region68
        $region67: #{tpu_custom_call.1} parent=63 // pred_region
          %355 = dma.done [#allocation5], 64
        $region68: #{tpu_custom_call.1} parent=63 // pred_fallthru
          _
        %s356 = smul.u32 8, %s23
        %p357 = scmp.lt.s32.totalorder %s356, 15
        %s358 = scalar_select %p357, %s356, 15
        %s359 = scalar_lea.vmem %s0, %s358
        %p360 = pneg %p44
        %p361 = pneg %p41
        %p362 = pneg %p65
        %p363 = pneg %p62
        %p364 = pneg %p86
        %p365 = pneg %p83
        %p366 = pneg %p107
        %p367 = pneg %p104
        %p368 = pneg %p128
        %p369 = pneg %p125
        %p370 = pneg %p149
        %p371 = pneg %p146
        %p372 = pneg %p170
        %p373 = pneg %p167
        %p374 = pneg %p191
        %p375 = pneg %p188
        %p376 = pneg %p212
        %p377 = pneg %p209
        %p378 = pneg %p233
        %p379 = pneg %p230
        %p380 = pneg %p254
        %p381 = pneg %p251
        %p382 = pneg %p280
        %p383 = pneg %p277
        %p384 = scmp.lt.s32.totalorder %s23, 1
        %s385 = scalar_select %p384, %s23, 1
        %s386 = smul.addr %s385, 2
        %s387 = smul.addr %s386, 8
        %s388 = scalar_lea.vmem %s11, %s387
        %s389 = smul.u32 8, %s23
        %p390 = scmp.lt.s32.totalorder %s389, 15
        %s391 = scalar_select %p390, %s389, 15
        %s392 = scalar_lea.vmem %s0, %s391
        %s393 = smul.u32 8, %s23
        %p394 = scmp.lt.s32.totalorder %s23, 1
        %s395 = scalar_select %p394, %s23, 1
        %s396 = smul.addr %s395, 2
        %s397 = smul.addr %s396, 8
        %s398 = scalar_lea.vmem %s11, %s397
        %v399 = vld [vmem:[%s392] sm:$0xff]
        %400 = vst [vmem:[#allocation2] ss:$8 sm:$0xf] %v399
        %401 = vst [vmem:[#allocation2] ss:$8 sm:$0xf0] %v399
        %v403 = vlaneseq
        %v404 = vshrl.u32 %v403, 7
        %v405 = vsub.s32 0, %v404
        %v406 = vrot.slane %v399, %v405
        %v407 = vlaneseq
        %v408 = vshrl.u32 %v407, 7
        %v409 = vsub.s32 1, %v408
        %v410 = vrot.slane %v399, %v409
        %v411 = vlaneseq
        %v412 = vshrl.u32 %v411, 7
        %v413 = vsub.s32 2, %v412
        %v414 = vrot.slane %v399, %v413
        %v415 = vlaneseq
        %v416 = vshrl.u32 %v415, 7
        %v417 = vsub.s32 3, %v416
        %v418 = vrot.slane %v399, %v417
        %v419 = vlaneseq
        %v420 = vshrl.u32 %v419, 7
        %v421 = vsub.s32 4, %v420
        %v422 = vrot.slane %v399, %v421
        %v423 = vlaneseq
        %v424 = vshrl.u32 %v423, 7
        %v425 = vsub.s32 5, %v424
        %v426 = vrot.slane %v399, %v425
        %v427 = vlaneseq
        %v428 = vshrl.u32 %v427, 7
        %v429 = vsub.s32 6, %v428
        %v430 = vrot.slane %v399, %v429
        %v431 = vlaneseq
        %v432 = vshrl.u32 %v431, 7
        %v433 = vsub.s32 7, %v432
        %v434 = vrot.slane %v399, %v433
        %443 = vrot.lane.b32.xlu0 %v406, 127
        %v444 = vpop.permute.xlu0 %443
        %445 = vrot.lane.b32.xlu0 %v410, 127
        %v446 = vpop.permute.xlu0 %445
        %447 = vrot.lane.b32.xlu0 %v414, 127
        %v448 = vpop.permute.xlu0 %447
        %449 = vrot.lane.b32.xlu0 %v418, 127
        %v450 = vpop.permute.xlu0 %449
        %451 = vrot.lane.b32.xlu0 %v422, 127
        %v452 = vpop.permute.xlu0 %451
        %453 = vrot.lane.b32.xlu0 %v426, 127
        %v454 = vpop.permute.xlu0 %453
        %455 = vrot.lane.b32.xlu0 %v430, 127
        %v456 = vpop.permute.xlu0 %455
        %457 = vrot.lane.b32.xlu0 %v434, 127
        %v458 = vpop.permute.xlu0 %457
        %v459 = vlaneseq
        %v460 = vand.u32 %v459, 127
        %vm461 = vcmp.lt.s32.totalorder %v460, 127
        %v462 = vsel %vm461, %v456, %v458
        %v463 = vsel %vm461, %v454, %v456
        %v464 = vsel %vm461, %v452, %v454
        %v465 = vsel %vm461, %v450, %v452
        %v466 = vsel %vm461, %v448, %v450
        %v467 = vsel %vm461, %v446, %v448
        %v468 = vsel %vm461, %v444, %v446
        %v469 = vsel %vm461, %v458, %v444
        %v478 = vcombine.low %v468, %v467
        %v479 = vcombine.low %v466, %v465
        %v480 = vcombine.low %v464, %v463
        %v481 = vcombine.low %v462, %v469
        %v483 = vunpack.c.l.s4 1966171168
        %v484 = vunpack.c.0.s8 %v483
        %v485 = vlaneseq
        %v486 = vshrl.u32 %v485, 7
        %v487 = vsub.s32 %v484, %v486
        %v488 = vrot.slane %v478, %v487
        %v490 = vunpack.c.l.s4 1966171168
        %v491 = vunpack.c.0.s8 %v490
        %v492 = vlaneseq
        %v493 = vshrl.u32 %v492, 7
        %v494 = vsub.s32 %v491, %v493
        %v495 = vrot.slane %v479, %v494
        %v497 = vunpack.c.l.s4 1966171168
        %v498 = vunpack.c.0.s8 %v497
        %v499 = vlaneseq
        %v500 = vshrl.u32 %v499, 7
        %v501 = vsub.s32 %v498, %v500
        %v502 = vrot.slane %v480, %v501
        %v504 = vunpack.c.l.s4 1966171168
        %v505 = vunpack.c.0.s8 %v504
        %v506 = vlaneseq
        %v507 = vshrl.u32 %v506, 7
        %v508 = vsub.s32 %v505, %v507
        %v509 = vrot.slane %v481, %v508
        %v510 = vcombine.low %v488, %v495
        %v511 = vcombine.low %v502, %v509
        %v513 = vunpack.c.l.s4 1966171168
        %v514 = vunpack.c.0.s8 %v513
        %v515 = vlaneseq
        %v516 = vshrl.u32 %v515, 7
        %v517 = vsub.s32 %v514, %v516
        %v518 = vrot.slane %v510, %v517
        %v520 = vunpack.c.l.s4 1966171168
        %v521 = vunpack.c.0.s8 %v520
        %v522 = vlaneseq
        %v523 = vshrl.u32 %v522, 7
        %v524 = vsub.s32 %v521, %v523
        %v525 = vrot.slane %v511, %v524
        %v526 = vcombine.low %v518, %v525
        %s528 = scalar_lea.vmem [#allocation2], 1
        %529 = vst [vmem:[%s528] ss:$8 sm:$0xf] %v526
        %530 = vst [vmem:[%s528] ss:$8 sm:$0xf0] %v526
        %531 = vrot.lane.b32.xlu0 %v406, 126
        %v532 = vpop.permute.xlu0 %531
        %533 = vrot.lane.b32.xlu0 %v410, 126
        %v534 = vpop.permute.xlu0 %533
        %535 = vrot.lane.b32.xlu0 %v414, 126
        %v536 = vpop.permute.xlu0 %535
        %537 = vrot.lane.b32.xlu0 %v418, 126
        %v538 = vpop.permute.xlu0 %537
        %539 = vrot.lane.b32.xlu0 %v422, 126
        %v540 = vpop.permute.xlu0 %539
        %541 = vrot.lane.b32.xlu0 %v426, 126
        %v542 = vpop.permute.xlu0 %541
        %543 = vrot.lane.b32.xlu0 %v430, 126
        %v544 = vpop.permute.xlu0 %543
        %545 = vrot.lane.b32.xlu0 %v434, 126
        %v546 = vpop.permute.xlu0 %545
        %vm547 = vcmp.lt.s32.totalorder %v460, 126
        %v548 = vsel %vm547, %v544, %v546
        %v549 = vsel %vm547, %v542, %v544
        %v550 = vsel %vm547, %v540, %v542
        %v551 = vsel %vm547, %v538, %v540
        %v552 = vsel %vm547, %v536, %v538
        %v553 = vsel %vm547, %v534, %v536
        %v554 = vsel %vm547, %v532, %v534
        %v555 = vsel %vm547, %v546, %v532
        %v564 = vcombine.low %v554, %v553
        %v565 = vcombine.low %v552, %v551
        %v566 = vcombine.low %v550, %v549
        %v567 = vcombine.low %v548, %v555
        %v569 = vunpack.c.l.s4 1966171168
        %v570 = vunpack.c.0.s8 %v569
        %v571 = vlaneseq
        %v572 = vshrl.u32 %v571, 7
        %v573 = vsub.s32 %v570, %v572
        %v574 = vrot.slane %v564, %v573
        %v576 = vunpack.c.l.s4 1966171168
        %v577 = vunpack.c.0.s8 %v576
        %v578 = vlaneseq
        %v579 = vshrl.u32 %v578, 7
        %v580 = vsub.s32 %v577, %v579
        %v581 = vrot.slane %v565, %v580
        %v583 = vunpack.c.l.s4 1966171168
        %v584 = vunpack.c.0.s8 %v583
        %v585 = vlaneseq
        %v586 = vshrl.u32 %v585, 7
        %v587 = vsub.s32 %v584, %v586
        %v588 = vrot.slane %v566, %v587
        %v590 = vunpack.c.l.s4 1966171168
        %v591 = vunpack.c.0.s8 %v590
        %v592 = vlaneseq
        %v593 = vshrl.u32 %v592, 7
        %v594 = vsub.s32 %v591, %v593
        %v595 = vrot.slane %v567, %v594
        %v596 = vcombine.low %v574, %v581
        %v597 = vcombine.low %v588, %v595
        %v599 = vunpack.c.l.s4 1966171168
        %v600 = vunpack.c.0.s8 %v599
        %v601 = vlaneseq
        %v602 = vshrl.u32 %v601, 7
        %v603 = vsub.s32 %v600, %v602
        %v604 = vrot.slane %v596, %v603
        %v606 = vunpack.c.l.s4 1966171168
        %v607 = vunpack.c.0.s8 %v606
        %v608 = vlaneseq
        %v609 = vshrl.u32 %v608, 7
        %v610 = vsub.s32 %v607, %v609
        %v611 = vrot.slane %v597, %v610
        %v612 = vcombine.low %v604, %v611
        %s614 = scalar_lea.vmem [#allocation2], 2
        %615 = vst [vmem:[%s614] ss:$8 sm:$0xf] %v612
        %616 = vst [vmem:[%s614] ss:$8 sm:$0xf0] %v612
        %617 = vrot.lane.b32.xlu0 %v406, 96
        %v618 = vpop.permute.xlu0 %617
        %619 = vrot.lane.b32.xlu0 %v410, 96
        %v620 = vpop.permute.xlu0 %619
        %621 = vrot.lane.b32.xlu0 %v414, 96
        %v622 = vpop.permute.xlu0 %621
        %623 = vrot.lane.b32.xlu0 %v418, 96
        %v624 = vpop.permute.xlu0 %623
        %625 = vrot.lane.b32.xlu0 %v422, 96
        %v626 = vpop.permute.xlu0 %625
        %627 = vrot.lane.b32.xlu0 %v426, 96
        %v628 = vpop.permute.xlu0 %627
        %629 = vrot.lane.b32.xlu0 %v430, 96
        %v630 = vpop.permute.xlu0 %629
        %631 = vrot.lane.b32.xlu0 %v434, 96
        %v632 = vpop.permute.xlu0 %631
        %vm633 = vcmp.lt.s32.totalorder %v460, 96
        %v634 = vsel %vm633, %v630, %v632
        %v635 = vsel %vm633, %v628, %v630
        %v636 = vsel %vm633, %v626, %v628
        %v637 = vsel %vm633, %v624, %v626
        %v638 = vsel %vm633, %v622, %v624
        %v639 = vsel %vm633, %v620, %v622
        %v640 = vsel %vm633, %v618, %v620
        %v641 = vsel %vm633, %v632, %v618
        %v650 = vcombine.low %v640, %v639
        %v651 = vcombine.low %v638, %v637
        %v652 = vcombine.low %v636, %v635
        %v653 = vcombine.low %v634, %v641
        %v655 = vunpack.c.l.s4 1966171168
        %v656 = vunpack.c.0.s8 %v655
        %v657 = vlaneseq
        %v658 = vshrl.u32 %v657, 7
        %v659 = vsub.s32 %v656, %v658
        %v660 = vrot.slane %v650, %v659
        %v662 = vunpack.c.l.s4 1966171168
        %v663 = vunpack.c.0.s8 %v662
        %v664 = vlaneseq
        %v665 = vshrl.u32 %v664, 7
        %v666 = vsub.s32 %v663, %v665
        %v667 = vrot.slane %v651, %v666
        %v669 = vunpack.c.l.s4 1966171168
        %v670 = vunpack.c.0.s8 %v669
        %v671 = vlaneseq
        %v672 = vshrl.u32 %v671, 7
        %v673 = vsub.s32 %v670, %v672
        %v674 = vrot.slane %v652, %v673
        %v676 = vunpack.c.l.s4 1966171168
        %v677 = vunpack.c.0.s8 %v676
        %v678 = vlaneseq
        %v679 = vshrl.u32 %v678, 7
        %v680 = vsub.s32 %v677, %v679
        %v681 = vrot.slane %v653, %v680
        %v682 = vcombine.low %v660, %v667
        %v683 = vcombine.low %v674, %v681
        %v685 = vunpack.c.l.s4 1966171168
        %v686 = vunpack.c.0.s8 %v685
        %v687 = vlaneseq
        %v688 = vshrl.u32 %v687, 7
        %v689 = vsub.s32 %v686, %v688
        %v690 = vrot.slane %v682, %v689
        %v692 = vunpack.c.l.s4 1966171168
        %v693 = vunpack.c.0.s8 %v692
        %v694 = vlaneseq
        %v695 = vshrl.u32 %v694, 7
        %v696 = vsub.s32 %v693, %v695
        %v697 = vrot.slane %v683, %v696
        %v698 = vcombine.low %v690, %v697
        %s700 = scalar_lea.vmem [#allocation2], 3
        %701 = vst [vmem:[%s700] ss:$8 sm:$0xf] %v698
        %702 = vst [vmem:[%s700] ss:$8 sm:$0xf0] %v698
        %703 = vrot.lane.b32.xlu0 %v406, 95
        %v704 = vpop.permute.xlu0 %703
        %705 = vrot.lane.b32.xlu0 %v410, 95
        %v706 = vpop.permute.xlu0 %705
        %707 = vrot.lane.b32.xlu0 %v414, 95
        %v708 = vpop.permute.xlu0 %707
        %709 = vrot.lane.b32.xlu0 %v418, 95
        %v710 = vpop.permute.xlu0 %709
        %711 = vrot.lane.b32.xlu0 %v422, 95
        %v712 = vpop.permute.xlu0 %711
        %713 = vrot.lane.b32.xlu0 %v426, 95
        %v714 = vpop.permute.xlu0 %713
        %715 = vrot.lane.b32.xlu0 %v430, 95
        %v716 = vpop.permute.xlu0 %715
        %717 = vrot.lane.b32.xlu0 %v434, 95
        %v718 = vpop.permute.xlu0 %717
        %vm719 = vcmp.lt.s32.totalorder %v460, 95
        %v720 = vsel %vm719, %v716, %v718
        %v721 = vsel %vm719, %v714, %v716
        %v722 = vsel %vm719, %v712, %v714
        %v723 = vsel %vm719, %v710, %v712
        %v724 = vsel %vm719, %v708, %v710
        %v725 = vsel %vm719, %v706, %v708
        %v726 = vsel %vm719, %v704, %v706
        %v727 = vsel %vm719, %v718, %v704
        %v736 = vcombine.low %v726, %v725
        %v737 = vcombine.low %v724, %v723
        %v738 = vcombine.low %v722, %v721
        %v739 = vcombine.low %v720, %v727
        %v741 = vunpack.c.l.s4 1966171168
        %v742 = vunpack.c.0.s8 %v741
        %v743 = vlaneseq
        %v744 = vshrl.u32 %v743, 7
        %v745 = vsub.s32 %v742, %v744
        %v746 = vrot.slane %v736, %v745
        %v748 = vunpack.c.l.s4 1966171168
        %v749 = vunpack.c.0.s8 %v748
        %v750 = vlaneseq
        %v751 = vshrl.u32 %v750, 7
        %v752 = vsub.s32 %v749, %v751
        %v753 = vrot.slane %v737, %v752
        %v755 = vunpack.c.l.s4 1966171168
        %v756 = vunpack.c.0.s8 %v755
        %v757 = vlaneseq
        %v758 = vshrl.u32 %v757, 7
        %v759 = vsub.s32 %v756, %v758
        %v760 = vrot.slane %v738, %v759
        %v762 = vunpack.c.l.s4 1966171168
        %v763 = vunpack.c.0.s8 %v762
        %v764 = vlaneseq
        %v765 = vshrl.u32 %v764, 7
        %v766 = vsub.s32 %v763, %v765
        %v767 = vrot.slane %v739, %v766
        %v768 = vcombine.low %v746, %v753
        %v769 = vcombine.low %v760, %v767
        %v771 = vunpack.c.l.s4 1966171168
        %v772 = vunpack.c.0.s8 %v771
        %v773 = vlaneseq
        %v774 = vshrl.u32 %v773, 7
        %v775 = vsub.s32 %v772, %v774
        %v776 = vrot.slane %v768, %v775
        %v778 = vunpack.c.l.s4 1966171168
        %v779 = vunpack.c.0.s8 %v778
        %v780 = vlaneseq
        %v781 = vshrl.u32 %v780, 7
        %v782 = vsub.s32 %v779, %v781
        %v783 = vrot.slane %v769, %v782
        %v784 = vcombine.low %v776, %v783
        %s786 = scalar_lea.vmem [#allocation2], 4
        %787 = vst [vmem:[%s786] ss:$8 sm:$0xf] %v784
        %788 = vst [vmem:[%s786] ss:$8 sm:$0xf0] %v784
        %789 = vrot.lane.b32.xlu0 %v406, 94
        %v790 = vpop.permute.xlu0 %789
        %791 = vrot.lane.b32.xlu0 %v410, 94
        %v792 = vpop.permute.xlu0 %791
        %793 = vrot.lane.b32.xlu0 %v414, 94
        %v794 = vpop.permute.xlu0 %793
        %795 = vrot.lane.b32.xlu0 %v418, 94
        %v796 = vpop.permute.xlu0 %795
        %797 = vrot.lane.b32.xlu0 %v422, 94
        %v798 = vpop.permute.xlu0 %797
        %799 = vrot.lane.b32.xlu0 %v426, 94
        %v800 = vpop.permute.xlu0 %799
        %801 = vrot.lane.b32.xlu0 %v430, 94
        %v802 = vpop.permute.xlu0 %801
        %803 = vrot.lane.b32.xlu0 %v434, 94
        %v804 = vpop.permute.xlu0 %803
        %vm805 = vcmp.lt.s32.totalorder %v460, 94
        %v806 = vsel %vm805, %v802, %v804
        %v807 = vsel %vm805, %v800, %v802
        %v808 = vsel %vm805, %v798, %v800
        %v809 = vsel %vm805, %v796, %v798
        %v810 = vsel %vm805, %v794, %v796
        %v811 = vsel %vm805, %v792, %v794
        %v812 = vsel %vm805, %v790, %v792
        %v813 = vsel %vm805, %v804, %v790
        %v822 = vcombine.low %v812, %v811
        %v823 = vcombine.low %v810, %v809
        %v824 = vcombine.low %v808, %v807
        %v825 = vcombine.low %v806, %v813
        %v827 = vunpack.c.l.s4 1966171168
        %v828 = vunpack.c.0.s8 %v827
        %v829 = vlaneseq
        %v830 = vshrl.u32 %v829, 7
        %v831 = vsub.s32 %v828, %v830
        %v832 = vrot.slane %v822, %v831
        %v834 = vunpack.c.l.s4 1966171168
        %v835 = vunpack.c.0.s8 %v834
        %v836 = vlaneseq
        %v837 = vshrl.u32 %v836, 7
        %v838 = vsub.s32 %v835, %v837
        %v839 = vrot.slane %v823, %v838
        %v841 = vunpack.c.l.s4 1966171168
        %v842 = vunpack.c.0.s8 %v841
        %v843 = vlaneseq
        %v844 = vshrl.u32 %v843, 7
        %v845 = vsub.s32 %v842, %v844
        %v846 = vrot.slane %v824, %v845
        %v848 = vunpack.c.l.s4 1966171168
        %v849 = vunpack.c.0.s8 %v848
        %v850 = vlaneseq
        %v851 = vshrl.u32 %v850, 7
        %v852 = vsub.s32 %v849, %v851
        %v853 = vrot.slane %v825, %v852
        %v854 = vcombine.low %v832, %v839
        %v855 = vcombine.low %v846, %v853
        %v857 = vunpack.c.l.s4 1966171168
        %v858 = vunpack.c.0.s8 %v857
        %v859 = vlaneseq
        %v860 = vshrl.u32 %v859, 7
        %v861 = vsub.s32 %v858, %v860
        %v862 = vrot.slane %v854, %v861
        %v864 = vunpack.c.l.s4 1966171168
        %v865 = vunpack.c.0.s8 %v864
        %v866 = vlaneseq
        %v867 = vshrl.u32 %v866, 7
        %v868 = vsub.s32 %v865, %v867
        %v869 = vrot.slane %v855, %v868
        %v870 = vcombine.low %v862, %v869
        %s872 = scalar_lea.vmem [#allocation2], 5
        %873 = vst [vmem:[%s872] ss:$8 sm:$0xf] %v870
        %874 = vst [vmem:[%s872] ss:$8 sm:$0xf0] %v870
        %875 = vrot.lane.b32.xlu0 %v406, 64
        %v876 = vpop.permute.xlu0 %875
        %877 = vrot.lane.b32.xlu0 %v410, 64
        %v878 = vpop.permute.xlu0 %877
        %879 = vrot.lane.b32.xlu0 %v414, 64
        %v880 = vpop.permute.xlu0 %879
        %881 = vrot.lane.b32.xlu0 %v418, 64
        %v882 = vpop.permute.xlu0 %881
        %883 = vrot.lane.b32.xlu0 %v422, 64
        %v884 = vpop.permute.xlu0 %883
        %885 = vrot.lane.b32.xlu0 %v426, 64
        %v886 = vpop.permute.xlu0 %885
        %887 = vrot.lane.b32.xlu0 %v430, 64
        %v888 = vpop.permute.xlu0 %887
        %889 = vrot.lane.b32.xlu0 %v434, 64
        %v890 = vpop.permute.xlu0 %889
        %vm891 = vcmp.lt.s32.totalorder %v460, 64
        %v892 = vsel %vm891, %v888, %v890
        %v893 = vsel %vm891, %v886, %v888
        %v894 = vsel %vm891, %v884, %v886
        %v895 = vsel %vm891, %v882, %v884
        %v896 = vsel %vm891, %v880, %v882
        %v897 = vsel %vm891, %v878, %v880
        %v898 = vsel %vm891, %v876, %v878
        %v899 = vsel %vm891, %v890, %v876
        %v908 = vcombine.low %v898, %v897
        %v909 = vcombine.low %v896, %v895
        %v910 = vcombine.low %v894, %v893
        %v911 = vcombine.low %v892, %v899
        %v913 = vunpack.c.l.s4 1966171168
        %v914 = vunpack.c.0.s8 %v913
        %v915 = vlaneseq
        %v916 = vshrl.u32 %v915, 7
        %v917 = vsub.s32 %v914, %v916
        %v918 = vrot.slane %v908, %v917
        %v920 = vunpack.c.l.s4 1966171168
        %v921 = vunpack.c.0.s8 %v920
        %v922 = vlaneseq
        %v923 = vshrl.u32 %v922, 7
        %v924 = vsub.s32 %v921, %v923
        %v925 = vrot.slane %v909, %v924
        %v927 = vunpack.c.l.s4 1966171168
        %v928 = vunpack.c.0.s8 %v927
        %v929 = vlaneseq
        %v930 = vshrl.u32 %v929, 7
        %v931 = vsub.s32 %v928, %v930
        %v932 = vrot.slane %v910, %v931
        %v934 = vunpack.c.l.s4 1966171168
        %v935 = vunpack.c.0.s8 %v934
        %v936 = vlaneseq
        %v937 = vshrl.u32 %v936, 7
        %v938 = vsub.s32 %v935, %v937
        %v939 = vrot.slane %v911, %v938
        %v940 = vcombine.low %v918, %v925
        %v941 = vcombine.low %v932, %v939
        %v943 = vunpack.c.l.s4 1966171168
        %v944 = vunpack.c.0.s8 %v943
        %v945 = vlaneseq
        %v946 = vshrl.u32 %v945, 7
        %v947 = vsub.s32 %v944, %v946
        %v948 = vrot.slane %v940, %v947
        %v950 = vunpack.c.l.s4 1966171168
        %v951 = vunpack.c.0.s8 %v950
        %v952 = vlaneseq
        %v953 = vshrl.u32 %v952, 7
        %v954 = vsub.s32 %v951, %v953
        %v955 = vrot.slane %v941, %v954
        %v956 = vcombine.low %v948, %v955
        %s958 = scalar_lea.vmem [#allocation2], 6
        %959 = vst [vmem:[%s958] ss:$8 sm:$0xf] %v956
        %960 = vst [vmem:[%s958] ss:$8 sm:$0xf0] %v956
        %961 = vrot.lane.b32.xlu0 %v406, 63
        %v962 = vpop.permute.xlu0 %961
        %963 = vrot.lane.b32.xlu0 %v410, 63
        %v964 = vpop.permute.xlu0 %963
        %965 = vrot.lane.b32.xlu0 %v414, 63
        %v966 = vpop.permute.xlu0 %965
        %967 = vrot.lane.b32.xlu0 %v418, 63
        %v968 = vpop.permute.xlu0 %967
        %969 = vrot.lane.b32.xlu0 %v422, 63
        %v970 = vpop.permute.xlu0 %969
        %971 = vrot.lane.b32.xlu0 %v426, 63
        %v972 = vpop.permute.xlu0 %971
        %973 = vrot.lane.b32.xlu0 %v430, 63
        %v974 = vpop.permute.xlu0 %973
        %975 = vrot.lane.b32.xlu0 %v434, 63
        %v976 = vpop.permute.xlu0 %975
        %vm977 = vcmp.lt.s32.totalorder %v460, 63
        %v978 = vsel %vm977, %v974, %v976
        %v979 = vsel %vm977, %v972, %v974
        %v980 = vsel %vm977, %v970, %v972
        %v981 = vsel %vm977, %v968, %v970
        %v982 = vsel %vm977, %v966, %v968
        %v983 = vsel %vm977, %v964, %v966
        %v984 = vsel %vm977, %v962, %v964
        %v985 = vsel %vm977, %v976, %v962
        %v994 = vcombine.low %v984, %v983
        %v995 = vcombine.low %v982, %v981
        %v996 = vcombine.low %v980, %v979
        %v997 = vcombine.low %v978, %v985
        %v999 = vunpack.c.l.s4 1966171168
        %v1000 = vunpack.c.0.s8 %v999
        %v1001 = vlaneseq
        %v1002 = vshrl.u32 %v1001, 7
        %v1003 = vsub.s32 %v1000, %v1002
        %v1004 = vrot.slane %v994, %v1003
        %v1006 = vunpack.c.l.s4 1966171168
        %v1007 = vunpack.c.0.s8 %v1006
        %v1008 = vlaneseq
        %v1009 = vshrl.u32 %v1008, 7
        %v1010 = vsub.s32 %v1007, %v1009
        %v1011 = vrot.slane %v995, %v1010
        %v1013 = vunpack.c.l.s4 1966171168
        %v1014 = vunpack.c.0.s8 %v1013
        %v1015 = vlaneseq
        %v1016 = vshrl.u32 %v1015, 7
        %v1017 = vsub.s32 %v1014, %v1016
        %v1018 = vrot.slane %v996, %v1017
        %v1020 = vunpack.c.l.s4 1966171168
        %v1021 = vunpack.c.0.s8 %v1020
        %v1022 = vlaneseq
        %v1023 = vshrl.u32 %v1022, 7
        %v1024 = vsub.s32 %v1021, %v1023
        %v1025 = vrot.slane %v997, %v1024
        %v1026 = vcombine.low %v1004, %v1011
        %v1027 = vcombine.low %v1018, %v1025
        %v1029 = vunpack.c.l.s4 1966171168
        %v1030 = vunpack.c.0.s8 %v1029
        %v1031 = vlaneseq
        %v1032 = vshrl.u32 %v1031, 7
        %v1033 = vsub.s32 %v1030, %v1032
        %v1034 = vrot.slane %v1026, %v1033
        %v1036 = vunpack.c.l.s4 1966171168
        %v1037 = vunpack.c.0.s8 %v1036
        %v1038 = vlaneseq
        %v1039 = vshrl.u32 %v1038, 7
        %v1040 = vsub.s32 %v1037, %v1039
        %v1041 = vrot.slane %v1027, %v1040
        %v1042 = vcombine.low %v1034, %v1041
        %s1044 = scalar_lea.vmem [#allocation2], 7
        %1045 = vst [vmem:[%s1044] ss:$8 sm:$0xf] %v1042
        %1046 = vst [vmem:[%s1044] ss:$8 sm:$0xf0] %v1042
        %1047 = vrot.lane.b32.xlu0 %v406, 62
        %v1048 = vpop.permute.xlu0 %1047
        %1049 = vrot.lane.b32.xlu0 %v410, 62
        %v1050 = vpop.permute.xlu0 %1049
        %1051 = vrot.lane.b32.xlu0 %v414, 62
        %v1052 = vpop.permute.xlu0 %1051
        %1053 = vrot.lane.b32.xlu0 %v418, 62
        %v1054 = vpop.permute.xlu0 %1053
        %1055 = vrot.lane.b32.xlu0 %v422, 62
        %v1056 = vpop.permute.xlu0 %1055
        %1057 = vrot.lane.b32.xlu0 %v426, 62
        %v1058 = vpop.permute.xlu0 %1057
        %1059 = vrot.lane.b32.xlu0 %v430, 62
        %v1060 = vpop.permute.xlu0 %1059
        %1061 = vrot.lane.b32.xlu0 %v434, 62
        %v1062 = vpop.permute.xlu0 %1061
        %vm1063 = vcmp.lt.s32.totalorder %v460, 62
        %v1064 = vsel %vm1063, %v1060, %v1062
        %v1065 = vsel %vm1063, %v1058, %v1060
        %v1066 = vsel %vm1063, %v1056, %v1058
        %v1067 = vsel %vm1063, %v1054, %v1056
        %v1068 = vsel %vm1063, %v1052, %v1054
        %v1069 = vsel %vm1063, %v1050, %v1052
        %v1070 = vsel %vm1063, %v1048, %v1050
        %v1071 = vsel %vm1063, %v1062, %v1048
        %v1080 = vcombine.low %v1070, %v1069
        %v1081 = vcombine.low %v1068, %v1067
        %v1082 = vcombine.low %v1066, %v1065
        %v1083 = vcombine.low %v1064, %v1071
        %v1085 = vunpack.c.l.s4 1966171168
        %v1086 = vunpack.c.0.s8 %v1085
        %v1087 = vlaneseq
        %v1088 = vshrl.u32 %v1087, 7
        %v1089 = vsub.s32 %v1086, %v1088
        %v1090 = vrot.slane %v1080, %v1089
        %v1092 = vunpack.c.l.s4 1966171168
        %v1093 = vunpack.c.0.s8 %v1092
        %v1094 = vlaneseq
        %v1095 = vshrl.u32 %v1094, 7
        %v1096 = vsub.s32 %v1093, %v1095
        %v1097 = vrot.slane %v1081, %v1096
        %v1099 = vunpack.c.l.s4 1966171168
        %v1100 = vunpack.c.0.s8 %v1099
        %v1101 = vlaneseq
        %v1102 = vshrl.u32 %v1101, 7
        %v1103 = vsub.s32 %v1100, %v1102
        %v1104 = vrot.slane %v1082, %v1103
        %v1106 = vunpack.c.l.s4 1966171168
        %v1107 = vunpack.c.0.s8 %v1106
        %v1108 = vlaneseq
        %v1109 = vshrl.u32 %v1108, 7
        %v1110 = vsub.s32 %v1107, %v1109
        %v1111 = vrot.slane %v1083, %v1110
        %v1112 = vcombine.low %v1090, %v1097
        %v1113 = vcombine.low %v1104, %v1111
        %v1115 = vunpack.c.l.s4 1966171168
        %v1116 = vunpack.c.0.s8 %v1115
        %v1117 = vlaneseq
        %v1118 = vshrl.u32 %v1117, 7
        %v1119 = vsub.s32 %v1116, %v1118
        %v1120 = vrot.slane %v1112, %v1119
        %v1122 = vunpack.c.l.s4 1966171168
        %v1123 = vunpack.c.0.s8 %v1122
        %v1124 = vlaneseq
        %v1125 = vshrl.u32 %v1124, 7
        %v1126 = vsub.s32 %v1123, %v1125
        %v1127 = vrot.slane %v1113, %v1126
        %v1128 = vcombine.low %v1120, %v1127
        %s1130 = scalar_lea.vmem [#allocation2], 64
        %1131 = vst [vmem:[%s1130] ss:$8 sm:$0xf] %v1128
        %1132 = vst [vmem:[%s1130] ss:$8 sm:$0xf0] %v1128
        %v1133 = vld [vmem:[#allocation4] sm:$0xf]
        %v1134 = vld [vmem:[#allocation2] sm:$0xff]
        %v1135 = vld [vmem:[#allocation2 + $0x8] sm:$0xff]
        %v1136 = vld [vmem:[#allocation2 + $0x10] sm:$0xff]
        %v1137 = vld [vmem:[#allocation2 + $0x18] sm:$0xff]
        %v1138 = vld [vmem:[#allocation2 + $0x20] sm:$0xff]
        %v1139 = vld [vmem:[#allocation2 + $0x28] sm:$0xff]
        %v1140 = vld [vmem:[#allocation2 + $0x30] sm:$0xff]
        %v1141 = vld [vmem:[#allocation2 + $0x38] sm:$0xff]
        %v1142 = vld [vmem:[#allocation2 + $0x40] sm:$0x1]
        %v1143 = vld [vmem:[#allocation2 + $0x48] sm:$0x1]
        %v1144 = vld [vmem:[#allocation2 + $0x50] sm:$0x1]
        %v1145 = vld [vmem:[#allocation2 + $0x58] sm:$0x1]
        %v1146 = vld [vmem:[#allocation2 + $0x60] sm:$0x1]
        %v1147 = vld [vmem:[#allocation2 + $0x68] sm:$0x1]
        %v1148 = vld [vmem:[#allocation2 + $0x70] sm:$0x1]
        %v1149 = vld [vmem:[#allocation2 + $0x78] sm:$0x1]
        %v1150 = vld [vmem:[%s2] sm:$0xf]
        %1152 = vset.pattern.permute.xlu0 0
        %1153 = vperm.xlu0 %1152, %v1150
        %v1154 = vpop.permute.xlu0 %1153
        %vm1156 = vcmask 72704
        %v1158 = vsel %vm1156, %v1133, 0
        %vm1160 = vcmask 1040384
        %v1162 = vsel %vm1160, %v1142, 0
        %v1165 = vsel %vm1160, %v1143, 0
        %v1168 = vsel %vm1160, %v1144, 0
        %v1171 = vsel %vm1160, %v1145, 0
        %v1174 = vsel %vm1160, %v1146, 0
        %v1177 = vsel %vm1160, %v1147, 0
        %v1180 = vsel %vm1160, %v1148, 0
        %v1183 = vsel %vm1160, %v1149, 0
        %1185 = vmatprep.subr.mxu0 %v1135
        %1186 = vmatpush1.msra.mxu0 %v1134
        %1187 = vmatprep.subr.mxu0 %v1165
        %1188 = vmatpush1.msra.mxu0 %v1162
        %1189 = vmatprep.subr.mxu0 0.0
        %1190 = vmatpush1.msra.mxu0 0.0
        %1191 = vmatprep.subr.mxu0 0.0
        %1192 = vmatpush1.msra.mxu0 0.0
        %1193 = vmatprep.subr.mxu0 0.0
        %1194 = vmatpush1.msra.mxu0 0.0
        %1195 = vmatprep.subr.mxu0 0.0
        %1196 = vmatpush1.msra.mxu0 0.0
        %1197 = vmatprep.subr.mxu0 0.0
        %1198 = vmatpush1.msra.mxu0 0.0
        %1199 = vmatprep.subr.mxu0 0.0
        %1200 = vmatpush1.msra.mxu0 0.0
        %1201 = vmatprep.subr.mxu0 0.0
        %1202 = vmatpush1.msra.mxu0 0.0
        %1203 = vmatprep.subr.mxu0 0.0
        %1204 = vmatpush1.msra.mxu0 0.0
        %1205 = vmatprep.subr.mxu0 0.0
        %1206 = vmatpush1.msra.mxu0 0.0
        %1207 = vmatprep.subr.mxu0 0.0
        %1208 = vmatpush1.msra.mxu0 0.0
        %1209 = vmatprep.subr.mxu0 0.0
        %1210 = vmatpush1.msra.mxu0 0.0
        %1211 = vmatprep.subr.mxu0 0.0
        %1212 = vmatpush1.msra.mxu0 0.0
        %1213 = vmatprep.subr.mxu0 0.0
        %1214 = vmatpush1.msra.mxu0 0.0
        %1215 = vmatprep.subr.mxu0 0.0
        %1216 = vmatpush1.msra.mxu0 0.0
        %1217 = vmatprep.subr.mxu0 0.0
        %1218 = vmatpush1.msra.mxu0 0.0
        %1219 = vmatprep.subr.mxu0 0.0
        %1220 = vmatpush1.msra.mxu0 0.0
        %1221 = vmatprep.subr.mxu0 0.0
        %1222 = vmatpush1.msra.mxu0 0.0
        %1223 = vmatprep.subr.mxu0 0.0
        %1224 = vmatpush1.msra.mxu0 0.0
        %1225 = vmatprep.subr.mxu0 0.0
        %1226 = vmatpush1.msra.mxu0 0.0
        %1227 = vmatprep.subr.mxu0 0.0
        %1228 = vmatpush1.msra.mxu0 0.0
        %1229 = vmatprep.subr.mxu0 0.0
        %1230 = vmatpush1.msra.mxu0 0.0
        %1231 = vmatprep.subr.mxu0 0.0
        %1232 = vmatpush1.msra.mxu0 0.0
        %1233 = vmatprep.subr.mxu0 0.0
        %1234 = vmatpush1.msra.mxu0 0.0
        %1235 = vmatprep.subr.mxu0 0.0
        %1236 = vmatpush1.msra.mxu0 0.0
        %1237 = vmatprep.subr.mxu0 0.0
        %1238 = vmatpush1.msra.mxu0 0.0
        %1239 = vmatprep.subr.mxu0 0.0
        %1240 = vmatpush1.msra.mxu0 0.0
        %1241 = vmatprep.subr.mxu0 0.0
        %1242 = vmatpush1.msra.mxu0 0.0
        %1243 = vmatprep.subr.mxu0 0.0
        %1244 = vmatpush1.msra.mxu0 0.0
        %1245 = vmatprep.subr.mxu0 0.0
        %1246 = vmatpush1.msra.mxu0 0.0
        %1247 = vmatprep.subr.mxu0 0.0
        %1248 = vmatpush1.msra.mxu0 0.0
        %1249 = vmatprep.mubr.f32.mxu0 0.0
        %1250 = vmatmul.mubr.f32.gmra.mrb[0].mxu0 %v1158
        %v1251 = vpop.f32.mrb[0].mxu0
        %v1252 = vadd.f32 %v1154, %v1251
        %v1253 = vpop.f32.mrb[0].mxu0
        %v1254 = vadd.f32 %v1154, %v1253
        %1255 = vdwg.mxu0
        %1256 = vmatprep.subr.mxu0 %v1137
        %1257 = vmatpush1.msra.mxu0 %v1136
        %1258 = vmatprep.subr.mxu0 %v1171
        %1259 = vmatpush1.msra.mxu0 %v1168
        %1260 = vmatprep.subr.mxu0 0.0
        %1261 = vmatpush1.msra.mxu0 0.0
        %1262 = vmatprep.subr.mxu0 0.0
        %1263 = vmatpush1.msra.mxu0 0.0
        %1264 = vmatprep.subr.mxu0 0.0
        %1265 = vmatpush1.msra.mxu0 0.0
        %1266 = vmatprep.subr.mxu0 0.0
        %1267 = vmatpush1.msra.mxu0 0.0
        %1268 = vmatprep.subr.mxu0 0.0
        %1269 = vmatpush1.msra.mxu0 0.0
        %1270 = vmatprep.subr.mxu0 0.0
        %1271 = vmatpush1.msra.mxu0 0.0
        %1272 = vmatprep.subr.mxu0 0.0
        %1273 = vmatpush1.msra.mxu0 0.0
        %1274 = vmatprep.subr.mxu0 0.0
        %1275 = vmatpush1.msra.mxu0 0.0
        %1276 = vmatprep.subr.mxu0 0.0
        %1277 = vmatpush1.msra.mxu0 0.0
        %1278 = vmatprep.subr.mxu0 0.0
        %1279 = vmatpush1.msra.mxu0 0.0
        %1280 = vmatprep.subr.mxu0 0.0
        %1281 = vmatpush1.msra.mxu0 0.0
        %1282 = vmatprep.subr.mxu0 0.0
        %1283 = vmatpush1.msra.mxu0 0.0
        %1284 = vmatprep.subr.mxu0 0.0
        %1285 = vmatpush1.msra.mxu0 0.0
        %1286 = vmatprep.subr.mxu0 0.0
        %1287 = vmatpush1.msra.mxu0 0.0
        %1288 = vmatprep.subr.mxu0 0.0
        %1289 = vmatpush1.msra.mxu0 0.0
        %1290 = vmatprep.subr.mxu0 0.0
        %1291 = vmatpush1.msra.mxu0 0.0
        %1292 = vmatprep.subr.mxu0 0.0
        %1293 = vmatpush1.msra.mxu0 0.0
        %1294 = vmatprep.subr.mxu0 0.0
        %1295 = vmatpush1.msra.mxu0 0.0
        %1296 = vmatprep.subr.mxu0 0.0
        %1297 = vmatpush1.msra.mxu0 0.0
        %1298 = vmatprep.subr.mxu0 0.0
        %1299 = vmatpush1.msra.mxu0 0.0
        %1300 = vmatprep.subr.mxu0 0.0
        %1301 = vmatpush1.msra.mxu0 0.0
        %1302 = vmatprep.subr.mxu0 0.0
        %1303 = vmatpush1.msra.mxu0 0.0
        %1304 = vmatprep.subr.mxu0 0.0
        %1305 = vmatpush1.msra.mxu0 0.0
        %1306 = vmatprep.subr.mxu0 0.0
        %1307 = vmatpush1.msra.mxu0 0.0
        %1308 = vmatprep.subr.mxu0 0.0
        %1309 = vmatpush1.msra.mxu0 0.0
        %1310 = vmatprep.subr.mxu0 0.0
        %1311 = vmatpush1.msra.mxu0 0.0
        %1312 = vmatprep.subr.mxu0 0.0
        %1313 = vmatpush1.msra.mxu0 0.0
        %1314 = vmatprep.subr.mxu0 0.0
        %1315 = vmatpush1.msra.mxu0 0.0
        %1316 = vmatprep.subr.mxu0 0.0
        %1317 = vmatpush1.msra.mxu0 0.0
        %1318 = vmatprep.subr.mxu0 0.0
        %1319 = vmatpush1.msra.mxu0 0.0
        %1320 = vmatprep.mubr.f32.mxu0 0.0
        %1321 = vmatmul.mubr.f32.gmra.mrb[0].mxu0 %v1158
        %v1322 = vpop.f32.mrb[0].mxu0
        %v1323 = vadd.f32 %v1154, %v1322
        %v1324 = vpop.f32.mrb[0].mxu0
        %v1325 = vadd.f32 %v1154, %v1324
        %1326 = vdwg.mxu0
        %1327 = vmatprep.subr.mxu0 %v1139
        %1328 = vmatpush1.msra.mxu0 %v1138
        %1329 = vmatprep.subr.mxu0 %v1177
        %1330 = vmatpush1.msra.mxu0 %v1174
        %1331 = vmatprep.subr.mxu0 0.0
        %1332 = vmatpush1.msra.mxu0 0.0
        %1333 = vmatprep.subr.mxu0 0.0
        %1334 = vmatpush1.msra.mxu0 0.0
        %1335 = vmatprep.subr.mxu0 0.0
        %1336 = vmatpush1.msra.mxu0 0.0
        %1337 = vmatprep.subr.mxu0 0.0
        %1338 = vmatpush1.msra.mxu0 0.0
        %1339 = vmatprep.subr.mxu0 0.0
        %1340 = vmatpush1.msra.mxu0 0.0
        %1341 = vmatprep.subr.mxu0 0.0
        %1342 = vmatpush1.msra.mxu0 0.0
        %1343 = vmatprep.subr.mxu0 0.0
        %1344 = vmatpush1.msra.mxu0 0.0
        %1345 = vmatprep.subr.mxu0 0.0
        %1346 = vmatpush1.msra.mxu0 0.0
        %1347 = vmatprep.subr.mxu0 0.0
        %1348 = vmatpush1.msra.mxu0 0.0
        %1349 = vmatprep.subr.mxu0 0.0
        %1350 = vmatpush1.msra.mxu0 0.0
        %1351 = vmatprep.subr.mxu0 0.0
        %1352 = vmatpush1.msra.mxu0 0.0
        %1353 = vmatprep.subr.mxu0 0.0
        %1354 = vmatpush1.msra.mxu0 0.0
        %1355 = vmatprep.subr.mxu0 0.0
        %1356 = vmatpush1.msra.mxu0 0.0
        %1357 = vmatprep.subr.mxu0 0.0
        %1358 = vmatpush1.msra.mxu0 0.0
        %1359 = vmatprep.subr.mxu0 0.0
        %1360 = vmatpush1.msra.mxu0 0.0
        %1361 = vmatprep.subr.mxu0 0.0
        %1362 = vmatpush1.msra.mxu0 0.0
        %1363 = vmatprep.subr.mxu0 0.0
        %1364 = vmatpush1.msra.mxu0 0.0
        %1365 = vmatprep.subr.mxu0 0.0
        %1366 = vmatpush1.msra.mxu0 0.0
        %1367 = vmatprep.subr.mxu0 0.0
        %1368 = vmatpush1.msra.mxu0 0.0
        %1369 = vmatprep.subr.mxu0 0.0
        %1370 = vmatpush1.msra.mxu0 0.0
        %1371 = vmatprep.subr.mxu0 0.0
        %1372 = vmatpush1.msra.mxu0 0.0
        %1373 = vmatprep.subr.mxu0 0.0
        %1374 = vmatpush1.msra.mxu0 0.0
        %1375 = vmatprep.subr.mxu0 0.0
        %1376 = vmatpush1.msra.mxu0 0.0
        %1377 = vmatprep.subr.mxu0 0.0
        %1378 = vmatpush1.msra.mxu0 0.0
        %1379 = vmatprep.subr.mxu0 0.0
        %1380 = vmatpush1.msra.mxu0 0.0
        %1381 = vmatprep.subr.mxu0 0.0
        %1382 = vmatpush1.msra.mxu0 0.0
        %1383 = vmatprep.subr.mxu0 0.0
        %1384 = vmatpush1.msra.mxu0 0.0
        %1385 = vmatprep.subr.mxu0 0.0
        %1386 = vmatpush1.msra.mxu0 0.0
        %1387 = vmatprep.subr.mxu0 0.0
        %1388 = vmatpush1.msra.mxu0 0.0
        %1389 = vmatprep.subr.mxu0 0.0
        %1390 = vmatpush1.msra.mxu0 0.0
        %1391 = vmatprep.mubr.f32.mxu0 0.0
        %1392 = vmatmul.mubr.f32.gmra.mrb[0].mxu0 %v1158
        %v1393 = vpop.f32.mrb[0].mxu0
        %v1394 = vadd.f32 %v1154, %v1393
        %v1395 = vpop.f32.mrb[0].mxu0
        %v1396 = vadd.f32 %v1154, %v1395
        %1397 = vdwg.mxu0
        %1398 = vmatprep.subr.mxu0 %v1141
        %1399 = vmatpush1.msra.mxu0 %v1140
        %1400 = vmatprep.subr.mxu0 %v1183
        %1401 = vmatpush1.msra.mxu0 %v1180
        %1402 = vmatprep.subr.mxu0 0.0
        %1403 = vmatpush1.msra.mxu0 0.0
        %1404 = vmatprep.subr.mxu0 0.0
        %1405 = vmatpush1.msra.mxu0 0.0
        %1406 = vmatprep.subr.mxu0 0.0
        %1407 = vmatpush1.msra.mxu0 0.0
        %1408 = vmatprep.subr.mxu0 0.0
        %1409 = vmatpush1.msra.mxu0 0.0
        %1410 = vmatprep.subr.mxu0 0.0
        %1411 = vmatpush1.msra.mxu0 0.0
        %1412 = vmatprep.subr.mxu0 0.0
        %1413 = vmatpush1.msra.mxu0 0.0
        %1414 = vmatprep.subr.mxu0 0.0
        %1415 = vmatpush1.msra.mxu0 0.0
        %1416 = vmatprep.subr.mxu0 0.0
        %1417 = vmatpush1.msra.mxu0 0.0
        %1418 = vmatprep.subr.mxu0 0.0
        %1419 = vmatpush1.msra.mxu0 0.0
        %1420 = vmatprep.subr.mxu0 0.0
        %1421 = vmatpush1.msra.mxu0 0.0
        %1422 = vmatprep.subr.mxu0 0.0
        %1423 = vmatpush1.msra.mxu0 0.0
        %1424 = vmatprep.subr.mxu0 0.0
        %1425 = vmatpush1.msra.mxu0 0.0
        %1426 = vmatprep.subr.mxu0 0.0
        %1427 = vmatpush1.msra.mxu0 0.0
        %1428 = vmatprep.subr.mxu0 0.0
        %1429 = vmatpush1.msra.mxu0 0.0
        %1430 = vmatprep.subr.mxu0 0.0
        %1431 = vmatpush1.msra.mxu0 0.0
        %1432 = vmatprep.subr.mxu0 0.0
        %1433 = vmatpush1.msra.mxu0 0.0
        %1434 = vmatprep.subr.mxu0 0.0
        %1435 = vmatpush1.msra.mxu0 0.0
        %1436 = vmatprep.subr.mxu0 0.0
        %1437 = vmatpush1.msra.mxu0 0.0
        %1438 = vmatprep.subr.mxu0 0.0
        %1439 = vmatpush1.msra.mxu0 0.0
        %1440 = vmatprep.subr.mxu0 0.0
        %1441 = vmatpush1.msra.mxu0 0.0
        %1442 = vmatprep.subr.mxu0 0.0
        %1443 = vmatpush1.msra.mxu0 0.0
        %1444 = vmatprep.subr.mxu0 0.0
        %1445 = vmatpush1.msra.mxu0 0.0
        %1446 = vmatprep.subr.mxu0 0.0
        %1447 = vmatpush1.msra.mxu0 0.0
        %1448 = vmatprep.subr.mxu0 0.0
        %1449 = vmatpush1.msra.mxu0 0.0
        %1450 = vmatprep.subr.mxu0 0.0
        %1451 = vmatpush1.msra.mxu0 0.0
        %1452 = vmatprep.subr.mxu0 0.0
        %1453 = vmatpush1.msra.mxu0 0.0
        %1454 = vmatprep.subr.mxu0 0.0
        %1455 = vmatpush1.msra.mxu0 0.0
        %1456 = vmatprep.subr.mxu0 0.0
        %1457 = vmatpush1.msra.mxu0 0.0
        %1458 = vmatprep.subr.mxu0 0.0
        %1459 = vmatpush1.msra.mxu0 0.0
        %1460 = vmatprep.subr.mxu0 0.0
        %1461 = vmatpush1.msra.mxu0 0.0
        %1462 = vmatprep.mubr.f32.mxu0 0.0
        %1463 = vmatmul.mubr.f32.gmra.mrb[0].mxu0 %v1158
        %v1464 = vpop.f32.mrb[0].mxu0
        %v1465 = vadd.f32 %v1154, %v1464
        %v1466 = vpop.f32.mrb[0].mxu0
        %v1467 = vadd.f32 %v1154, %v1466
        %1468 = vdwg.mxu0
        %v1469 = vmax.f32 %v1252, 0.0
        %v1470 = vmax.f32 %v1254, 0.0
        %v1471 = vmax.f32 %v1323, 0.0
        %v1472 = vmax.f32 %v1325, 0.0
        %v1473 = vmax.f32 %v1394, 0.0
        %v1474 = vmax.f32 %v1396, 0.0
        %v1475 = vmax.f32 %v1465, 0.0
        %v1476 = vmax.f32 %v1467, 0.0
        %1477 = vrot.lane.b32.xlu0 %v1469, 96
        %v1478 = vpop.permute.xlu0 %1477
        %1479 = vrot.lane.b32.xlu0 %v1470, 96
        %v1480 = vpop.permute.xlu0 %1479
        %1481 = vrot.lane.b32.xlu0 %v1471, 96
        %v1482 = vpop.permute.xlu0 %1481
        %1483 = vrot.lane.b32.xlu0 %v1472, 96
        %v1484 = vpop.permute.xlu0 %1483
        %1485 = vrot.lane.b32.xlu0 %v1473, 96
        %v1486 = vpop.permute.xlu0 %1485
        %1487 = vrot.lane.b32.xlu0 %v1474, 96
        %v1488 = vpop.permute.xlu0 %1487
        %1489 = vrot.lane.b32.xlu0 %v1475, 96
        %v1490 = vpop.permute.xlu0 %1489
        %1491 = vrot.lane.b32.xlu0 %v1476, 96
        %v1492 = vpop.permute.xlu0 %1491
        %v1493 = vsel %vm633, %v1490, %v1492
        %v1494 = vsel %vm633, %v1488, %v1490
        %v1495 = vsel %vm633, %v1486, %v1488
        %v1496 = vsel %vm633, %v1484, %v1486
        %v1497 = vsel %vm633, %v1482, %v1484
        %v1498 = vsel %vm633, %v1480, %v1482
        %v1499 = vsel %vm633, %v1478, %v1480
        %v1500 = vsel %vm633, %v1492, %v1478
        %v1501 = vmax.f32 %v1469, %v1499
        %v1502 = vmax.f32 %v1470, %v1498
        %v1503 = vmax.f32 %v1471, %v1497
        %v1504 = vmax.f32 %v1472, %v1496
        %v1505 = vmax.f32 %v1473, %v1495
        %v1506 = vmax.f32 %v1474, %v1494
        %v1507 = vmax.f32 %v1475, %v1493
        %v1508 = vmax.f32 %v1476, %v1500
        %1509 = vrot.lane.b32.xlu0 %v1501, 127
        %v1510 = vpop.permute.xlu0 %1509
        %1511 = vrot.lane.b32.xlu0 %v1502, 127
        %v1512 = vpop.permute.xlu0 %1511
        %1513 = vrot.lane.b32.xlu0 %v1503, 127
        %v1514 = vpop.permute.xlu0 %1513
        %1515 = vrot.lane.b32.xlu0 %v1504, 127
        %v1516 = vpop.permute.xlu0 %1515
        %1517 = vrot.lane.b32.xlu0 %v1505, 127
        %v1518 = vpop.permute.xlu0 %1517
        %1519 = vrot.lane.b32.xlu0 %v1506, 127
        %v1520 = vpop.permute.xlu0 %1519
        %1521 = vrot.lane.b32.xlu0 %v1507, 127
        %v1522 = vpop.permute.xlu0 %1521
        %1523 = vrot.lane.b32.xlu0 %v1508, 127
        %v1524 = vpop.permute.xlu0 %1523
        %v1525 = vsel %vm461, %v1522, %v1524
        %v1526 = vsel %vm461, %v1520, %v1522
        %v1527 = vsel %vm461, %v1518, %v1520
        %v1528 = vsel %vm461, %v1516, %v1518
        %v1529 = vsel %vm461, %v1514, %v1516
        %v1530 = vsel %vm461, %v1512, %v1514
        %v1531 = vsel %vm461, %v1510, %v1512
        %v1532 = vsel %vm461, %v1524, %v1510
        %v1533 = vmax.f32 %v1501, %v1531
        %v1534 = vmax.f32 %v1502, %v1530
        %v1535 = vmax.f32 %v1503, %v1529
        %v1536 = vmax.f32 %v1504, %v1528
        %v1537 = vmax.f32 %v1505, %v1527
        %v1538 = vmax.f32 %v1506, %v1526
        %v1539 = vmax.f32 %v1507, %v1525
        %v1540 = vmax.f32 %v1508, %v1532
        %1541 = vst [vmem:[#allocation2] sm:$0xf] %v1533
        %1542 = vst [vmem:[#allocation2 + $0x8] sm:$0xf] %v1534
        %1543 = vst [vmem:[#allocation2 + $0x10] sm:$0xf] %v1535
        %1544 = vst [vmem:[#allocation2 + $0x18] sm:$0xf] %v1536
        %1545 = vst [vmem:[#allocation2 + $0x20] sm:$0xf] %v1537
        %1546 = vst [vmem:[#allocation2 + $0x28] sm:$0xf] %v1538
        %1547 = vst [vmem:[#allocation2 + $0x30] sm:$0xf] %v1539
        %1548 = vst [vmem:[#allocation2 + $0x38] sm:$0xf] %v1540
        %1549 = vrot.lane.b32.xlu0 %v1533, 126
        %v1550 = vpop.permute.xlu0 %1549
        %1551 = vrot.lane.b32.xlu0 %v1534, 126
        %v1552 = vpop.permute.xlu0 %1551
        %1553 = vrot.lane.b32.xlu0 %v1535, 126
        %v1554 = vpop.permute.xlu0 %1553
        %1555 = vrot.lane.b32.xlu0 %v1536, 126
        %v1556 = vpop.permute.xlu0 %1555
        %1557 = vrot.lane.b32.xlu0 %v1537, 126
        %v1558 = vpop.permute.xlu0 %1557
        %1559 = vrot.lane.b32.xlu0 %v1538, 126
        %v1560 = vpop.permute.xlu0 %1559
        %1561 = vrot.lane.b32.xlu0 %v1539, 126
        %v1562 = vpop.permute.xlu0 %1561
        %1563 = vrot.lane.b32.xlu0 %v1540, 126
        %v1564 = vpop.permute.xlu0 %1563
        %v1565 = vsel %vm547, %v1562, %v1564
        %v1566 = vsel %vm547, %v1560, %v1562
        %v1567 = vsel %vm547, %v1558, %v1560
        %v1568 = vsel %vm547, %v1556, %v1558
        %v1569 = vsel %vm547, %v1554, %v1556
        %v1570 = vsel %vm547, %v1552, %v1554
        %v1571 = vsel %vm547, %v1550, %v1552
        %v1572 = vsel %vm547, %v1564, %v1550
        %v1581 = vrot.slane %v1571, 4
        %v1582 = vrot.slane %v1570, 4
        %v1583 = vrot.slane %v1569, 4
        %v1584 = vrot.slane %v1568, 4
        %v1585 = vrot.slane %v1567, 4
        %v1586 = vrot.slane %v1566, 4
        %v1587 = vrot.slane %v1565, 4
        %v1588 = vrot.slane %v1572, 4
        %1597 = vst [vmem:[#allocation2] sm:$0xf0] %v1581
        %1598 = vst [vmem:[#allocation2 + $0x8] sm:$0xf0] %v1582
        %1599 = vst [vmem:[#allocation2 + $0x10] sm:$0xf0] %v1583
        %1600 = vst [vmem:[#allocation2 + $0x18] sm:$0xf0] %v1584
        %1601 = vst [vmem:[#allocation2 + $0x20] sm:$0xf0] %v1585
        %1602 = vst [vmem:[#allocation2 + $0x28] sm:$0xf0] %v1586
        %1603 = vst [vmem:[#allocation2 + $0x30] sm:$0xf0] %v1587
        %1604 = vst [vmem:[#allocation2 + $0x38] sm:$0xf0] %v1588
        %1605 = vrot.lane.b32.xlu0 %v1533, 124
        %v1606 = vpop.permute.xlu0 %1605
        %1607 = vrot.lane.b32.xlu0 %v1534, 124
        %v1608 = vpop.permute.xlu0 %1607
        %1609 = vrot.lane.b32.xlu0 %v1535, 124
        %v1610 = vpop.permute.xlu0 %1609
        %1611 = vrot.lane.b32.xlu0 %v1536, 124
        %v1612 = vpop.permute.xlu0 %1611
        %1613 = vrot.lane.b32.xlu0 %v1537, 124
        %v1614 = vpop.permute.xlu0 %1613
        %1615 = vrot.lane.b32.xlu0 %v1538, 124
        %v1616 = vpop.permute.xlu0 %1615
        %1617 = vrot.lane.b32.xlu0 %v1539, 124
        %v1618 = vpop.permute.xlu0 %1617
        %1619 = vrot.lane.b32.xlu0 %v1540, 124
        %v1620 = vpop.permute.xlu0 %1619
        %vm1621 = vcmp.lt.s32.totalorder %v460, 124
        %v1622 = vsel %vm1621, %v1618, %v1620
        %v1623 = vsel %vm1621, %v1616, %v1618
        %v1624 = vsel %vm1621, %v1614, %v1616
        %v1625 = vsel %vm1621, %v1612, %v1614
        %v1626 = vsel %vm1621, %v1610, %v1612
        %v1627 = vsel %vm1621, %v1608, %v1610
        %v1628 = vsel %vm1621, %v1606, %v1608
        %v1629 = vsel %vm1621, %v1620, %v1606
        %1630 = vst [vmem:[#allocation2 + $0x40] sm:$0xf] %v1628
        %1631 = vst [vmem:[#allocation2 + $0x48] sm:$0xf] %v1627
        %1632 = vst [vmem:[#allocation2 + $0x50] sm:$0xf] %v1626
        %1633 = vst [vmem:[#allocation2 + $0x58] sm:$0xf] %v1625
        %1634 = vst [vmem:[#allocation2 + $0x60] sm:$0xf] %v1624
        %1635 = vst [vmem:[#allocation2 + $0x68] sm:$0xf] %v1623
        %1636 = vst [vmem:[#allocation2 + $0x70] sm:$0xf] %v1622
        %1637 = vst [vmem:[#allocation2 + $0x78] sm:$0xf] %v1629
        %1638 = vrot.lane.b32.xlu0 %v1533, 64
        %v1639 = vpop.permute.xlu0 %1638
        %1640 = vrot.lane.b32.xlu0 %v1534, 64
        %v1641 = vpop.permute.xlu0 %1640
        %1642 = vrot.lane.b32.xlu0 %v1535, 64
        %v1643 = vpop.permute.xlu0 %1642
        %1644 = vrot.lane.b32.xlu0 %v1536, 64
        %v1645 = vpop.permute.xlu0 %1644
        %1646 = vrot.lane.b32.xlu0 %v1537, 64
        %v1647 = vpop.permute.xlu0 %1646
        %1648 = vrot.lane.b32.xlu0 %v1538, 64
        %v1649 = vpop.permute.xlu0 %1648
        %1650 = vrot.lane.b32.xlu0 %v1539, 64
        %v1651 = vpop.permute.xlu0 %1650
        %1652 = vrot.lane.b32.xlu0 %v1540, 64
        %v1653 = vpop.permute.xlu0 %1652
        %v1654 = vsel %vm891, %v1651, %v1653
        %v1655 = vsel %vm891, %v1649, %v1651
        %v1656 = vsel %vm891, %v1647, %v1649
        %v1657 = vsel %vm891, %v1645, %v1647
        %v1658 = vsel %vm891, %v1643, %v1645
        %v1659 = vsel %vm891, %v1641, %v1643
        %v1660 = vsel %vm891, %v1639, %v1641
        %v1661 = vsel %vm891, %v1653, %v1639
        %v1670 = vrot.slane %v1660, 4
        %v1671 = vrot.slane %v1659, 4
        %v1672 = vrot.slane %v1658, 4
        %v1673 = vrot.slane %v1657, 4
        %v1674 = vrot.slane %v1656, 4
        %v1675 = vrot.slane %v1655, 4
        %v1676 = vrot.slane %v1654, 4
        %v1677 = vrot.slane %v1661, 4
        %1686 = vst [vmem:[#allocation2 + $0x40] sm:$0xf0] %v1670
        %1687 = vst [vmem:[#allocation2 + $0x48] sm:$0xf0] %v1671
        %1688 = vst [vmem:[#allocation2 + $0x50] sm:$0xf0] %v1672
        %1689 = vst [vmem:[#allocation2 + $0x58] sm:$0xf0] %v1673
        %1690 = vst [vmem:[#allocation2 + $0x60] sm:$0xf0] %v1674
        %1691 = vst [vmem:[#allocation2 + $0x68] sm:$0xf0] %v1675
        %1692 = vst [vmem:[#allocation2 + $0x70] sm:$0xf0] %v1676
        %1693 = vst [vmem:[#allocation2 + $0x78] sm:$0xf0] %v1677
        %1694 = vrot.lane.b32.xlu0 %v1533, 62
        %v1695 = vpop.permute.xlu0 %1694
        %1696 = vrot.lane.b32.xlu0 %v1534, 62
        %v1697 = vpop.permute.xlu0 %1696
        %1698 = vrot.lane.b32.xlu0 %v1535, 62
        %v1699 = vpop.permute.xlu0 %1698
        %1700 = vrot.lane.b32.xlu0 %v1536, 62
        %v1701 = vpop.permute.xlu0 %1700
        %1702 = vrot.lane.b32.xlu0 %v1537, 62
        %v1703 = vpop.permute.xlu0 %1702
        %1704 = vrot.lane.b32.xlu0 %v1538, 62
        %v1705 = vpop.permute.xlu0 %1704
        %1706 = vrot.lane.b32.xlu0 %v1539, 62
        %v1707 = vpop.permute.xlu0 %1706
        %1708 = vrot.lane.b32.xlu0 %v1540, 62
        %v1709 = vpop.permute.xlu0 %1708
        %v1710 = vsel %vm1063, %v1707, %v1709
        %v1711 = vsel %vm1063, %v1705, %v1707
        %v1712 = vsel %vm1063, %v1703, %v1705
        %v1713 = vsel %vm1063, %v1701, %v1703
        %v1714 = vsel %vm1063, %v1699, %v1701
        %v1715 = vsel %vm1063, %v1697, %v1699
        %v1716 = vsel %vm1063, %v1695, %v1697
        %v1717 = vsel %vm1063, %v1709, %v1695
        %1718 = vst [vmem:[#allocation2 + $0x80] sm:$0xf] %v1716
        %1719 = vst [vmem:[#allocation2 + $0x88] sm:$0xf] %v1715
        %1720 = vst [vmem:[#allocation2 + $0x90] sm:$0xf] %v1714
        %1721 = vst [vmem:[#allocation2 + $0x98] sm:$0xf] %v1713
        %1722 = vst [vmem:[#allocation2 + $0xa0] sm:$0xf] %v1712
        %1723 = vst [vmem:[#allocation2 + $0xa8] sm:$0xf] %v1711
        %1724 = vst [vmem:[#allocation2 + $0xb0] sm:$0xf] %v1710
        %1725 = vst [vmem:[#allocation2 + $0xb8] sm:$0xf] %v1717
        %1726 = vrot.lane.b32.xlu0 %v1533, 60
        %v1727 = vpop.permute.xlu0 %1726
        %1728 = vrot.lane.b32.xlu0 %v1534, 60
        %v1729 = vpop.permute.xlu0 %1728
        %1730 = vrot.lane.b32.xlu0 %v1535, 60
        %v1731 = vpop.permute.xlu0 %1730
        %1732 = vrot.lane.b32.xlu0 %v1536, 60
        %v1733 = vpop.permute.xlu0 %1732
        %1734 = vrot.lane.b32.xlu0 %v1537, 60
        %v1735 = vpop.permute.xlu0 %1734
        %1736 = vrot.lane.b32.xlu0 %v1538, 60
        %v1737 = vpop.permute.xlu0 %1736
        %1738 = vrot.lane.b32.xlu0 %v1539, 60
        %v1739 = vpop.permute.xlu0 %1738
        %1740 = vrot.lane.b32.xlu0 %v1540, 60
        %v1741 = vpop.permute.xlu0 %1740
        %vm1742 = vcmp.lt.s32.totalorder %v460, 60
        %v1743 = vsel %vm1742, %v1739, %v1741
        %v1744 = vsel %vm1742, %v1737, %v1739
        %v1745 = vsel %vm1742, %v1735, %v1737
        %v1746 = vsel %vm1742, %v1733, %v1735
        %v1747 = vsel %vm1742, %v1731, %v1733
        %v1748 = vsel %vm1742, %v1729, %v1731
        %v1749 = vsel %vm1742, %v1727, %v1729
        %v1750 = vsel %vm1742, %v1741, %v1727
        %v1759 = vrot.slane %v1749, 4
        %v1760 = vrot.slane %v1748, 4
        %v1761 = vrot.slane %v1747, 4
        %v1762 = vrot.slane %v1746, 4
        %v1763 = vrot.slane %v1745, 4
        %v1764 = vrot.slane %v1744, 4
        %v1765 = vrot.slane %v1743, 4
        %v1766 = vrot.slane %v1750, 4
        %1775 = vst [vmem:[#allocation2 + $0x80] sm:$0xf0] %v1759
        %1776 = vst [vmem:[#allocation2 + $0x88] sm:$0xf0] %v1760
        %1777 = vst [vmem:[#allocation2 + $0x90] sm:$0xf0] %v1761
        %1778 = vst [vmem:[#allocation2 + $0x98] sm:$0xf0] %v1762
        %1779 = vst [vmem:[#allocation2 + $0xa0] sm:$0xf0] %v1763
        %1780 = vst [vmem:[#allocation2 + $0xa8] sm:$0xf0] %v1764
        %1781 = vst [vmem:[#allocation2 + $0xb0] sm:$0xf0] %v1765
        %1782 = vst [vmem:[#allocation2 + $0xb8] sm:$0xf0] %v1766
        %1783 = vst [vmem:[#allocation2 + $0xc0] sm:$0xf] %v1534
        %1784 = vst [vmem:[#allocation2 + $0xc8] sm:$0xf] %v1535
        %1785 = vst [vmem:[#allocation2 + $0xd0] sm:$0xf] %v1536
        %1786 = vst [vmem:[#allocation2 + $0xd8] sm:$0xf] %v1537
        %1787 = vst [vmem:[#allocation2 + $0xe0] sm:$0xf] %v1538
        %1788 = vst [vmem:[#allocation2 + $0xe8] sm:$0xf] %v1539
        %1789 = vst [vmem:[#allocation2 + $0xf0] sm:$0xf] %v1540
        %1790 = vst [vmem:[#allocation2 + $0xf8] sm:$0xf] %v1533
        %1791 = vst [vmem:[#allocation2 + $0xc0] sm:$0xf0] %v1582
        %1792 = vst [vmem:[#allocation2 + $0xc8] sm:$0xf0] %v1583
        %1793 = vst [vmem:[#allocation2 + $0xd0] sm:$0xf0] %v1584
        %1794 = vst [vmem:[#allocation2 + $0xd8] sm:$0xf0] %v1585
        %1795 = vst [vmem:[#allocation2 + $0xe0] sm:$0xf0] %v1586
        %1796 = vst [vmem:[#allocation2 + $0xe8] sm:$0xf0] %v1587
        %1797 = vst [vmem:[#allocation2 + $0xf0] sm:$0xf0] %v1588
        %1798 = vst [vmem:[#allocation2 + $0xf8] sm:$0xf0] %v1581
        %1799 = vst [vmem:[#allocation2 + $0x100] sm:$0xf] %v1627
        %1800 = vst [vmem:[#allocation2 + $0x108] sm:$0xf] %v1626
        %1801 = vst [vmem:[#allocation2 + $0x110] sm:$0xf] %v1625
        %1802 = vst [vmem:[#allocation2 + $0x118] sm:$0xf] %v1624
        %1803 = vst [vmem:[#allocation2 + $0x120] sm:$0xf] %v1623
        %1804 = vst [vmem:[#allocation2 + $0x128] sm:$0xf] %v1622
        %1805 = vst [vmem:[#allocation2 + $0x130] sm:$0xf] %v1629
        %1806 = vst [vmem:[#allocation2 + $0x138] sm:$0xf] %v1628
        %v1807 = vld [vmem:[%s3] sm:$0xff]
        %v1808 = vld [vmem:[#allocation2] sm:$0xff]
        %v1809 = vld [vmem:[#allocation2 + $0x8] sm:$0xff]
        %v1810 = vld [vmem:[#allocation2 + $0x10] sm:$0xff]
        %v1811 = vld [vmem:[#allocation2 + $0x18] sm:$0xff]
        %v1812 = vld [vmem:[#allocation2 + $0x20] sm:$0xff]
        %v1813 = vld [vmem:[#allocation2 + $0x28] sm:$0xff]
        %v1814 = vld [vmem:[#allocation2 + $0x30] sm:$0xff]
        %v1815 = vld [vmem:[#allocation2 + $0x38] sm:$0xff]
        %v1816 = vld [vmem:[#allocation2 + $0x40] sm:$0xff]
        %v1817 = vld [vmem:[#allocation2 + $0x48] sm:$0xff]
        %v1818 = vld [vmem:[#allocation2 + $0x50] sm:$0xff]
        %v1819 = vld [vmem:[#allocation2 + $0x58] sm:$0xff]
        %v1820 = vld [vmem:[#allocation2 + $0x60] sm:$0xff]
        %v1821 = vld [vmem:[#allocation2 + $0x68] sm:$0xff]
        %v1822 = vld [vmem:[#allocation2 + $0x70] sm:$0xff]
        %v1823 = vld [vmem:[#allocation2 + $0x78] sm:$0xff]
        %v1824 = vld [vmem:[#allocation2 + $0x80] sm:$0xff]
        %v1825 = vld [vmem:[#allocation2 + $0x88] sm:$0xff]
        %v1826 = vld [vmem:[#allocation2 + $0x90] sm:$0xff]
        %v1827 = vld [vmem:[#allocation2 + $0x98] sm:$0xff]
        %v1828 = vld [vmem:[#allocation2 + $0xa0] sm:$0xff]
        %v1829 = vld [vmem:[#allocation2 + $0xa8] sm:$0xff]
        %v1830 = vld [vmem:[#allocation2 + $0xb0] sm:$0xff]
        %v1831 = vld [vmem:[#allocation2 + $0xb8] sm:$0xff]
        %v1832 = vld [vmem:[#allocation2 + $0xc0] sm:$0xff]
        %v1833 = vld [vmem:[#allocation2 + $0xc8] sm:$0xff]
        %v1834 = vld [vmem:[#allocation2 + $0xd0] sm:$0xff]
        %v1835 = vld [vmem:[#allocation2 + $0xd8] sm:$0xff]
        %v1836 = vld [vmem:[#allocation2 + $0xe0] sm:$0xff]
        %v1837 = vld [vmem:[#allocation2 + $0xe8] sm:$0xff]
        %v1838 = vld [vmem:[#allocation2 + $0xf0] sm:$0xff]
        %v1839 = vld [vmem:[#allocation2 + $0xf8] sm:$0xff]
        %v1840 = vld [vmem:[#allocation2 + $0x100] sm:$0xf]
        %v1841 = vld [vmem:[#allocation2 + $0x108] sm:$0xf]
        %v1842 = vld [vmem:[#allocation2 + $0x110] sm:$0xf]
        %v1843 = vld [vmem:[#allocation2 + $0x118] sm:$0xf]
        %v1844 = vld [vmem:[#allocation2 + $0x120] sm:$0xf]
        %v1845 = vld [vmem:[#allocation2 + $0x128] sm:$0xf]
        %v1846 = vld [vmem:[#allocation2 + $0x130] sm:$0xf]
        %v1847 = vld [vmem:[#allocation2 + $0x138] sm:$0xf]
        %v1848 = vld [vmem:[%s4] sm:$0xff]
        %1850 = vset.pattern.permute.xlu0 0
        %1851 = vperm.xlu0 %1850, %v1848
        %v1852 = vpop.permute.xlu0 %1851
        %vm1854 = vcmask 293888
        %v1856 = vsel %vm1854, %v1807, 0
        %vm1858 = vcmask 1043456
        %v1860 = vsel %vm1858, %v1840, 0
        %v1863 = vsel %vm1858, %v1841, 0
        %v1866 = vsel %vm1858, %v1842, 0
        %v1869 = vsel %vm1858, %v1843, 0
        %v1872 = vsel %vm1858, %v1844, 0
        %v1875 = vsel %vm1858, %v1845, 0
        %v1878 = vsel %vm1858, %v1846, 0
        %v1881 = vsel %vm1858, %v1847, 0
        %1883 = vmatprep.subr.mxu0 %v1809
        %1884 = vmatpush1.msra.mxu0 %v1808
        %1885 = vmatprep.subr.mxu0 %v1817
        %1886 = vmatpush1.msra.mxu0 %v1816
        %1887 = vmatprep.subr.mxu0 %v1825
        %1888 = vmatpush1.msra.mxu0 %v1824
        %1889 = vmatprep.subr.mxu0 %v1833
        %1890 = vmatpush1.msra.mxu0 %v1832
        %1891 = vmatprep.subr.mxu0 %v1863
        %1892 = vmatpush1.msra.mxu0 %v1860
        %1893 = vmatprep.subr.mxu0 0.0
        %1894 = vmatpush1.msra.mxu0 0.0
        %1895 = vmatprep.subr.mxu0 0.0
        %1896 = vmatpush1.msra.mxu0 0.0
        %1897 = vmatprep.subr.mxu0 0.0
        %1898 = vmatpush1.msra.mxu0 0.0
        %1899 = vmatprep.subr.mxu0 0.0
        %1900 = vmatpush1.msra.mxu0 0.0
        %1901 = vmatprep.subr.mxu0 0.0
        %1902 = vmatpush1.msra.mxu0 0.0
        %1903 = vmatprep.subr.mxu0 0.0
        %1904 = vmatpush1.msra.mxu0 0.0
        %1905 = vmatprep.subr.mxu0 0.0
        %1906 = vmatpush1.msra.mxu0 0.0
        %1907 = vmatprep.subr.mxu0 0.0
        %1908 = vmatpush1.msra.mxu0 0.0
        %1909 = vmatprep.subr.mxu0 0.0
        %1910 = vmatpush1.msra.mxu0 0.0
        %1911 = vmatprep.subr.mxu0 0.0
        %1912 = vmatpush1.msra.mxu0 0.0
        %1913 = vmatprep.subr.mxu0 0.0
        %1914 = vmatpush1.msra.mxu0 0.0
        %1915 = vmatprep.subr.mxu0 0.0
        %1916 = vmatpush1.msra.mxu0 0.0
        %1917 = vmatprep.subr.mxu0 0.0
        %1918 = vmatpush1.msra.mxu0 0.0
        %1919 = vmatprep.subr.mxu0 0.0
        %1920 = vmatpush1.msra.mxu0 0.0
        %1921 = vmatprep.subr.mxu0 0.0
        %1922 = vmatpush1.msra.mxu0 0.0
        %1923 = vmatprep.subr.mxu0 0.0
        %1924 = vmatpush1.msra.mxu0 0.0
        %1925 = vmatprep.subr.mxu0 0.0
        %1926 = vmatpush1.msra.mxu0 0.0
        %1927 = vmatprep.subr.mxu0 0.0
        %1928 = vmatpush1.msra.mxu0 0.0
        %1929 = vmatprep.subr.mxu0 0.0
        %1930 = vmatpush1.msra.mxu0 0.0
        %1931 = vmatprep.subr.mxu0 0.0
        %1932 = vmatpush1.msra.mxu0 0.0
        %1933 = vmatprep.subr.mxu0 0.0
        %1934 = vmatpush1.msra.mxu0 0.0
        %1935 = vmatprep.subr.mxu0 0.0
        %1936 = vmatpush1.msra.mxu0 0.0
        %1937 = vmatprep.subr.mxu0 0.0
        %1938 = vmatpush1.msra.mxu0 0.0
        %1939 = vmatprep.subr.mxu0 0.0
        %1940 = vmatpush1.msra.mxu0 0.0
        %1941 = vmatprep.subr.mxu0 0.0
        %1942 = vmatpush1.msra.mxu0 0.0
        %1943 = vmatprep.subr.mxu0 0.0
        %1944 = vmatpush1.msra.mxu0 0.0
        %1945 = vmatprep.subr.mxu0 0.0
        %1946 = vmatpush1.msra.mxu0 0.0
        %1947 = vmatprep.mubr.f32.mxu0 0.0
        %1948 = vmatmul.mubr.f32.gmra.mrb[0].mxu0 %v1856
        %v1949 = vpop.f32.mrb[0].mxu0
        %v1950 = vadd.f32 %v1852, %v1949
        %v1951 = vpop.f32.mrb[0].mxu0
        %v1952 = vadd.f32 %v1852, %v1951
        %1953 = vdwg.mxu0
        %1954 = vmatprep.subr.mxu0 %v1811
        %1955 = vmatpush1.msra.mxu0 %v1810
        %1956 = vmatprep.subr.mxu0 %v1819
        %1957 = vmatpush1.msra.mxu0 %v1818
        %1958 = vmatprep.subr.mxu0 %v1827
        %1959 = vmatpush1.msra.mxu0 %v1826
        %1960 = vmatprep.subr.mxu0 %v1835
        %1961 = vmatpush1.msra.mxu0 %v1834
        %1962 = vmatprep.subr.mxu0 %v1869
        %1963 = vmatpush1.msra.mxu0 %v1866
        %1964 = vmatprep.subr.mxu0 0.0
        %1965 = vmatpush1.msra.mxu0 0.0
        %1966 = vmatprep.subr.mxu0 0.0
        %1967 = vmatpush1.msra.mxu0 0.0
        %1968 = vmatprep.subr.mxu0 0.0
        %1969 = vmatpush1.msra.mxu0 0.0
        %1970 = vmatprep.subr.mxu0 0.0
        %1971 = vmatpush1.msra.mxu0 0.0
        %1972 = vmatprep.subr.mxu0 0.0
        %1973 = vmatpush1.msra.mxu0 0.0
        %1974 = vmatprep.subr.mxu0 0.0
        %1975 = vmatpush1.msra.mxu0 0.0
        %1976 = vmatprep.subr.mxu0 0.0
        %1977 = vmatpush1.msra.mxu0 0.0
        %1978 = vmatprep.subr.mxu0 0.0
        %1979 = vmatpush1.msra.mxu0 0.0
        %1980 = vmatprep.subr.mxu0 0.0
        %1981 = vmatpush1.msra.mxu0 0.0
        %1982 = vmatprep.subr.mxu0 0.0
        %1983 = vmatpush1.msra.mxu0 0.0
        %1984 = vmatprep.subr.mxu0 0.0
        %1985 = vmatpush1.msra.mxu0 0.0
        %1986 = vmatprep.subr.mxu0 0.0
        %1987 = vmatpush1.msra.mxu0 0.0
        %1988 = vmatprep.subr.mxu0 0.0
        %1989 = vmatpush1.msra.mxu0 0.0
        %1990 = vmatprep.subr.mxu0 0.0
        %1991 = vmatpush1.msra.mxu0 0.0
        %1992 = vmatprep.subr.mxu0 0.0
        %1993 = vmatpush1.msra.mxu0 0.0
        %1994 = vmatprep.subr.mxu0 0.0
        %1995 = vmatpush1.msra.mxu0 0.0
        %1996 = vmatprep.subr.mxu0 0.0
        %1997 = vmatpush1.msra.mxu0 0.0
        %1998 = vmatprep.subr.mxu0 0.0
        %1999 = vmatpush1.msra.mxu0 0.0
        %2000 = vmatprep.subr.mxu0 0.0
        %2001 = vmatpush1.msra.mxu0 0.0
        %2002 = vmatprep.subr.mxu0 0.0
        %2003 = vmatpush1.msra.mxu0 0.0
        %2004 = vmatprep.subr.mxu0 0.0
        %2005 = vmatpush1.msra.mxu0 0.0
        %2006 = vmatprep.subr.mxu0 0.0
        %2007 = vmatpush1.msra.mxu0 0.0
        %2008 = vmatprep.subr.mxu0 0.0
        %2009 = vmatpush1.msra.mxu0 0.0
        %2010 = vmatprep.subr.mxu0 0.0
        %2011 = vmatpush1.msra.mxu0 0.0
        %2012 = vmatprep.subr.mxu0 0.0
        %2013 = vmatpush1.msra.mxu0 0.0
        %2014 = vmatprep.subr.mxu0 0.0
        %2015 = vmatpush1.msra.mxu0 0.0
        %2016 = vmatprep.subr.mxu0 0.0
        %2017 = vmatpush1.msra.mxu0 0.0
        %2018 = vmatprep.mubr.f32.mxu0 0.0
        %2019 = vmatmul.mubr.f32.gmra.mrb[0].mxu0 %v1856
        %v2020 = vpop.f32.mrb[0].mxu0
        %v2021 = vadd.f32 %v1852, %v2020
        %v2022 = vpop.f32.mrb[0].mxu0
        %v2023 = vadd.f32 %v1852, %v2022
        %2024 = vdwg.mxu0
        %2025 = vmatprep.subr.mxu0 %v1813
        %2026 = vmatpush1.msra.mxu0 %v1812
        %2027 = vmatprep.subr.mxu0 %v1821
        %2028 = vmatpush1.msra.mxu0 %v1820
        %2029 = vmatprep.subr.mxu0 %v1829
        %2030 = vmatpush1.msra.mxu0 %v1828
        %2031 = vmatprep.subr.mxu0 %v1837
        %2032 = vmatpush1.msra.mxu0 %v1836
        %2033 = vmatprep.subr.mxu0 %v1875
        %2034 = vmatpush1.msra.mxu0 %v1872
        %2035 = vmatprep.subr.mxu0 0.0
        %2036 = vmatpush1.msra.mxu0 0.0
        %2037 = vmatprep.subr.mxu0 0.0
        %2038 = vmatpush1.msra.mxu0 0.0
        %2039 = vmatprep.subr.mxu0 0.0
        %2040 = vmatpush1.msra.mxu0 0.0
        %2041 = vmatprep.subr.mxu0 0.0
        %2042 = vmatpush1.msra.mxu0 0.0
        %2043 = vmatprep.subr.mxu0 0.0
        %2044 = vmatpush1.msra.mxu0 0.0
        %2045 = vmatprep.subr.mxu0 0.0
        %2046 = vmatpush1.msra.mxu0 0.0
        %2047 = vmatprep.subr.mxu0 0.0
        %2048 = vmatpush1.msra.mxu0 0.0
        %2049 = vmatprep.subr.mxu0 0.0
        %2050 = vmatpush1.msra.mxu0 0.0
        %2051 = vmatprep.subr.mxu0 0.0
        %2052 = vmatpush1.msra.mxu0 0.0
        %2053 = vmatprep.subr.mxu0 0.0
        %2054 = vmatpush1.msra.mxu0 0.0
        %2055 = vmatprep.subr.mxu0 0.0
        %2056 = vmatpush1.msra.mxu0 0.0
        %2057 = vmatprep.subr.mxu0 0.0
        %2058 = vmatpush1.msra.mxu0 0.0
        %2059 = vmatprep.subr.mxu0 0.0
        %2060 = vmatpush1.msra.mxu0 0.0
        %2061 = vmatprep.subr.mxu0 0.0
        %2062 = vmatpush1.msra.mxu0 0.0
        %2063 = vmatprep.subr.mxu0 0.0
        %2064 = vmatpush1.msra.mxu0 0.0
        %2065 = vmatprep.subr.mxu0 0.0
        %2066 = vmatpush1.msra.mxu0 0.0
        %2067 = vmatprep.subr.mxu0 0.0
        %2068 = vmatpush1.msra.mxu0 0.0
        %2069 = vmatprep.subr.mxu0 0.0
        %2070 = vmatpush1.msra.mxu0 0.0
        %2071 = vmatprep.subr.mxu0 0.0
        %2072 = vmatpush1.msra.mxu0 0.0
        %2073 = vmatprep.subr.mxu0 0.0
        %2074 = vmatpush1.msra.mxu0 0.0
        %2075 = vmatprep.subr.mxu0 0.0
        %2076 = vmatpush1.msra.mxu0 0.0
        %2077 = vmatprep.subr.mxu0 0.0
        %2078 = vmatpush1.msra.mxu0 0.0
        %2079 = vmatprep.subr.mxu0 0.0
        %2080 = vmatpush1.msra.mxu0 0.0
        %2081 = vmatprep.subr.mxu0 0.0
        %2082 = vmatpush1.msra.mxu0 0.0
        %2083 = vmatprep.subr.mxu0 0.0
        %2084 = vmatpush1.msra.mxu0 0.0
        %2085 = vmatprep.subr.mxu0 0.0
        %2086 = vmatpush1.msra.mxu0 0.0
        %2087 = vmatprep.subr.mxu0 0.0
        %2088 = vmatpush1.msra.mxu0 0.0
        %2089 = vmatprep.mubr.f32.mxu0 0.0
        %2090 = vmatmul.mubr.f32.gmra.mrb[0].mxu0 %v1856
        %v2091 = vpop.f32.mrb[0].mxu0
        %v2092 = vadd.f32 %v1852, %v2091
        %v2093 = vpop.f32.mrb[0].mxu0
        %v2094 = vadd.f32 %v1852, %v2093
        %2095 = vdwg.mxu0
        %2096 = vmatprep.subr.mxu0 %v1815
        %2097 = vmatpush1.msra.mxu0 %v1814
        %2098 = vmatprep.subr.mxu0 %v1823
        %2099 = vmatpush1.msra.mxu0 %v1822
        %2100 = vmatprep.subr.mxu0 %v1831
        %2101 = vmatpush1.msra.mxu0 %v1830
        %2102 = vmatprep.subr.mxu0 %v1839
        %2103 = vmatpush1.msra.mxu0 %v1838
        %2104 = vmatprep.subr.mxu0 %v1881
        %2105 = vmatpush1.msra.mxu0 %v1878
        %2106 = vmatprep.subr.mxu0 0.0
        %2107 = vmatpush1.msra.mxu0 0.0
        %2108 = vmatprep.subr.mxu0 0.0
        %2109 = vmatpush1.msra.mxu0 0.0
        %2110 = vmatprep.subr.mxu0 0.0
        %2111 = vmatpush1.msra.mxu0 0.0
        %2112 = vmatprep.subr.mxu0 0.0
        %2113 = vmatpush1.msra.mxu0 0.0
        %2114 = vmatprep.subr.mxu0 0.0
        %2115 = vmatpush1.msra.mxu0 0.0
        %2116 = vmatprep.subr.mxu0 0.0
        %2117 = vmatpush1.msra.mxu0 0.0
        %2118 = vmatprep.subr.mxu0 0.0
        %2119 = vmatpush1.msra.mxu0 0.0
        %2120 = vmatprep.subr.mxu0 0.0
        %2121 = vmatpush1.msra.mxu0 0.0
        %2122 = vmatprep.subr.mxu0 0.0
        %2123 = vmatpush1.msra.mxu0 0.0
        %2124 = vmatprep.subr.mxu0 0.0
        %2125 = vmatpush1.msra.mxu0 0.0
        %2126 = vmatprep.subr.mxu0 0.0
        %2127 = vmatpush1.msra.mxu0 0.0
        %2128 = vmatprep.subr.mxu0 0.0
        %2129 = vmatpush1.msra.mxu0 0.0
        %2130 = vmatprep.subr.mxu0 0.0
        %2131 = vmatpush1.msra.mxu0 0.0
        %2132 = vmatprep.subr.mxu0 0.0
        %2133 = vmatpush1.msra.mxu0 0.0
        %2134 = vmatprep.subr.mxu0 0.0
        %2135 = vmatpush1.msra.mxu0 0.0
        %2136 = vmatprep.subr.mxu0 0.0
        %2137 = vmatpush1.msra.mxu0 0.0
        %2138 = vmatprep.subr.mxu0 0.0
        %2139 = vmatpush1.msra.mxu0 0.0
        %2140 = vmatprep.subr.mxu0 0.0
        %2141 = vmatpush1.msra.mxu0 0.0
        %2142 = vmatprep.subr.mxu0 0.0
        %2143 = vmatpush1.msra.mxu0 0.0
        %2144 = vmatprep.subr.mxu0 0.0
        %2145 = vmatpush1.msra.mxu0 0.0
        %2146 = vmatprep.subr.mxu0 0.0
        %2147 = vmatpush1.msra.mxu0 0.0
        %2148 = vmatprep.subr.mxu0 0.0
        %2149 = vmatpush1.msra.mxu0 0.0
        %2150 = vmatprep.subr.mxu0 0.0
        %2151 = vmatpush1.msra.mxu0 0.0
        %2152 = vmatprep.subr.mxu0 0.0
        %2153 = vmatpush1.msra.mxu0 0.0
        %2154 = vmatprep.subr.mxu0 0.0
        %2155 = vmatpush1.msra.mxu0 0.0
        %2156 = vmatprep.subr.mxu0 0.0
        %2157 = vmatpush1.msra.mxu0 0.0
        %2158 = vmatprep.subr.mxu0 0.0
        %2159 = vmatpush1.msra.mxu0 0.0
        %2160 = vmatprep.mubr.f32.mxu0 0.0
        %2161 = vmatmul.mubr.f32.gmra.mrb[0].mxu0 %v1856
        %v2162 = vpop.f32.mrb[0].mxu0
        %v2163 = vadd.f32 %v1852, %v2162
        %v2164 = vpop.f32.mrb[0].mxu0
        %v2165 = vadd.f32 %v1852, %v2164
        %2166 = vdwg.mxu0
        %v2167 = vmax.f32 %v1950, 0.0
        %v2168 = vmax.f32 %v1952, 0.0
        %v2169 = vmax.f32 %v2021, 0.0
        %v2170 = vmax.f32 %v2023, 0.0
        %v2171 = vmax.f32 %v2092, 0.0
        %v2172 = vmax.f32 %v2094, 0.0
        %v2173 = vmax.f32 %v2163, 0.0
        %v2174 = vmax.f32 %v2165, 0.0
        %2175 = vrot.lane.b32.xlu0 %v2167, 64
        %v2176 = vpop.permute.xlu0 %2175
        %2177 = vrot.lane.b32.xlu0 %v2168, 64
        %v2178 = vpop.permute.xlu0 %2177
        %2179 = vrot.lane.b32.xlu0 %v2169, 64
        %v2180 = vpop.permute.xlu0 %2179
        %2181 = vrot.lane.b32.xlu0 %v2170, 64
        %v2182 = vpop.permute.xlu0 %2181
        %2183 = vrot.lane.b32.xlu0 %v2171, 64
        %v2184 = vpop.permute.xlu0 %2183
        %2185 = vrot.lane.b32.xlu0 %v2172, 64
        %v2186 = vpop.permute.xlu0 %2185
        %2187 = vrot.lane.b32.xlu0 %v2173, 64
        %v2188 = vpop.permute.xlu0 %2187
        %2189 = vrot.lane.b32.xlu0 %v2174, 64
        %v2190 = vpop.permute.xlu0 %2189
        %v2191 = vsel %vm891, %v2188, %v2190
        %v2192 = vsel %vm891, %v2186, %v2188
        %v2193 = vsel %vm891, %v2184, %v2186
        %v2194 = vsel %vm891, %v2182, %v2184
        %v2195 = vsel %vm891, %v2180, %v2182
        %v2196 = vsel %vm891, %v2178, %v2180
        %v2197 = vsel %vm891, %v2176, %v2178
        %v2198 = vsel %vm891, %v2190, %v2176
        %v2199 = vmax.f32 %v2167, %v2197
        %v2200 = vmax.f32 %v2168, %v2196
        %v2201 = vmax.f32 %v2169, %v2195
        %v2202 = vmax.f32 %v2170, %v2194
        %v2203 = vmax.f32 %v2171, %v2193
        %v2204 = vmax.f32 %v2172, %v2192
        %v2205 = vmax.f32 %v2173, %v2191
        %v2206 = vmax.f32 %v2174, %v2198
        %2207 = vrot.lane.b32.xlu0 %v2199, 126
        %v2208 = vpop.permute.xlu0 %2207
        %2209 = vrot.lane.b32.xlu0 %v2200, 126
        %v2210 = vpop.permute.xlu0 %2209
        %2211 = vrot.lane.b32.xlu0 %v2201, 126
        %v2212 = vpop.permute.xlu0 %2211
        %2213 = vrot.lane.b32.xlu0 %v2202, 126
        %v2214 = vpop.permute.xlu0 %2213
        %2215 = vrot.lane.b32.xlu0 %v2203, 126
        %v2216 = vpop.permute.xlu0 %2215
        %2217 = vrot.lane.b32.xlu0 %v2204, 126
        %v2218 = vpop.permute.xlu0 %2217
        %2219 = vrot.lane.b32.xlu0 %v2205, 126
        %v2220 = vpop.permute.xlu0 %2219
        %2221 = vrot.lane.b32.xlu0 %v2206, 126
        %v2222 = vpop.permute.xlu0 %2221
        %v2223 = vsel %vm547, %v2220, %v2222
        %v2224 = vsel %vm547, %v2218, %v2220
        %v2225 = vsel %vm547, %v2216, %v2218
        %v2226 = vsel %vm547, %v2214, %v2216
        %v2227 = vsel %vm547, %v2212, %v2214
        %v2228 = vsel %vm547, %v2210, %v2212
        %v2229 = vsel %vm547, %v2208, %v2210
        %v2230 = vsel %vm547, %v2222, %v2208
        %v2231 = vmax.f32 %v2199, %v2229
        %v2232 = vmax.f32 %v2200, %v2228
        %v2233 = vmax.f32 %v2201, %v2227
        %v2234 = vmax.f32 %v2202, %v2226
        %v2235 = vmax.f32 %v2203, %v2225
        %v2236 = vmax.f32 %v2204, %v2224
        %v2237 = vmax.f32 %v2205, %v2223
        %v2238 = vmax.f32 %v2206, %v2230
        %2239 = vst [vmem:[#allocation2] sm:$0xff] %v2231
        %2240 = vst [vmem:[#allocation2 + $0x8] sm:$0xff] %v2232
        %2241 = vst [vmem:[#allocation2 + $0x10] sm:$0xff] %v2233
        %2242 = vst [vmem:[#allocation2 + $0x18] sm:$0xff] %v2234
        %2243 = vst [vmem:[#allocation2 + $0x20] sm:$0xff] %v2235
        %2244 = vst [vmem:[#allocation2 + $0x28] sm:$0xff] %v2236
        %2245 = vst [vmem:[#allocation2 + $0x30] sm:$0xff] %v2237
        %2246 = vst [vmem:[#allocation2 + $0x38] sm:$0xff] %v2238
        %2247 = vrot.lane.b32.xlu0 %v2231, 124
        %v2248 = vpop.permute.xlu0 %2247
        %2249 = vrot.lane.b32.xlu0 %v2232, 124
        %v2250 = vpop.permute.xlu0 %2249
        %2251 = vrot.lane.b32.xlu0 %v2233, 124
        %v2252 = vpop.permute.xlu0 %2251
        %2253 = vrot.lane.b32.xlu0 %v2234, 124
        %v2254 = vpop.permute.xlu0 %2253
        %2255 = vrot.lane.b32.xlu0 %v2235, 124
        %v2256 = vpop.permute.xlu0 %2255
        %2257 = vrot.lane.b32.xlu0 %v2236, 124
        %v2258 = vpop.permute.xlu0 %2257
        %2259 = vrot.lane.b32.xlu0 %v2237, 124
        %v2260 = vpop.permute.xlu0 %2259
        %2261 = vrot.lane.b32.xlu0 %v2238, 124
        %v2262 = vpop.permute.xlu0 %2261
        %v2263 = vsel %vm1621, %v2260, %v2262
        %v2264 = vsel %vm1621, %v2258, %v2260
        %v2265 = vsel %vm1621, %v2256, %v2258
        %v2266 = vsel %vm1621, %v2254, %v2256
        %v2267 = vsel %vm1621, %v2252, %v2254
        %v2268 = vsel %vm1621, %v2250, %v2252
        %v2269 = vsel %vm1621, %v2248, %v2250
        %v2270 = vsel %vm1621, %v2262, %v2248
        %2271 = vst [vmem:[#allocation2 + $0x40] sm:$0xff] %v2269
        %2272 = vst [vmem:[#allocation2 + $0x48] sm:$0xff] %v2268
        %2273 = vst [vmem:[#allocation2 + $0x50] sm:$0xff] %v2267
        %2274 = vst [vmem:[#allocation2 + $0x58] sm:$0xff] %v2266
        %2275 = vst [vmem:[#allocation2 + $0x60] sm:$0xff] %v2265
        %2276 = vst [vmem:[#allocation2 + $0x68] sm:$0xff] %v2264
        %2277 = vst [vmem:[#allocation2 + $0x70] sm:$0xff] %v2263
        %2278 = vst [vmem:[#allocation2 + $0x78] sm:$0xff] %v2270
        %2279 = vrot.lane.b32.xlu0 %v2231, 120
        %v2280 = vpop.permute.xlu0 %2279
        %2281 = vrot.lane.b32.xlu0 %v2232, 120
        %v2282 = vpop.permute.xlu0 %2281
        %2283 = vrot.lane.b32.xlu0 %v2233, 120
        %v2284 = vpop.permute.xlu0 %2283
        %2285 = vrot.lane.b32.xlu0 %v2234, 120
        %v2286 = vpop.permute.xlu0 %2285
        %2287 = vrot.lane.b32.xlu0 %v2235, 120
        %v2288 = vpop.permute.xlu0 %2287
        %2289 = vrot.lane.b32.xlu0 %v2236, 120
        %v2290 = vpop.permute.xlu0 %2289
        %2291 = vrot.lane.b32.xlu0 %v2237, 120
        %v2292 = vpop.permute.xlu0 %2291
        %2293 = vrot.lane.b32.xlu0 %v2238, 120
        %v2294 = vpop.permute.xlu0 %2293
        %vm2295 = vcmp.lt.s32.totalorder %v460, 120
        %v2296 = vsel %vm2295, %v2292, %v2294
        %v2297 = vsel %vm2295, %v2290, %v2292
        %v2298 = vsel %vm2295, %v2288, %v2290
        %v2299 = vsel %vm2295, %v2286, %v2288
        %v2300 = vsel %vm2295, %v2284, %v2286
        %v2301 = vsel %vm2295, %v2282, %v2284
        %v2302 = vsel %vm2295, %v2280, %v2282
        %v2303 = vsel %vm2295, %v2294, %v2280
        %2304 = vst [vmem:[#allocation2 + $0x80] sm:$0xff] %v2302
        %2305 = vst [vmem:[#allocation2 + $0x88] sm:$0xff] %v2301
        %2306 = vst [vmem:[#allocation2 + $0x90] sm:$0xff] %v2300
        %2307 = vst [vmem:[#allocation2 + $0x98] sm:$0xff] %v2299
        %2308 = vst [vmem:[#allocation2 + $0xa0] sm:$0xff] %v2298
        %2309 = vst [vmem:[#allocation2 + $0xa8] sm:$0xff] %v2297
        %2310 = vst [vmem:[#allocation2 + $0xb0] sm:$0xff] %v2296
        %2311 = vst [vmem:[#allocation2 + $0xb8] sm:$0xff] %v2303
        %2312 = vst [vmem:[#allocation2 + $0xc0] sm:$0xff] %v2232
        %2313 = vst [vmem:[#allocation2 + $0xc8] sm:$0xff] %v2233
        %2314 = vst [vmem:[#allocation2 + $0xd0] sm:$0xff] %v2234
        %2315 = vst [vmem:[#allocation2 + $0xd8] sm:$0xff] %v2235
        %2316 = vst [vmem:[#allocation2 + $0xe0] sm:$0xff] %v2236
        %2317 = vst [vmem:[#allocation2 + $0xe8] sm:$0xff] %v2237
        %2318 = vst [vmem:[#allocation2 + $0xf0] sm:$0xff] %v2238
        %2319 = vst [vmem:[#allocation2 + $0xf8] sm:$0xff] %v2231
        %2320 = vst [vmem:[#allocation2 + $0x100] sm:$0xff] %v2268
        %2321 = vst [vmem:[#allocation2 + $0x108] sm:$0xff] %v2267
        %2322 = vst [vmem:[#allocation2 + $0x110] sm:$0xff] %v2266
        %2323 = vst [vmem:[#allocation2 + $0x118] sm:$0xff] %v2265
        %2324 = vst [vmem:[#allocation2 + $0x120] sm:$0xff] %v2264
        %2325 = vst [vmem:[#allocation2 + $0x128] sm:$0xff] %v2263
        %2326 = vst [vmem:[#allocation2 + $0x130] sm:$0xff] %v2270
        %2327 = vst [vmem:[#allocation2 + $0x138] sm:$0xff] %v2269
        %2328 = vst [vmem:[#allocation2 + $0x140] sm:$0xff] %v2301
        %2329 = vst [vmem:[#allocation2 + $0x148] sm:$0xff] %v2300
        %2330 = vst [vmem:[#allocation2 + $0x150] sm:$0xff] %v2299
        %2331 = vst [vmem:[#allocation2 + $0x158] sm:$0xff] %v2298
        %2332 = vst [vmem:[#allocation2 + $0x160] sm:$0xff] %v2297
        %2333 = vst [vmem:[#allocation2 + $0x168] sm:$0xff] %v2296
        %2334 = vst [vmem:[#allocation2 + $0x170] sm:$0xff] %v2303
        %2335 = vst [vmem:[#allocation2 + $0x178] sm:$0xff] %v2302
        %2336 = vst [vmem:[#allocation2 + $0x180] sm:$0xff] %v2233
        %2337 = vst [vmem:[#allocation2 + $0x188] sm:$0xff] %v2234
        %2338 = vst [vmem:[#allocation2 + $0x190] sm:$0xff] %v2235
        %2339 = vst [vmem:[#allocation2 + $0x198] sm:$0xff] %v2236
        %2340 = vst [vmem:[#allocation2 + $0x1a0] sm:$0xff] %v2237
        %2341 = vst [vmem:[#allocation2 + $0x1a8] sm:$0xff] %v2238
        %2342 = vst [vmem:[#allocation2 + $0x1b0] sm:$0xff] %v2231
        %2343 = vst [vmem:[#allocation2 + $0x1b8] sm:$0xff] %v2232
        %2344 = vst [vmem:[#allocation2 + $0x1c0] sm:$0xff] %v2267
        %2345 = vst [vmem:[#allocation2 + $0x1c8] sm:$0xff] %v2266
        %2346 = vst [vmem:[#allocation2 + $0x1d0] sm:$0xff] %v2265
        %2347 = vst [vmem:[#allocation2 + $0x1d8] sm:$0xff] %v2264
        %2348 = vst [vmem:[#allocation2 + $0x1e0] sm:$0xff] %v2263
        %2349 = vst [vmem:[#allocation2 + $0x1e8] sm:$0xff] %v2270
        %2350 = vst [vmem:[#allocation2 + $0x1f0] sm:$0xff] %v2269
        %2351 = vst [vmem:[#allocation2 + $0x1f8] sm:$0xff] %v2268
        %2352 = vst [vmem:[#allocation2 + $0x200] sm:$0xff] %v2300
        %2353 = vst [vmem:[#allocation2 + $0x208] sm:$0xff] %v2299
        %2354 = vst [vmem:[#allocation2 + $0x210] sm:$0xff] %v2298
        %2355 = vst [vmem:[#allocation2 + $0x218] sm:$0xff] %v2297
        %2356 = vst [vmem:[#allocation2 + $0x220] sm:$0xff] %v2296
        %2357 = vst [vmem:[#allocation2 + $0x228] sm:$0xff] %v2303
        %2358 = vst [vmem:[#allocation2 + $0x230] sm:$0xff] %v2302
        %2359 = vst [vmem:[#allocation2 + $0x238] sm:$0xff] %v2301
        %v2360 = vld [vmem:[%s5] sm:$0xff]
        %v2361 = vld [vmem:[#allocation2] sm:$0xff]
        %v2362 = vld [vmem:[#allocation2 + $0x8] sm:$0xff]
        %v2363 = vld [vmem:[#allocation2 + $0x10] sm:$0xff]
        %v2364 = vld [vmem:[#allocation2 + $0x18] sm:$0xff]
        %v2365 = vld [vmem:[#allocation2 + $0x20] sm:$0xff]
        %v2366 = vld [vmem:[#allocation2 + $0x28] sm:$0xff]
        %v2367 = vld [vmem:[#allocation2 + $0x40] sm:$0xff]
        %v2368 = vld [vmem:[#allocation2 + $0x48] sm:$0xff]
        %v2369 = vld [vmem:[#allocation2 + $0x50] sm:$0xff]
        %v2370 = vld [vmem:[#allocation2 + $0x58] sm:$0xff]
        %v2371 = vld [vmem:[#allocation2 + $0x60] sm:$0xff]
        %v2372 = vld [vmem:[#allocation2 + $0x68] sm:$0xff]
        %v2373 = vld [vmem:[#allocation2 + $0x80] sm:$0xff]
        %v2374 = vld [vmem:[#allocation2 + $0x88] sm:$0xff]
        %v2375 = vld [vmem:[#allocation2 + $0x90] sm:$0xff]
        %v2376 = vld [vmem:[#allocation2 + $0x98] sm:$0xff]
        %v2377 = vld [vmem:[#allocation2 + $0xa0] sm:$0xff]
        %v2378 = vld [vmem:[#allocation2 + $0xa8] sm:$0xff]
        %v2379 = vld [vmem:[#allocation2 + $0xc0] sm:$0xff]
        %v2380 = vld [vmem:[#allocation2 + $0xc8] sm:$0xff]
        %v2381 = vld [vmem:[#allocation2 + $0xd0] sm:$0xff]
        %v2382 = vld [vmem:[#allocation2 + $0xd8] sm:$0xff]
        %v2383 = vld [vmem:[#allocation2 + $0xe0] sm:$0xff]
        %v2384 = vld [vmem:[#allocation2 + $0xe8] sm:$0xff]
        %v2385 = vld [vmem:[#allocation2 + $0x100] sm:$0xff]
        %v2386 = vld [vmem:[#allocation2 + $0x108] sm:$0xff]
        %v2387 = vld [vmem:[#allocation2 + $0x110] sm:$0xff]
        %v2388 = vld [vmem:[#allocation2 + $0x118] sm:$0xff]
        %v2389 = vld [vmem:[#allocation2 + $0x120] sm:$0xff]
        %v2390 = vld [vmem:[#allocation2 + $0x128] sm:$0xff]
        %v2391 = vld [vmem:[#allocation2 + $0x140] sm:$0xff]
        %v2392 = vld [vmem:[#allocation2 + $0x148] sm:$0xff]
        %v2393 = vld [vmem:[#allocation2 + $0x150] sm:$0xff]
        %v2394 = vld [vmem:[#allocation2 + $0x158] sm:$0xff]
        %v2395 = vld [vmem:[#allocation2 + $0x160] sm:$0xff]
        %v2396 = vld [vmem:[#allocation2 + $0x168] sm:$0xff]
        %v2397 = vld [vmem:[#allocation2 + $0x180] sm:$0xff]
        %v2398 = vld [vmem:[#allocation2 + $0x188] sm:$0xff]
        %v2399 = vld [vmem:[#allocation2 + $0x190] sm:$0xff]
        %v2400 = vld [vmem:[#allocation2 + $0x198] sm:$0xff]
        %v2401 = vld [vmem:[#allocation2 + $0x1a0] sm:$0xff]
        %v2402 = vld [vmem:[#allocation2 + $0x1a8] sm:$0xff]
        %v2403 = vld [vmem:[#allocation2 + $0x1c0] sm:$0xff]
        %v2404 = vld [vmem:[#allocation2 + $0x1c8] sm:$0xff]
        %v2405 = vld [vmem:[#allocation2 + $0x1d0] sm:$0xff]
        %v2406 = vld [vmem:[#allocation2 + $0x1d8] sm:$0xff]
        %v2407 = vld [vmem:[#allocation2 + $0x1e0] sm:$0xff]
        %v2408 = vld [vmem:[#allocation2 + $0x1e8] sm:$0xff]
        %v2409 = vld [vmem:[#allocation2 + $0x200] sm:$0xff]
        %v2410 = vld [vmem:[#allocation2 + $0x208] sm:$0xff]
        %v2411 = vld [vmem:[#allocation2 + $0x210] sm:$0xff]
        %v2412 = vld [vmem:[#allocation2 + $0x218] sm:$0xff]
        %v2413 = vld [vmem:[#allocation2 + $0x220] sm:$0xff]
        %v2414 = vld [vmem:[#allocation2 + $0x228] sm:$0xff]
        %v2415 = vld [vmem:[%s6] sm:$0xff]
        %2417 = vset.pattern.permute.xlu0 0
        %2418 = vperm.xlu0 %2417, %v2415
        %v2419 = vpop.permute.xlu0 %2418
        %vm2421 = vcmask 588800
        %v2423 = vsel %vm2421, %v2360, 0
        %2425 = vmatprep.subr.mxu0 %v2362
        %2426 = vmatpush1.msra.mxu0 %v2361
        %2427 = vmatprep.subr.mxu0 %v2368
        %2428 = vmatpush1.msra.mxu0 %v2367
        %2429 = vmatprep.subr.mxu0 %v2374
        %2430 = vmatpush1.msra.mxu0 %v2373
        %2431 = vmatprep.subr.mxu0 %v2380
        %2432 = vmatpush1.msra.mxu0 %v2379
        %2433 = vmatprep.subr.mxu0 %v2386
        %2434 = vmatpush1.msra.mxu0 %v2385
        %2435 = vmatprep.subr.mxu0 %v2392
        %2436 = vmatpush1.msra.mxu0 %v2391
        %2437 = vmatprep.subr.mxu0 %v2398
        %2438 = vmatpush1.msra.mxu0 %v2397
        %2439 = vmatprep.subr.mxu0 %v2404
        %2440 = vmatpush1.msra.mxu0 %v2403
        %2441 = vmatprep.subr.mxu0 %v2410
        %2442 = vmatpush1.msra.mxu0 %v2409
        %2443 = vmatprep.subr.mxu0 0.0
        %2444 = vmatpush1.msra.mxu0 0.0
        %2445 = vmatprep.subr.mxu0 0.0
        %2446 = vmatpush1.msra.mxu0 0.0
        %2447 = vmatprep.subr.mxu0 0.0
        %2448 = vmatpush1.msra.mxu0 0.0
        %2449 = vmatprep.subr.mxu0 0.0
        %2450 = vmatpush1.msra.mxu0 0.0
        %2451 = vmatprep.subr.mxu0 0.0
        %2452 = vmatpush1.msra.mxu0 0.0
        %2453 = vmatprep.subr.mxu0 0.0
        %2454 = vmatpush1.msra.mxu0 0.0
        %2455 = vmatprep.subr.mxu0 0.0
        %2456 = vmatpush1.msra.mxu0 0.0
        %2457 = vmatprep.subr.mxu0 0.0
        %2458 = vmatpush1.msra.mxu0 0.0
        %2459 = vmatprep.subr.mxu0 0.0
        %2460 = vmatpush1.msra.mxu0 0.0
        %2461 = vmatprep.subr.mxu0 0.0
        %2462 = vmatpush1.msra.mxu0 0.0
        %2463 = vmatprep.subr.mxu0 0.0
        %2464 = vmatpush1.msra.mxu0 0.0
        %2465 = vmatprep.subr.mxu0 0.0
        %2466 = vmatpush1.msra.mxu0 0.0
        %2467 = vmatprep.subr.mxu0 0.0
        %2468 = vmatpush1.msra.mxu0 0.0
        %2469 = vmatprep.subr.mxu0 0.0
        %2470 = vmatpush1.msra.mxu0 0.0
        %2471 = vmatprep.subr.mxu0 0.0
        %2472 = vmatpush1.msra.mxu0 0.0
        %2473 = vmatprep.subr.mxu0 0.0
        %2474 = vmatpush1.msra.mxu0 0.0
        %2475 = vmatprep.subr.mxu0 0.0
        %2476 = vmatpush1.msra.mxu0 0.0
        %2477 = vmatprep.subr.mxu0 0.0
        %2478 = vmatpush1.msra.mxu0 0.0
        %2479 = vmatprep.subr.mxu0 0.0
        %2480 = vmatpush1.msra.mxu0 0.0
        %2481 = vmatprep.subr.mxu0 0.0
        %2482 = vmatpush1.msra.mxu0 0.0
        %2483 = vmatprep.subr.mxu0 0.0
        %2484 = vmatpush1.msra.mxu0 0.0
        %2485 = vmatprep.subr.mxu0 0.0
        %2486 = vmatpush1.msra.mxu0 0.0
        %2487 = vmatprep.subr.mxu0 0.0
        %2488 = vmatpush1.msra.mxu0 0.0
        %2489 = vmatprep.mubr.f32.mxu0 0.0
        %2490 = vmatmul.mubr.f32.gmra.mrb[0].mxu0 %v2423
        %v2491 = vpop.f32.mrb[0].mxu0
        %v2492 = vadd.f32 %v2419, %v2491
        %v2493 = vpop.f32.mrb[0].mxu0
        %v2494 = vadd.f32 %v2419, %v2493
        %2495 = vdwg.mxu0
        %2496 = vmatprep.subr.mxu0 %v2364
        %2497 = vmatpush1.msra.mxu0 %v2363
        %2498 = vmatprep.subr.mxu0 %v2370
        %2499 = vmatpush1.msra.mxu0 %v2369
        %2500 = vmatprep.subr.mxu0 %v2376
        %2501 = vmatpush1.msra.mxu0 %v2375
        %2502 = vmatprep.subr.mxu0 %v2382
        %2503 = vmatpush1.msra.mxu0 %v2381
        %2504 = vmatprep.subr.mxu0 %v2388
        %2505 = vmatpush1.msra.mxu0 %v2387
        %2506 = vmatprep.subr.mxu0 %v2394
        %2507 = vmatpush1.msra.mxu0 %v2393
        %2508 = vmatprep.subr.mxu0 %v2400
        %2509 = vmatpush1.msra.mxu0 %v2399
        %2510 = vmatprep.subr.mxu0 %v2406
        %2511 = vmatpush1.msra.mxu0 %v2405
        %2512 = vmatprep.subr.mxu0 %v2412
        %2513 = vmatpush1.msra.mxu0 %v2411
        %2514 = vmatprep.subr.mxu0 0.0
        %2515 = vmatpush1.msra.mxu0 0.0
        %2516 = vmatprep.subr.mxu0 0.0
        %2517 = vmatpush1.msra.mxu0 0.0
        %2518 = vmatprep.subr.mxu0 0.0
        %2519 = vmatpush1.msra.mxu0 0.0
        %2520 = vmatprep.subr.mxu0 0.0
        %2521 = vmatpush1.msra.mxu0 0.0
        %2522 = vmatprep.subr.mxu0 0.0
        %2523 = vmatpush1.msra.mxu0 0.0
        %2524 = vmatprep.subr.mxu0 0.0
        %2525 = vmatpush1.msra.mxu0 0.0
        %2526 = vmatprep.subr.mxu0 0.0
        %2527 = vmatpush1.msra.mxu0 0.0
        %2528 = vmatprep.subr.mxu0 0.0
        %2529 = vmatpush1.msra.mxu0 0.0
        %2530 = vmatprep.subr.mxu0 0.0
        %2531 = vmatpush1.msra.mxu0 0.0
        %2532 = vmatprep.subr.mxu0 0.0
        %2533 = vmatpush1.msra.mxu0 0.0
        %2534 = vmatprep.subr.mxu0 0.0
        %2535 = vmatpush1.msra.mxu0 0.0
        %2536 = vmatprep.subr.mxu0 0.0
        %2537 = vmatpush1.msra.mxu0 0.0
        %2538 = vmatprep.subr.mxu0 0.0
        %2539 = vmatpush1.msra.mxu0 0.0
        %2540 = vmatprep.subr.mxu0 0.0
        %2541 = vmatpush1.msra.mxu0 0.0
        %2542 = vmatprep.subr.mxu0 0.0
        %2543 = vmatpush1.msra.mxu0 0.0
        %2544 = vmatprep.subr.mxu0 0.0
        %2545 = vmatpush1.msra.mxu0 0.0
        %2546 = vmatprep.subr.mxu0 0.0
        %2547 = vmatpush1.msra.mxu0 0.0
        %2548 = vmatprep.subr.mxu0 0.0
        %2549 = vmatpush1.msra.mxu0 0.0
        %2550 = vmatprep.subr.mxu0 0.0
        %2551 = vmatpush1.msra.mxu0 0.0
        %2552 = vmatprep.subr.mxu0 0.0
        %2553 = vmatpush1.msra.mxu0 0.0
        %2554 = vmatprep.subr.mxu0 0.0
        %2555 = vmatpush1.msra.mxu0 0.0
        %2556 = vmatprep.subr.mxu0 0.0
        %2557 = vmatpush1.msra.mxu0 0.0
        %2558 = vmatprep.subr.mxu0 0.0
        %2559 = vmatpush1.msra.mxu0 0.0
        %2560 = vmatprep.mubr.f32.mxu0 0.0
        %2561 = vmatmul.mubr.f32.gmra.mrb[0].mxu0 %v2423
        %v2562 = vpop.f32.mrb[0].mxu0
        %v2563 = vadd.f32 %v2419, %v2562
        %v2564 = vpop.f32.mrb[0].mxu0
        %v2565 = vadd.f32 %v2419, %v2564
        %2566 = vdwg.mxu0
        %2567 = vmatprep.subr.mxu0 %v2366
        %2568 = vmatpush1.msra.mxu0 %v2365
        %2569 = vmatprep.subr.mxu0 %v2372
        %2570 = vmatpush1.msra.mxu0 %v2371
        %2571 = vmatprep.subr.mxu0 %v2378
        %2572 = vmatpush1.msra.mxu0 %v2377
        %2573 = vmatprep.subr.mxu0 %v2384
        %2574 = vmatpush1.msra.mxu0 %v2383
        %2575 = vmatprep.subr.mxu0 %v2390
        %2576 = vmatpush1.msra.mxu0 %v2389
        %2577 = vmatprep.subr.mxu0 %v2396
        %2578 = vmatpush1.msra.mxu0 %v2395
        %2579 = vmatprep.subr.mxu0 %v2402
        %2580 = vmatpush1.msra.mxu0 %v2401
        %2581 = vmatprep.subr.mxu0 %v2408
        %2582 = vmatpush1.msra.mxu0 %v2407
        %2583 = vmatprep.subr.mxu0 %v2414
        %2584 = vmatpush1.msra.mxu0 %v2413
        %2585 = vmatprep.subr.mxu0 0.0
        %2586 = vmatpush1.msra.mxu0 0.0
        %2587 = vmatprep.subr.mxu0 0.0
        %2588 = vmatpush1.msra.mxu0 0.0
        %2589 = vmatprep.subr.mxu0 0.0
        %2590 = vmatpush1.msra.mxu0 0.0
        %2591 = vmatprep.subr.mxu0 0.0
        %2592 = vmatpush1.msra.mxu0 0.0
        %2593 = vmatprep.subr.mxu0 0.0
        %2594 = vmatpush1.msra.mxu0 0.0
        %2595 = vmatprep.subr.mxu0 0.0
        %2596 = vmatpush1.msra.mxu0 0.0
        %2597 = vmatprep.subr.mxu0 0.0
        %2598 = vmatpush1.msra.mxu0 0.0
        %2599 = vmatprep.subr.mxu0 0.0
        %2600 = vmatpush1.msra.mxu0 0.0
        %2601 = vmatprep.subr.mxu0 0.0
        %2602 = vmatpush1.msra.mxu0 0.0
        %2603 = vmatprep.subr.mxu0 0.0
        %2604 = vmatpush1.msra.mxu0 0.0
        %2605 = vmatprep.subr.mxu0 0.0
        %2606 = vmatpush1.msra.mxu0 0.0
        %2607 = vmatprep.subr.mxu0 0.0
        %2608 = vmatpush1.msra.mxu0 0.0
        %2609 = vmatprep.subr.mxu0 0.0
        %2610 = vmatpush1.msra.mxu0 0.0
        %2611 = vmatprep.subr.mxu0 0.0
        %2612 = vmatpush1.msra.mxu0 0.0
        %2613 = vmatprep.subr.mxu0 0.0
        %2614 = vmatpush1.msra.mxu0 0.0
        %2615 = vmatprep.subr.mxu0 0.0
        %2616 = vmatpush1.msra.mxu0 0.0
        %2617 = vmatprep.subr.mxu0 0.0
        %2618 = vmatpush1.msra.mxu0 0.0
        %2619 = vmatprep.subr.mxu0 0.0
        %2620 = vmatpush1.msra.mxu0 0.0
        %2621 = vmatprep.subr.mxu0 0.0
        %2622 = vmatpush1.msra.mxu0 0.0
        %2623 = vmatprep.subr.mxu0 0.0
        %2624 = vmatpush1.msra.mxu0 0.0
        %2625 = vmatprep.subr.mxu0 0.0
        %2626 = vmatpush1.msra.mxu0 0.0
        %2627 = vmatprep.subr.mxu0 0.0
        %2628 = vmatpush1.msra.mxu0 0.0
        %2629 = vmatprep.subr.mxu0 0.0
        %2630 = vmatpush1.msra.mxu0 0.0
        %2631 = vmatprep.mubr.f32.mxu0 0.0
        %2632 = vmatmul.mubr.f32.gmra.mrb[0].mxu0 %v2423
        %v2633 = vpop.f32.mrb[0].mxu0
        %v2634 = vadd.f32 %v2419, %v2633
        %v2635 = vpop.f32.mrb[0].mxu0
        %2636 = vdwg.mxu0
        %v2637 = vmax.f32 %v2492, 0.0
        %v2638 = vmax.f32 %v2494, 0.0
        %v2639 = vmax.f32 %v2563, 0.0
        %v2640 = vmax.f32 %v2565, 0.0
        %v2641 = vmax.f32 %v2634, 0.0
        %v2642 = vmax.f32 %v2637, %v2638
        %v2643 = vmax.f32 %v2638, %v2639
        %v2644 = vmax.f32 %v2639, %v2640
        %v2645 = vmax.f32 %v2640, %v2641
        %2646 = vrot.lane.b32.xlu0 %v2642, 124
        %v2647 = vpop.permute.xlu0 %2646
        %2648 = vrot.lane.b32.xlu0 %v2643, 124
        %v2649 = vpop.permute.xlu0 %2648
        %2650 = vrot.lane.b32.xlu0 %v2644, 124
        %v2651 = vpop.permute.xlu0 %2650
        %2652 = vrot.lane.b32.xlu0 %v2645, 124
        %v2653 = vpop.permute.xlu0 %2652
        %v2654 = vsel %vm1621, %v2651, %v2653
        %v2655 = vsel %vm1621, %v2647, %v2649
        %v2656 = vmax.f32 %v2642, %v2655
        %v2657 = vmax.f32 %v2644, %v2654
        %vm2658 = vcmask 7168
        %2659 = vst.msk [vmem:[#allocation3] sm:$0xff] %vm2658, %v2656
        %2661 = vrot.lane.b32.xlu0 %v2656, 120
        %v2662 = vpop.permute.xlu0 %2661
        %2664 = vst.msk [vmem:[#allocation3 + $0x8] sm:$0xff] %vm2658, %v2662
        %2665 = vst.msk [vmem:[#allocation3 + $0x10] sm:$0xff] %vm2658, %v2657
        %2667 = vrot.lane.b32.xlu0 %v2657, 120
        %v2668 = vpop.permute.xlu0 %2667
        %2670 = vst.msk [vmem:[#allocation3 + $0x18] sm:$0xff] %vm2658, %v2668
        %v2671 = vld [vmem:[%s7] sm:$0xff]
        %v2672 = vld [vmem:[%s7 + $0x8] sm:$0xff]
        %v2673 = vld [vmem:[%s7 + $0x10] sm:$0xff]
        %v2674 = vld [vmem:[%s7 + $0x18] sm:$0xff]
        %v2675 = vld [vmem:[#allocation3] sm:$0xff]
        %v2676 = vld [vmem:[#allocation3 + $0x8] sm:$0xff]
        %v2677 = vld [vmem:[#allocation3 + $0x10] sm:$0xff]
        %v2678 = vld [vmem:[#allocation3 + $0x18] sm:$0xff]
        %v2679 = vld [vmem:[%s8] sm:$0xff]
        %v2680 = vld [vmem:[%s8 + $0x8] sm:$0xff]
        %v2681 = vld [vmem:[%s8 + $0x10] sm:$0xff]
        %v2682 = vld [vmem:[%s8 + $0x18] sm:$0xff]
        %vm2683 = vcmask 261120
        %v2685 = vsel %vm2683, %v2671, 0
        %v2688 = vsel %vm2683, %v2672, 0
        %v2691 = vsel %vm2683, %v2673, 0
        %v2694 = vsel %vm2683, %v2674, 0
        %2696 = vmatprep.subr.mxu0 0.0
        %2697 = vmatpush1.msra.mxu0 %v2675
        %2698 = vmatprep.subr.mxu0 0.0
        %2699 = vmatpush1.msra.mxu0 %v2676
        %2700 = vmatprep.subr.mxu0 0.0
        %2701 = vmatpush1.msra.mxu0 %v2677
        %2702 = vmatprep.subr.mxu0 0.0
        %2703 = vmatpush1.msra.mxu0 %v2678
        %2704 = vmatprep.subr.mxu0 0.0
        %2705 = vmatpush1.msra.mxu0 0.0
        %2706 = vmatprep.subr.mxu0 0.0
        %2707 = vmatpush1.msra.mxu0 0.0
        %2708 = vmatprep.subr.mxu0 0.0
        %2709 = vmatpush1.msra.mxu0 0.0
        %2710 = vmatprep.subr.mxu0 0.0
        %2711 = vmatpush1.msra.mxu0 0.0
        %2712 = vmatprep.subr.mxu0 0.0
        %2713 = vmatpush1.msra.mxu0 0.0
        %2714 = vmatprep.subr.mxu0 0.0
        %2715 = vmatpush1.msra.mxu0 0.0
        %2716 = vmatprep.subr.mxu0 0.0
        %2717 = vmatpush1.msra.mxu0 0.0
        %2718 = vmatprep.subr.mxu0 0.0
        %2719 = vmatpush1.msra.mxu0 0.0
        %2720 = vmatprep.subr.mxu0 0.0
        %2721 = vmatpush1.msra.mxu0 0.0
        %2722 = vmatprep.subr.mxu0 0.0
        %2723 = vmatpush1.msra.mxu0 0.0
        %2724 = vmatprep.subr.mxu0 0.0
        %2725 = vmatpush1.msra.mxu0 0.0
        %2726 = vmatprep.subr.mxu0 0.0
        %2727 = vmatpush1.msra.mxu0 0.0
        %2728 = vmatprep.subr.mxu0 0.0
        %2729 = vmatpush1.msra.mxu0 0.0
        %2730 = vmatprep.subr.mxu0 0.0
        %2731 = vmatpush1.msra.mxu0 0.0
        %2732 = vmatprep.subr.mxu0 0.0
        %2733 = vmatpush1.msra.mxu0 0.0
        %2734 = vmatprep.subr.mxu0 0.0
        %2735 = vmatpush1.msra.mxu0 0.0
        %2736 = vmatprep.subr.mxu0 0.0
        %2737 = vmatpush1.msra.mxu0 0.0
        %2738 = vmatprep.subr.mxu0 0.0
        %2739 = vmatpush1.msra.mxu0 0.0
        %2740 = vmatprep.subr.mxu0 0.0
        %2741 = vmatpush1.msra.mxu0 0.0
        %2742 = vmatprep.subr.mxu0 0.0
        %2743 = vmatpush1.msra.mxu0 0.0
        %2744 = vmatprep.subr.mxu0 0.0
        %2745 = vmatpush1.msra.mxu0 0.0
        %2746 = vmatprep.subr.mxu0 0.0
        %2747 = vmatpush1.msra.mxu0 0.0
        %2748 = vmatprep.subr.mxu0 0.0
        %2749 = vmatpush1.msra.mxu0 0.0
        %2750 = vmatprep.subr.mxu0 0.0
        %2751 = vmatpush1.msra.mxu0 0.0
        %2752 = vmatprep.subr.mxu0 0.0
        %2753 = vmatpush1.msra.mxu0 0.0
        %2754 = vmatprep.subr.mxu0 0.0
        %2755 = vmatpush1.msra.mxu0 0.0
        %2756 = vmatprep.subr.mxu0 0.0
        %2757 = vmatpush1.msra.mxu0 0.0
        %2758 = vmatprep.subr.mxu0 0.0
        %2759 = vmatpush1.msra.mxu0 0.0
        %2760 = vmatprep.mubr.f32.mxu0 0.0
        %2761 = vmatmul.mubr.f32.gmra.mrb[0].mxu0 %v2685
        %v2762 = vpop.f32.mrb[0].mxu0
        %v2763 = vadd.f32 %v2679, %v2762
        %v2764 = vpop.f32.mrb[0].mxu0
        %2765 = vmatprep.mubr.f32.mxu0 0.0
        %2766 = vmatmul.mubr.f32.gmra.mrb[0].mxu0 %v2688
        %v2767 = vpop.f32.mrb[0].mxu0
        %v2768 = vadd.f32 %v2680, %v2767
        %v2769 = vpop.f32.mrb[0].mxu0
        %2770 = vmatprep.mubr.f32.mxu0 0.0
        %2771 = vmatmul.mubr.f32.gmra.mrb[0].mxu0 %v2691
        %v2772 = vpop.f32.mrb[0].mxu0
        %v2773 = vadd.f32 %v2681, %v2772
        %v2774 = vpop.f32.mrb[0].mxu0
        %2775 = vmatprep.mubr.f32.mxu0 0.0
        %2776 = vmatmul.mubr.f32.gmra.mrb[0].mxu0 %v2694
        %v2777 = vpop.f32.mrb[0].mxu0
        %v2778 = vadd.f32 %v2682, %v2777
        %v2779 = vpop.f32.mrb[0].mxu0
        %2780 = vdwg.mxu0
        %v2781 = vmax.f32 %v2763, 0.0
        %v2782 = vmax.f32 %v2768, 0.0
        %v2783 = vmax.f32 %v2773, 0.0
        %v2784 = vmax.f32 %v2778, 0.0
        %v2785 = vld [vmem:[%s9] sm:$0xff]
        %v2786 = vld [vmem:[%s9 + $0x8] sm:$0xff]
        %v2787 = vld [vmem:[%s10] sm:$0xff]
        %v2788 = vld [vmem:[%s10 + $0x8] sm:$0xff]
        %v2790 = vsel %vm2683, %v2785, 0
        %v2793 = vsel %vm2683, %v2786, 0
        %2795 = vmatprep.subr.mxu0 0.0
        %2796 = vmatpush1.msra.mxu0 %v2781
        %2797 = vmatprep.subr.mxu0 0.0
        %2798 = vmatpush1.msra.mxu0 %v2782
        %2799 = vmatprep.subr.mxu0 0.0
        %2800 = vmatpush1.msra.mxu0 %v2783
        %2801 = vmatprep.subr.mxu0 0.0
        %2802 = vmatpush1.msra.mxu0 %v2784
        %2803 = vmatprep.subr.mxu0 0.0
        %2804 = vmatpush1.msra.mxu0 0.0
        %2805 = vmatprep.subr.mxu0 0.0
        %2806 = vmatpush1.msra.mxu0 0.0
        %2807 = vmatprep.subr.mxu0 0.0
        %2808 = vmatpush1.msra.mxu0 0.0
        %2809 = vmatprep.subr.mxu0 0.0
        %2810 = vmatpush1.msra.mxu0 0.0
        %2811 = vmatprep.subr.mxu0 0.0
        %2812 = vmatpush1.msra.mxu0 0.0
        %2813 = vmatprep.subr.mxu0 0.0
        %2814 = vmatpush1.msra.mxu0 0.0
        %2815 = vmatprep.subr.mxu0 0.0
        %2816 = vmatpush1.msra.mxu0 0.0
        %2817 = vmatprep.subr.mxu0 0.0
        %2818 = vmatpush1.msra.mxu0 0.0
        %2819 = vmatprep.subr.mxu0 0.0
        %2820 = vmatpush1.msra.mxu0 0.0
        %2821 = vmatprep.subr.mxu0 0.0
        %2822 = vmatpush1.msra.mxu0 0.0
        %2823 = vmatprep.subr.mxu0 0.0
        %2824 = vmatpush1.msra.mxu0 0.0
        %2825 = vmatprep.subr.mxu0 0.0
        %2826 = vmatpush1.msra.mxu0 0.0
        %2827 = vmatprep.subr.mxu0 0.0
        %2828 = vmatpush1.msra.mxu0 0.0
        %2829 = vmatprep.subr.mxu0 0.0
        %2830 = vmatpush1.msra.mxu0 0.0
        %2831 = vmatprep.subr.mxu0 0.0
        %2832 = vmatpush1.msra.mxu0 0.0
        %2833 = vmatprep.subr.mxu0 0.0
        %2834 = vmatpush1.msra.mxu0 0.0
        %2835 = vmatprep.subr.mxu0 0.0
        %2836 = vmatpush1.msra.mxu0 0.0
        %2837 = vmatprep.subr.mxu0 0.0
        %2838 = vmatpush1.msra.mxu0 0.0
        %2839 = vmatprep.subr.mxu0 0.0
        %2840 = vmatpush1.msra.mxu0 0.0
        %2841 = vmatprep.subr.mxu0 0.0
        %2842 = vmatpush1.msra.mxu0 0.0
        %2843 = vmatprep.subr.mxu0 0.0
        %2844 = vmatpush1.msra.mxu0 0.0
        %2845 = vmatprep.subr.mxu0 0.0
        %2846 = vmatpush1.msra.mxu0 0.0
        %2847 = vmatprep.subr.mxu0 0.0
        %2848 = vmatpush1.msra.mxu0 0.0
        %2849 = vmatprep.subr.mxu0 0.0
        %2850 = vmatpush1.msra.mxu0 0.0
        %2851 = vmatprep.subr.mxu0 0.0
        %2852 = vmatpush1.msra.mxu0 0.0
        %2853 = vmatprep.subr.mxu0 0.0
        %2854 = vmatpush1.msra.mxu0 0.0
        %2855 = vmatprep.subr.mxu0 0.0
        %2856 = vmatpush1.msra.mxu0 0.0
        %2857 = vmatprep.subr.mxu0 0.0
        %2858 = vmatpush1.msra.mxu0 0.0
        %2859 = vmatprep.mubr.f32.mxu0 0.0
        %2860 = vmatmul.mubr.f32.gmra.mrb[0].mxu0 %v2790
        %v2861 = vpop.f32.mrb[0].mxu0
        %v2862 = vadd.f32 %v2787, %v2861
        %v2863 = vpop.f32.mrb[0].mxu0
        %2864 = vmatprep.mubr.f32.mxu0 0.0
        %2865 = vmatmul.mubr.f32.gmra.mrb[0].mxu0 %v2793
        %v2866 = vpop.f32.mrb[0].mxu0
        %v2867 = vadd.f32 %v2788, %v2866
        %v2868 = vpop.f32.mrb[0].mxu0
        %2869 = vdwg.mxu0
        %v2870 = vmax.f32 %v2862, 0.0
        %v2871 = vmax.f32 %v2867, 0.0
        %2872 = vst.msk [vmem:[%s398] sm:$0xff] %vm2658, %v2870
        %2873 = vst.msk [vmem:[%s398 + $0x8] sm:$0xff] %vm2658, %v2871
        %p2874 = scmp.lt.s32.totalorder %s23, 1
        %s2875 = scalar_select %p2874, %s23, 1
        %s2876 = smul.addr %s2875, 2
        %s2877 = smul.addr %s2876, 8
        %s2878 = scalar_lea.vmem %s11, %s2877
        // Predicated region
        $region69: #{tpu_custom_call.1} parent=63 // pred_check
          %p2879 = pneg %p277
        $region70: #{tpu_custom_call.1} parent=63 // pred_check_branch
          %2881 = sbr.rel (%p2879) target = $region72
        $region71: #{tpu_custom_call.1} parent=63 // pred_region
          _
        $region72: #{tpu_custom_call.1} parent=63 // pred_fallthru
          _
      $region64: #{tpu_custom_call.1} parent=5 // pred_fallthru
        _
      %p2882 = scmp.le.s32.totalorder 2, %s18
      // Predicated region
      $region73: #{tpu_custom_call.1} parent=5 // pred_check
        %p2883 = pneg %p2882
      $region74: #{tpu_custom_call.1} parent=5 // pred_check_branch
        %2885 = sbr.rel (%p2883) target = $region76
      $region75: #{tpu_custom_call.1} parent=5 // pred_region
        %s2886 = ssub.s32 %s18, 2
        // Predicated region
        $region77: #{tpu_custom_call.1} parent=75 // pred_check
          %p2887 = pneg %p283
        $region78: #{tpu_custom_call.1} parent=75 // pred_check_branch
          %2889 = sbr.rel (%p2887) target = $region80
        $region79: #{tpu_custom_call.1} parent=75 // pred_region
          %p2890 = scmp.lt.s32.totalorder %s24, 1
          %s2891 = scalar_select %p2890, %s24, 1
          %s2892 = smul.addr %s2891, 2
          %s2893 = smul.addr %s2892, 8
          %s2894 = scalar_lea.vmem %s11, %s2893
        $region80: #{tpu_custom_call.1} parent=75 // pred_fallthru
          _
      $region76: #{tpu_custom_call.1} parent=5 // pred_fallthru
        _
    $region6: #{tpu_custom_call.1} parent=1 // loop_footer
      %s22 = sadd.s32 1, %s18
    $region7: #{tpu_custom_call.1} parent=1 // loop_footer_branch
      %17 = sbr.rel target = $region3
    $region8: #{tpu_custom_call.1} parent=1 // loop_exit
      _
    %2895 = vsyncpa [#allocation5], 1
    %s2896 = scalar_lea.sflag [#allocation5], 1
    %2897 = vsyncpa %s2896, 1

</llo_original>
